<compile_context>
chip_gen: v7x
topology: tpu7x:2x2x1
jax: 0.10.0
libtpu: 0.0.40
codegen_flags: <defaults>
</compile_context>

<pallas_src>
import jax
import jax.numpy as jnp
from jax.experimental import pallas as pl
from jax.experimental.pallas import tpu as pltpu

FEATURE_DIM = 256      # in_features == hidden size of the LSTM
MANEUVER_DIM = 4
ACTION_DIM = 1
PAD = 128              # lane padding for the small MLP / maneuver dims


# ---------------------------------------------------------------------------
# Pallas kernel: fcm + LSTM recurrence + attention gating + 4-layer MLP head.
# ---------------------------------------------------------------------------
def actor_lstm_kernel(f_ref,        # (T*B, F)   bf16, time-major, batch-padded
                      m_ref,        # (B, PAD)   bf16 maneuver one-hot (padded)
                      w_ih_ref,     # (F, 4H)    bf16 LSTM input->gates
                      w_hh_ref,     # (H, 4H)    bf16 LSTM hidden->gates
                      b_lstm_ref,   # (1, 4H)    f32  (b_ih + b_hh)
                      wm_ref,       # (PAD, H)   bf16 fcm weight (zero-pad rows)
                      bm_ref,       # (1, H)     f32
                      w1_ref, b1_ref,   # (H, PAD)   bf16, (1, PAD) f32
                      w2_ref, b2_ref,   # (PAD, PAD) bf16, (1, PAD) f32
                      w3_ref, b3_ref,   # (PAD, PAD) bf16, (1, PAD) f32
                      w4_ref, b4_ref,   # (PAD, PAD) bf16, (1, PAD) f32
                      out_ref,      # (B, PAD)   f32; column 0 is the action
                      xg_ref):      # (T*B, 4H)  f32 scratch: precomputed gates
    B = m_ref.shape[0]
    H = w_hh_ref.shape[0]
    T = f_ref.shape[0] // B

    # --- hoisted input projection: one big MXU matmul, bias folded in ---
    xg_ref[...] = (
        jnp.dot(f_ref[...], w_ih_ref[...], preferred_element_type=jnp.float32)
        + b_lstm_ref[...])

    w_hh = w_hh_ref[...]

    # --- LSTM recurrence (PyTorch gate order i, f, g, o), h0 = c0 = 0 ---
    def step(t, carry):
        h, c = carry
        base = pl.multiple_of(t * B, B)
        gates = (xg_ref[pl.ds(base, B), :]
                 + jnp.dot(h.astype(jnp.bfloat16), w_hh,
                           preferred_element_type=jnp.float32))      # (B, 4H)
        i_g = jax.nn.sigmoid(gates[:, 0:H])
        f_g = jax.nn.sigmoid(gates[:, H:2 * H])
        g_g = jnp.tanh(gates[:, 2 * H:3 * H])
        o_g = jax.nn.sigmoid(gates[:, 3 * H:4 * H])
        c = f_g * c + i_g * g_g
        h = o_g * jnp.tanh(c)
        return (h, c)

    h0 = jnp.zeros((B, H), jnp.float32)
    c0 = jnp.zeros((B, H), jnp.float32)
    h, _ = jax.lax.fori_loop(0, T, step, (h0, c0), unroll=True)      # last h

    # --- attention_weights = sigmoid(fcm(m)) ---
    attn = jax.nn.sigmoid(
        jnp.dot(m_ref[...], wm_ref[...], preferred_element_type=jnp.float32)
        + bm_ref[...])                                               # (B, H)

    # --- MLP head: relu x3, tanh (bf16 operands, f32 accumulation) ---
    out = (h * attn).astype(jnp.bfloat16)
    out = jnp.maximum(
        jnp.dot(out, w1_ref[...], preferred_element_type=jnp.float32)
        + b1_ref[...], 0.0).astype(jnp.bfloat16)
    out = jnp.maximum(
        jnp.dot(out, w2_ref[...], preferred_element_type=jnp.float32)
        + b2_ref[...], 0.0).astype(jnp.bfloat16)
    out = jnp.maximum(
        jnp.dot(out, w3_ref[...], preferred_element_type=jnp.float32)
        + b3_ref[...], 0.0).astype(jnp.bfloat16)
    out_ref[...] = jnp.tanh(
        jnp.dot(out, w4_ref[...], preferred_element_type=jnp.float32)
        + b4_ref[...])


# ---------------------------------------------------------------------------
# Wrapper: pad / transpose / cast params, call the kernel, slice real output.
# ---------------------------------------------------------------------------
def _pad_to(x, shape):
    return jnp.pad(x, [(0, s - d) for s, d in zip(shape, x.shape)])


@jax.jit
def tinycar_actor_lstm(f, m, params):
    B, T, F = f.shape
    H = F
    Bp = ((B + 7) // 8) * 8                                  # sublane-pad batch

    # time-major, batch-padded, flattened to (T*Bp, F); bf16 for the MXU
    f_tm = jnp.transpose(f, (1, 0, 2)).astype(jnp.float32)   # (T, B, F)
    f_tm = jnp.pad(f_tm, ((0, 0), (0, Bp - B), (0, 0)))
    f_k = f_tm.reshape(T * Bp, F).astype(jnp.bfloat16)

    m_k = _pad_to(m.astype(jnp.float32), (Bp, PAD)).astype(jnp.bfloat16)

    w_ih_k = params["w_ih"].T.astype(jnp.bfloat16)           # (F, 4H)
    w_hh_k = params["w_hh"].T.astype(jnp.bfloat16)           # (H, 4H)
    b_lstm = (params["b_ih"] + params["b_hh"]).reshape(1, 4 * H).astype(jnp.float32)

    wm_k = _pad_to(params["fcm_w"].T, (PAD, H)).astype(jnp.bfloat16)
    bm_k = params["fcm_b"].reshape(1, H).astype(jnp.float32)

    w1_k = _pad_to(params["fc1_w"].T, (H, PAD)).astype(jnp.bfloat16)
    b1_k = _pad_to(params["fc1_b"], (PAD,)).reshape(1, PAD).astype(jnp.float32)
    w2_k = _pad_to(params["fc2_w"].T, (PAD, PAD)).astype(jnp.bfloat16)
    b2_k = _pad_to(params["fc2_b"], (PAD,)).reshape(1, PAD).astype(jnp.float32)
    w3_k = _pad_to(params["fc3_w"].T, (PAD, PAD)).astype(jnp.bfloat16)
    b3_k = _pad_to(params["fc3_b"], (PAD,)).reshape(1, PAD).astype(jnp.float32)
    w4_k = _pad_to(params["fc4_w"].T, (PAD, PAD)).astype(jnp.bfloat16)
    b4_k = _pad_to(params["fc4_b"], (PAD,)).reshape(1, PAD).astype(jnp.float32)

    args = (f_k, m_k, w_ih_k, w_hh_k, b_lstm, wm_k, bm_k,
            w1_k, b1_k, w2_k, b2_k, w3_k, b3_k, w4_k, b4_k)

    # Advisory cost estimate so XLA schedules the surrounding pads/transposes.
    flops = int(2 * T * Bp * F * 4 * H            # hoisted input projection
                + 2 * T * Bp * H * 4 * H          # recurrent h @ W_hh
                + 2 * Bp * PAD * H                # fcm attention
                + 2 * Bp * (H * PAD + 3 * PAD * PAD))   # MLP head
    transcendentals = int(T * Bp * 5 * H + Bp * H + Bp * PAD)
    bytes_accessed = int(sum(x.size * jnp.dtype(x.dtype).itemsize for x in args)
                         + Bp * PAD * 4)

    vmem_spec = pl.BlockSpec(memory_space=pltpu.MemorySpace.VMEM)
    out = pl.pallas_call(
        actor_lstm_kernel,
        out_shape=jax.ShapeDtypeStruct((Bp, PAD), jnp.float32),
        in_specs=[vmem_spec] * len(args),
        out_specs=vmem_spec,
        scratch_shapes=[pltpu.VMEM((T * Bp, 4 * H), jnp.float32)],
        cost_estimate=pl.CostEstimate(flops=flops,
                                      transcendentals=transcendentals,
                                      bytes_accessed=bytes_accessed),
        # Actual working set ~2 MiB; 8 MiB leaves headroom on every generation
        # (vs. the old 64 MiB, which is all of a v7x core's VMEM).
        compiler_params=pltpu.CompilerParams(vmem_limit_bytes=8 << 20),
    )(*args)

    return out[:B, :ACTION_DIM]                               # (B, A)


# ---------------------------------------------------------------------------
# Pure-JAX f32 reference (mirrors the PyTorch module exactly) for validation.
# ---------------------------------------------------------------------------
def reference_forward(f, m, p):
    B, T, F = f.shape
    H = F
    h = jnp.zeros((B, H), jnp.float32)
    c = jnp.zeros((B, H), jnp.float32)
    for t in range(T):
        x = f[:, t, :]
        gates = x @ p["w_ih"].T + p["b_ih"] + h @ p["w_hh"].T + p["b_hh"]
        i_g = jax.nn.sigmoid(gates[:, :H])
        f_g = jax.nn.sigmoid(gates[:, H:2 * H])
        g_g = jnp.tanh(gates[:, 2 * H:3 * H])
        o_g = jax.nn.sigmoid(gates[:, 3 * H:])
        c = f_g * c + i_g * g_g
        h = o_g * jnp.tanh(c)
    attn = jax.nn.sigmoid(m @ p["fcm_w"].T + p["fcm_b"])
    out = h * attn
    out = jax.nn.relu(out @ p["fc1_w"].T + p["fc1_b"])
    out = jax.nn.relu(out @ p["fc2_w"].T + p["fc2_b"])
    out = jax.nn.relu(out @ p["fc3_w"].T + p["fc3_b"])
    return jnp.tanh(out @ p["fc4_w"].T + p["fc4_b"])


def init_params(key, in_features=FEATURE_DIM, m_dim=MANEUVER_DIM,
                a_dim=ACTION_DIM):
    H = in_features
    ks = jax.random.split(key, 14)
    s = 0.05
    return {
        "w_ih": jax.random.normal(ks[0], (4 * H, H), jnp.float32) * s,
        "w_hh": jax.random.normal(ks[1], (4 * H, H), jnp.float32) * s,
        "b_ih": jax.random.normal(ks[2], (4 * H,), jnp.float32) * s,
        "b_hh": jax.random.normal(ks[3], (4 * H,), jnp.float32) * s,
        "fcm_w": jax.random.normal(ks[4], (H, m_dim), jnp.float32) * s,
        "fcm_b": jax.random.normal(ks[5], (H,), jnp.float32) * s,
        "fc1_w": jax.random.normal(ks[6], (100, H), jnp.float32) * s,
        "fc1_b": jax.random.normal(ks[7], (100,), jnp.float32) * s,
        "fc2_w": jax.random.normal(ks[8], (50, 100), jnp.float32) * s,
        "fc2_b": jax.random.normal(ks[9], (50,), jnp.float32) * s,
        "fc3_w": jax.random.normal(ks[10], (10, 50), jnp.float32) * s,
        "fc3_b": jax.random.normal(ks[11], (10,), jnp.float32) * s,
        "fc4_w": jax.random.normal(ks[12], (a_dim, 10), jnp.float32) * s,
        "fc4_b": jax.random.normal(ks[13], (a_dim,), jnp.float32) * s,
    }


if __name__ == "__main__":
    key = jax.random.PRNGKey(0)
    k_f, k_m, k_p = jax.random.split(key, 3)

    B, T = 2, 8
    f = jax.random.normal(k_f, (B, T, FEATURE_DIM), jnp.float32)
    m = jax.nn.one_hot(
        jax.random.randint(k_m, (B,), 0, MANEUVER_DIM), MANEUVER_DIM,
        dtype=jnp.float32)

    params = init_params(k_p)

    out = tinycar_actor_lstm(f, m, params)
    out = jax.block_until_ready(out)

    ref = reference_forward(f, m, params)
    assert out.shape == (B, ACTION_DIM)
    # bf16 matmul operands with f32 accumulation -> relaxed tolerance vs f32 ref.
    assert jnp.allclose(out, ref, rtol=5e-2, atol=1e-2), (out, ref)

    print("KERNEL_OK")
</pallas_src>

<mosaic_0001>
module attributes {stable_mosaic.version = 11 : i64} {
  func.func @actor_lstm_kernel(%arg0: memref<64x256xbf16, #tpu.memory_space<vmem>>, %arg1: memref<8x128xbf16, #tpu.memory_space<vmem>>, %arg2: memref<256x1024xbf16, #tpu.memory_space<vmem>>, %arg3: memref<256x1024xbf16, #tpu.memory_space<vmem>>, %arg4: memref<1x1024xf32, #tpu.memory_space<vmem>>, %arg5: memref<128x256xbf16, #tpu.memory_space<vmem>>, %arg6: memref<1x256xf32, #tpu.memory_space<vmem>>, %arg7: memref<256x128xbf16, #tpu.memory_space<vmem>>, %arg8: memref<1x128xf32, #tpu.memory_space<vmem>>, %arg9: memref<128x128xbf16, #tpu.memory_space<vmem>>, %arg10: memref<1x128xf32, #tpu.memory_space<vmem>>, %arg11: memref<128x128xbf16, #tpu.memory_space<vmem>>, %arg12: memref<1x128xf32, #tpu.memory_space<vmem>>, %arg13: memref<128x128xbf16, #tpu.memory_space<vmem>>, %arg14: memref<1x128xf32, #tpu.memory_space<vmem>>, %arg15: memref<8x128xf32, #tpu.memory_space<vmem>>, %arg16: memref<64x1024xf32, #tpu.memory_space<vmem>>) attributes {dimension_semantics = [], scalar_prefetch = 0 : i64, scratch_operands = 1 : i64, tpu.core_type = #tpu.core_type<tc>} {
    %c0 = arith.constant 0 : index
    %c0_0 = arith.constant 0 : index
    %0 = vector.load %arg0[%c0, %c0_0] : memref<64x256xbf16, #tpu.memory_space<vmem>>, vector<64x256xbf16>
    %c0_1 = arith.constant 0 : index
    %c0_2 = arith.constant 0 : index
    %1 = vector.load %arg2[%c0_1, %c0_2] : memref<256x1024xbf16, #tpu.memory_space<vmem>>, vector<256x1024xbf16>
    %cst = arith.constant dense<0.000000e+00> : vector<64x1024xf32>
    %2 = tpu.matmul %0, %1, %cst {dimension_numbers = #tpu.dot_dimension_numbers<[1], [0], [0], [1], [0, 0, 1, 1], [], []>} : vector<64x256xbf16>, vector<256x1024xbf16>, vector<64x1024xf32> -> vector<64x1024xf32>
    %c0_3 = arith.constant 0 : index
    %c0_4 = arith.constant 0 : index
    %3 = vector.load %arg4[%c0_3, %c0_4] : memref<1x1024xf32, #tpu.memory_space<vmem>>, vector<1x1024xf32>
    %4 = vector.broadcast %3 : vector<1x1024xf32> to vector<64x1024xf32>
    %5 = arith.addf %2, %4 : vector<64x1024xf32>
    %c0_5 = arith.constant 0 : index
    %c0_6 = arith.constant 0 : index
    %6 = vector.load %arg16[%c0_5, %c0_6] : memref<64x1024xf32, #tpu.memory_space<vmem>>, vector<64x1024xf32>
    tpu.vector_store %arg16[%c0_5, %c0_6], %5 {strides = array<i32>} : memref<64x1024xf32, #tpu.memory_space<vmem>>, vector<64x1024xf32>,
    %c0_7 = arith.constant 0 : index
    %c0_8 = arith.constant 0 : index
    %7 = vector.load %arg3[%c0_7, %c0_8] : memref<256x1024xbf16, #tpu.memory_space<vmem>>, vector<256x1024xbf16>
    %cst_9 = arith.constant 0.000000e+00 : f32
    %8 = vector.broadcast %cst_9 : f32 to vector<8x256xf32>
    %cst_10 = arith.constant 0.000000e+00 : f32
    %9 = vector.broadcast %cst_10 : f32 to vector<8x256xf32>
    %c0_i32 = arith.constant 0 : i32
    %c8_i32 = arith.constant 8 : i32
    %10 = arith.muli %c0_i32, %c8_i32 : i32
    %11 = tpu.assume_multiple %10, 8 : i32
    %12 = arith.index_cast %11 : i32 to index
    %c0_11 = arith.constant 0 : index
    %13 = vector.load %arg16[%12, %c0_11] : memref<64x1024xf32, #tpu.memory_space<vmem>>, vector<8x1024xf32>
    %14 = arith.truncf %8 : vector<8x256xf32> to vector<8x256xbf16>
    %cst_12 = arith.constant dense<0.000000e+00> : vector<8x1024xf32>
    %15 = tpu.matmul %14, %7, %cst_12 {dimension_numbers = #tpu.dot_dimension_numbers<[1], [0], [0], [1], [0, 0, 1, 1], [], []>} : vector<8x256xbf16>, vector<256x1024xbf16>, vector<8x1024xf32> -> vector<8x1024xf32>
    %16 = arith.addf %13, %15 : vector<8x1024xf32>
    %17 = vector.extract_strided_slice %16 {offsets = [0, 0], sizes = [8, 256], strides = [1, 1]} : vector<8x1024xf32> to vector<8x256xf32>
    %18 = arith.negf %17 : vector<8x256xf32>
    %19 = math.exp %18 : vector<8x256xf32>
    %cst_13 = arith.constant 1.000000e+00 : f32
    %20 = vector.broadcast %cst_13 : f32 to vector<8x256xf32>
    %21 = arith.addf %20, %19 : vector<8x256xf32>
    %22 = arith.divf %20, %21 : vector<8x256xf32>
    %23 = vector.extract_strided_slice %16 {offsets = [0, 256], sizes = [8, 256], strides = [1, 1]} : vector<8x1024xf32> to vector<8x256xf32>
    %24 = arith.negf %23 : vector<8x256xf32>
    %25 = math.exp %24 : vector<8x256xf32>
    %cst_14 = arith.constant 1.000000e+00 : f32
    %26 = vector.broadcast %cst_14 : f32 to vector<8x256xf32>
    %27 = arith.addf %26, %25 : vector<8x256xf32>
    %28 = arith.divf %26, %27 : vector<8x256xf32>
    %29 = vector.extract_strided_slice %16 {offsets = [0, 512], sizes = [8, 256], strides = [1, 1]} : vector<8x1024xf32> to vector<8x256xf32>
    %30 = math.tanh %29 : vector<8x256xf32>
    %31 = vector.extract_strided_slice %16 {offsets = [0, 768], sizes = [8, 256], strides = [1, 1]} : vector<8x1024xf32> to vector<8x256xf32>
    %32 = arith.negf %31 : vector<8x256xf32>
    %33 = math.exp %32 : vector<8x256xf32>
    %cst_15 = arith.constant 1.000000e+00 : f32
    %34 = vector.broadcast %cst_15 : f32 to vector<8x256xf32>
    %35 = arith.addf %34, %33 : vector<8x256xf32>
    %36 = arith.divf %34, %35 : vector<8x256xf32>
    %37 = arith.mulf %28, %9 : vector<8x256xf32>
    %38 = arith.mulf %22, %30 : vector<8x256xf32>
    %39 = arith.addf %37, %38 : vector<8x256xf32>
    %40 = math.tanh %39 : vector<8x256xf32>
    %41 = arith.mulf %36, %40 : vector<8x256xf32>
    %c1_i32 = arith.constant 1 : i32
    %c8_i32_16 = arith.constant 8 : i32
    %42 = arith.muli %c1_i32, %c8_i32_16 : i32
    %43 = tpu.assume_multiple %42, 8 : i32
    %44 = arith.index_cast %43 : i32 to index
    %c0_17 = arith.constant 0 : index
    %45 = vector.load %arg16[%44, %c0_17] : memref<64x1024xf32, #tpu.memory_space<vmem>>, vector<8x1024xf32>
    %46 = arith.truncf %41 : vector<8x256xf32> to vector<8x256xbf16>
    %cst_18 = arith.constant dense<0.000000e+00> : vector<8x1024xf32>
    %47 = tpu.matmul %46, %7, %cst_18 {dimension_numbers = #tpu.dot_dimension_numbers<[1], [0], [0], [1], [0, 0, 1, 1], [], []>} : vector<8x256xbf16>, vector<256x1024xbf16>, vector<8x1024xf32> -> vector<8x1024xf32>
    %48 = arith.addf %45, %47 : vector<8x1024xf32>
    %49 = vector.extract_strided_slice %48 {offsets = [0, 0], sizes = [8, 256], strides = [1, 1]} : vector<8x1024xf32> to vector<8x256xf32>
    %50 = arith.negf %49 : vector<8x256xf32>
    %51 = math.exp %50 : vector<8x256xf32>
    %cst_19 = arith.constant 1.000000e+00 : f32
    %52 = vector.broadcast %cst_19 : f32 to vector<8x256xf32>
    %53 = arith.addf %52, %51 : vector<8x256xf32>
    %54 = arith.divf %52, %53 : vector<8x256xf32>
    %55 = vector.extract_strided_slice %48 {offsets = [0, 256], sizes = [8, 256], strides = [1, 1]} : vector<8x1024xf32> to vector<8x256xf32>
    %56 = arith.negf %55 : vector<8x256xf32>
    %57 = math.exp %56 : vector<8x256xf32>
    %cst_20 = arith.constant 1.000000e+00 : f32
    %58 = vector.broadcast %cst_20 : f32 to vector<8x256xf32>
    %59 = arith.addf %58, %57 : vector<8x256xf32>
    %60 = arith.divf %58, %59 : vector<8x256xf32>
    %61 = vector.extract_strided_slice %48 {offsets = [0, 512], sizes = [8, 256], strides = [1, 1]} : vector<8x1024xf32> to vector<8x256xf32>
    %62 = math.tanh %61 : vector<8x256xf32>
    %63 = vector.extract_strided_slice %48 {offsets = [0, 768], sizes = [8, 256], strides = [1, 1]} : vector<8x1024xf32> to vector<8x256xf32>
    %64 = arith.negf %63 : vector<8x256xf32>
    %65 = math.exp %64 : vector<8x256xf32>
    %cst_21 = arith.constant 1.000000e+00 : f32
    %66 = vector.broadcast %cst_21 : f32 to vector<8x256xf32>
    %67 = arith.addf %66, %65 : vector<8x256xf32>
    %68 = arith.divf %66, %67 : vector<8x256xf32>
    %69 = arith.mulf %60, %39 : vector<8x256xf32>
    %70 = arith.mulf %54, %62 : vector<8x256xf32>
    %71 = arith.addf %69, %70 : vector<8x256xf32>
    %72 = math.tanh %71 : vector<8x256xf32>
    %73 = arith.mulf %68, %72 : vector<8x256xf32>
    %c2_i32 = arith.constant 2 : i32
    %c8_i32_22 = arith.constant 8 : i32
    %74 = arith.muli %c2_i32, %c8_i32_22 : i32
    %75 = tpu.assume_multiple %74, 8 : i32
    %76 = arith.index_cast %75 : i32 to index
    %c0_23 = arith.constant 0 : index
    %77 = vector.load %arg16[%76, %c0_23] : memref<64x1024xf32, #tpu.memory_space<vmem>>, vector<8x1024xf32>
    %78 = arith.truncf %73 : vector<8x256xf32> to vector<8x256xbf16>
    %cst_24 = arith.constant dense<0.000000e+00> : vector<8x1024xf32>
    %79 = tpu.matmul %78, %7, %cst_24 {dimension_numbers = #tpu.dot_dimension_numbers<[1], [0], [0], [1], [0, 0, 1, 1], [], []>} : vector<8x256xbf16>, vector<256x1024xbf16>, vector<8x1024xf32> -> vector<8x1024xf32>
    %80 = arith.addf %77, %79 : vector<8x1024xf32>
    %81 = vector.extract_strided_slice %80 {offsets = [0, 0], sizes = [8, 256], strides = [1, 1]} : vector<8x1024xf32> to vector<8x256xf32>
    %82 = arith.negf %81 : vector<8x256xf32>
    %83 = math.exp %82 : vector<8x256xf32>
    %cst_25 = arith.constant 1.000000e+00 : f32
    %84 = vector.broadcast %cst_25 : f32 to vector<8x256xf32>
    %85 = arith.addf %84, %83 : vector<8x256xf32>
    %86 = arith.divf %84, %85 : vector<8x256xf32>
    %87 = vector.extract_strided_slice %80 {offsets = [0, 256], sizes = [8, 256], strides = [1, 1]} : vector<8x1024xf32> to vector<8x256xf32>
    %88 = arith.negf %87 : vector<8x256xf32>
    %89 = math.exp %88 : vector<8x256xf32>
    %cst_26 = arith.constant 1.000000e+00 : f32
    %90 = vector.broadcast %cst_26 : f32 to vector<8x256xf32>
    %91 = arith.addf %90, %89 : vector<8x256xf32>
    %92 = arith.divf %90, %91 : vector<8x256xf32>
    %93 = vector.extract_strided_slice %80 {offsets = [0, 512], sizes = [8, 256], strides = [1, 1]} : vector<8x1024xf32> to vector<8x256xf32>
    %94 = math.tanh %93 : vector<8x256xf32>
    %95 = vector.extract_strided_slice %80 {offsets = [0, 768], sizes = [8, 256], strides = [1, 1]} : vector<8x1024xf32> to vector<8x256xf32>
    %96 = arith.negf %95 : vector<8x256xf32>
    %97 = math.exp %96 : vector<8x256xf32>
    %cst_27 = arith.constant 1.000000e+00 : f32
    %98 = vector.broadcast %cst_27 : f32 to vector<8x256xf32>
    %99 = arith.addf %98, %97 : vector<8x256xf32>
    %100 = arith.divf %98, %99 : vector<8x256xf32>
    %101 = arith.mulf %92, %71 : vector<8x256xf32>
    %102 = arith.mulf %86, %94 : vector<8x256xf32>
    %103 = arith.addf %101, %102 : vector<8x256xf32>
    %104 = math.tanh %103 : vector<8x256xf32>
    %105 = arith.mulf %100, %104 : vector<8x256xf32>
    %c3_i32 = arith.constant 3 : i32
    %c8_i32_28 = arith.constant 8 : i32
    %106 = arith.muli %c3_i32, %c8_i32_28 : i32
    %107 = tpu.assume_multiple %106, 8 : i32
    %108 = arith.index_cast %107 : i32 to index
    %c0_29 = arith.constant 0 : index
    %109 = vector.load %arg16[%108, %c0_29] : memref<64x1024xf32, #tpu.memory_space<vmem>>, vector<8x1024xf32>
    %110 = arith.truncf %105 : vector<8x256xf32> to vector<8x256xbf16>
    %cst_30 = arith.constant dense<0.000000e+00> : vector<8x1024xf32>
    %111 = tpu.matmul %110, %7, %cst_30 {dimension_numbers = #tpu.dot_dimension_numbers<[1], [0], [0], [1], [0, 0, 1, 1], [], []>} : vector<8x256xbf16>, vector<256x1024xbf16>, vector<8x1024xf32> -> vector<8x1024xf32>
    %112 = arith.addf %109, %111 : vector<8x1024xf32>
    %113 = vector.extract_strided_slice %112 {offsets = [0, 0], sizes = [8, 256], strides = [1, 1]} : vector<8x1024xf32> to vector<8x256xf32>
    %114 = arith.negf %113 : vector<8x256xf32>
    %115 = math.exp %114 : vector<8x256xf32>
    %cst_31 = arith.constant 1.000000e+00 : f32
    %116 = vector.broadcast %cst_31 : f32 to vector<8x256xf32>
    %117 = arith.addf %116, %115 : vector<8x256xf32>
    %118 = arith.divf %116, %117 : vector<8x256xf32>
    %119 = vector.extract_strided_slice %112 {offsets = [0, 256], sizes = [8, 256], strides = [1, 1]} : vector<8x1024xf32> to vector<8x256xf32>
    %120 = arith.negf %119 : vector<8x256xf32>
    %121 = math.exp %120 : vector<8x256xf32>
    %cst_32 = arith.constant 1.000000e+00 : f32
    %122 = vector.broadcast %cst_32 : f32 to vector<8x256xf32>
    %123 = arith.addf %122, %121 : vector<8x256xf32>
    %124 = arith.divf %122, %123 : vector<8x256xf32>
    %125 = vector.extract_strided_slice %112 {offsets = [0, 512], sizes = [8, 256], strides = [1, 1]} : vector<8x1024xf32> to vector<8x256xf32>
    %126 = math.tanh %125 : vector<8x256xf32>
    %127 = vector.extract_strided_slice %112 {offsets = [0, 768], sizes = [8, 256], strides = [1, 1]} : vector<8x1024xf32> to vector<8x256xf32>
    %128 = arith.negf %127 : vector<8x256xf32>
    %129 = math.exp %128 : vector<8x256xf32>
    %cst_33 = arith.constant 1.000000e+00 : f32
    %130 = vector.broadcast %cst_33 : f32 to vector<8x256xf32>
    %131 = arith.addf %130, %129 : vector<8x256xf32>
    %132 = arith.divf %130, %131 : vector<8x256xf32>
    %133 = arith.mulf %124, %103 : vector<8x256xf32>
    %134 = arith.mulf %118, %126 : vector<8x256xf32>
    %135 = arith.addf %133, %134 : vector<8x256xf32>
    %136 = math.tanh %135 : vector<8x256xf32>
    %137 = arith.mulf %132, %136 : vector<8x256xf32>
    %c4_i32 = arith.constant 4 : i32
    %c8_i32_34 = arith.constant 8 : i32
    %138 = arith.muli %c4_i32, %c8_i32_34 : i32
    %139 = tpu.assume_multiple %138, 8 : i32
    %140 = arith.index_cast %139 : i32 to index
    %c0_35 = arith.constant 0 : index
    %141 = vector.load %arg16[%140, %c0_35] : memref<64x1024xf32, #tpu.memory_space<vmem>>, vector<8x1024xf32>
    %142 = arith.truncf %137 : vector<8x256xf32> to vector<8x256xbf16>
    %cst_36 = arith.constant dense<0.000000e+00> : vector<8x1024xf32>
    %143 = tpu.matmul %142, %7, %cst_36 {dimension_numbers = #tpu.dot_dimension_numbers<[1], [0], [0], [1], [0, 0, 1, 1], [], []>} : vector<8x256xbf16>, vector<256x1024xbf16>, vector<8x1024xf32> -> vector<8x1024xf32>
    %144 = arith.addf %141, %143 : vector<8x1024xf32>
    %145 = vector.extract_strided_slice %144 {offsets = [0, 0], sizes = [8, 256], strides = [1, 1]} : vector<8x1024xf32> to vector<8x256xf32>
    %146 = arith.negf %145 : vector<8x256xf32>
    %147 = math.exp %146 : vector<8x256xf32>
    %cst_37 = arith.constant 1.000000e+00 : f32
    %148 = vector.broadcast %cst_37 : f32 to vector<8x256xf32>
    %149 = arith.addf %148, %147 : vector<8x256xf32>
    %150 = arith.divf %148, %149 : vector<8x256xf32>
    %151 = vector.extract_strided_slice %144 {offsets = [0, 256], sizes = [8, 256], strides = [1, 1]} : vector<8x1024xf32> to vector<8x256xf32>
    %152 = arith.negf %151 : vector<8x256xf32>
    %153 = math.exp %152 : vector<8x256xf32>
    %cst_38 = arith.constant 1.000000e+00 : f32
    %154 = vector.broadcast %cst_38 : f32 to vector<8x256xf32>
    %155 = arith.addf %154, %153 : vector<8x256xf32>
    %156 = arith.divf %154, %155 : vector<8x256xf32>
    %157 = vector.extract_strided_slice %144 {offsets = [0, 512], sizes = [8, 256], strides = [1, 1]} : vector<8x1024xf32> to vector<8x256xf32>
    %158 = math.tanh %157 : vector<8x256xf32>
    %159 = vector.extract_strided_slice %144 {offsets = [0, 768], sizes = [8, 256], strides = [1, 1]} : vector<8x1024xf32> to vector<8x256xf32>
    %160 = arith.negf %159 : vector<8x256xf32>
    %161 = math.exp %160 : vector<8x256xf32>
    %cst_39 = arith.constant 1.000000e+00 : f32
    %162 = vector.broadcast %cst_39 : f32 to vector<8x256xf32>
    %163 = arith.addf %162, %161 : vector<8x256xf32>
    %164 = arith.divf %162, %163 : vector<8x256xf32>
    %165 = arith.mulf %156, %135 : vector<8x256xf32>
    %166 = arith.mulf %150, %158 : vector<8x256xf32>
    %167 = arith.addf %165, %166 : vector<8x256xf32>
    %168 = math.tanh %167 : vector<8x256xf32>
    %169 = arith.mulf %164, %168 : vector<8x256xf32>
    %c5_i32 = arith.constant 5 : i32
    %c8_i32_40 = arith.constant 8 : i32
    %170 = arith.muli %c5_i32, %c8_i32_40 : i32
    %171 = tpu.assume_multiple %170, 8 : i32
    %172 = arith.index_cast %171 : i32 to index
    %c0_41 = arith.constant 0 : index
    %173 = vector.load %arg16[%172, %c0_41] : memref<64x1024xf32, #tpu.memory_space<vmem>>, vector<8x1024xf32>
    %174 = arith.truncf %169 : vector<8x256xf32> to vector<8x256xbf16>
    %cst_42 = arith.constant dense<0.000000e+00> : vector<8x1024xf32>
    %175 = tpu.matmul %174, %7, %cst_42 {dimension_numbers = #tpu.dot_dimension_numbers<[1], [0], [0], [1], [0, 0, 1, 1], [], []>} : vector<8x256xbf16>, vector<256x1024xbf16>, vector<8x1024xf32> -> vector<8x1024xf32>
    %176 = arith.addf %173, %175 : vector<8x1024xf32>
    %177 = vector.extract_strided_slice %176 {offsets = [0, 0], sizes = [8, 256], strides = [1, 1]} : vector<8x1024xf32> to vector<8x256xf32>
    %178 = arith.negf %177 : vector<8x256xf32>
    %179 = math.exp %178 : vector<8x256xf32>
    %cst_43 = arith.constant 1.000000e+00 : f32
    %180 = vector.broadcast %cst_43 : f32 to vector<8x256xf32>
    %181 = arith.addf %180, %179 : vector<8x256xf32>
    %182 = arith.divf %180, %181 : vector<8x256xf32>
    %183 = vector.extract_strided_slice %176 {offsets = [0, 256], sizes = [8, 256], strides = [1, 1]} : vector<8x1024xf32> to vector<8x256xf32>
    %184 = arith.negf %183 : vector<8x256xf32>
    %185 = math.exp %184 : vector<8x256xf32>
    %cst_44 = arith.constant 1.000000e+00 : f32
    %186 = vector.broadcast %cst_44 : f32 to vector<8x256xf32>
    %187 = arith.addf %186, %185 : vector<8x256xf32>
    %188 = arith.divf %186, %187 : vector<8x256xf32>
    %189 = vector.extract_strided_slice %176 {offsets = [0, 512], sizes = [8, 256], strides = [1, 1]} : vector<8x1024xf32> to vector<8x256xf32>
    %190 = math.tanh %189 : vector<8x256xf32>
    %191 = vector.extract_strided_slice %176 {offsets = [0, 768], sizes = [8, 256], strides = [1, 1]} : vector<8x1024xf32> to vector<8x256xf32>
    %192 = arith.negf %191 : vector<8x256xf32>
    %193 = math.exp %192 : vector<8x256xf32>
    %cst_45 = arith.constant 1.000000e+00 : f32
    %194 = vector.broadcast %cst_45 : f32 to vector<8x256xf32>
    %195 = arith.addf %194, %193 : vector<8x256xf32>
    %196 = arith.divf %194, %195 : vector<8x256xf32>
    %197 = arith.mulf %188, %167 : vector<8x256xf32>
    %198 = arith.mulf %182, %190 : vector<8x256xf32>
    %199 = arith.addf %197, %198 : vector<8x256xf32>
    %200 = math.tanh %199 : vector<8x256xf32>
    %201 = arith.mulf %196, %200 : vector<8x256xf32>
    %c6_i32 = arith.constant 6 : i32
    %c8_i32_46 = arith.constant 8 : i32
    %202 = arith.muli %c6_i32, %c8_i32_46 : i32
    %203 = tpu.assume_multiple %202, 8 : i32
    %204 = arith.index_cast %203 : i32 to index
    %c0_47 = arith.constant 0 : index
    %205 = vector.load %arg16[%204, %c0_47] : memref<64x1024xf32, #tpu.memory_space<vmem>>, vector<8x1024xf32>
    %206 = arith.truncf %201 : vector<8x256xf32> to vector<8x256xbf16>
    %cst_48 = arith.constant dense<0.000000e+00> : vector<8x1024xf32>
    %207 = tpu.matmul %206, %7, %cst_48 {dimension_numbers = #tpu.dot_dimension_numbers<[1], [0], [0], [1], [0, 0, 1, 1], [], []>} : vector<8x256xbf16>, vector<256x1024xbf16>, vector<8x1024xf32> -> vector<8x1024xf32>
    %208 = arith.addf %205, %207 : vector<8x1024xf32>
    %209 = vector.extract_strided_slice %208 {offsets = [0, 0], sizes = [8, 256], strides = [1, 1]} : vector<8x1024xf32> to vector<8x256xf32>
    %210 = arith.negf %209 : vector<8x256xf32>
    %211 = math.exp %210 : vector<8x256xf32>
    %cst_49 = arith.constant 1.000000e+00 : f32
    %212 = vector.broadcast %cst_49 : f32 to vector<8x256xf32>
    %213 = arith.addf %212, %211 : vector<8x256xf32>
    %214 = arith.divf %212, %213 : vector<8x256xf32>
    %215 = vector.extract_strided_slice %208 {offsets = [0, 256], sizes = [8, 256], strides = [1, 1]} : vector<8x1024xf32> to vector<8x256xf32>
    %216 = arith.negf %215 : vector<8x256xf32>
    %217 = math.exp %216 : vector<8x256xf32>
    %cst_50 = arith.constant 1.000000e+00 : f32
    %218 = vector.broadcast %cst_50 : f32 to vector<8x256xf32>
    %219 = arith.addf %218, %217 : vector<8x256xf32>
    %220 = arith.divf %218, %219 : vector<8x256xf32>
    %221 = vector.extract_strided_slice %208 {offsets = [0, 512], sizes = [8, 256], strides = [1, 1]} : vector<8x1024xf32> to vector<8x256xf32>
    %222 = math.tanh %221 : vector<8x256xf32>
    %223 = vector.extract_strided_slice %208 {offsets = [0, 768], sizes = [8, 256], strides = [1, 1]} : vector<8x1024xf32> to vector<8x256xf32>
    %224 = arith.negf %223 : vector<8x256xf32>
    %225 = math.exp %224 : vector<8x256xf32>
    %cst_51 = arith.constant 1.000000e+00 : f32
    %226 = vector.broadcast %cst_51 : f32 to vector<8x256xf32>
    %227 = arith.addf %226, %225 : vector<8x256xf32>
    %228 = arith.divf %226, %227 : vector<8x256xf32>
    %229 = arith.mulf %220, %199 : vector<8x256xf32>
    %230 = arith.mulf %214, %222 : vector<8x256xf32>
    %231 = arith.addf %229, %230 : vector<8x256xf32>
    %232 = math.tanh %231 : vector<8x256xf32>
    %233 = arith.mulf %228, %232 : vector<8x256xf32>
    %c7_i32 = arith.constant 7 : i32
    %c8_i32_52 = arith.constant 8 : i32
    %234 = arith.muli %c7_i32, %c8_i32_52 : i32
    %235 = tpu.assume_multiple %234, 8 : i32
    %236 = arith.index_cast %235 : i32 to index
    %c0_53 = arith.constant 0 : index
    %237 = vector.load %arg16[%236, %c0_53] : memref<64x1024xf32, #tpu.memory_space<vmem>>, vector<8x1024xf32>
    %238 = arith.truncf %233 : vector<8x256xf32> to vector<8x256xbf16>
    %cst_54 = arith.constant dense<0.000000e+00> : vector<8x1024xf32>
    %239 = tpu.matmul %238, %7, %cst_54 {dimension_numbers = #tpu.dot_dimension_numbers<[1], [0], [0], [1], [0, 0, 1, 1], [], []>} : vector<8x256xbf16>, vector<256x1024xbf16>, vector<8x1024xf32> -> vector<8x1024xf32>
    %240 = arith.addf %237, %239 : vector<8x1024xf32>
    %241 = vector.extract_strided_slice %240 {offsets = [0, 0], sizes = [8, 256], strides = [1, 1]} : vector<8x1024xf32> to vector<8x256xf32>
    %242 = arith.negf %241 : vector<8x256xf32>
    %243 = math.exp %242 : vector<8x256xf32>
    %cst_55 = arith.constant 1.000000e+00 : f32
    %244 = vector.broadcast %cst_55 : f32 to vector<8x256xf32>
    %245 = arith.addf %244, %243 : vector<8x256xf32>
    %246 = arith.divf %244, %245 : vector<8x256xf32>
    %247 = vector.extract_strided_slice %240 {offsets = [0, 256], sizes = [8, 256], strides = [1, 1]} : vector<8x1024xf32> to vector<8x256xf32>
    %248 = arith.negf %247 : vector<8x256xf32>
    %249 = math.exp %248 : vector<8x256xf32>
    %cst_56 = arith.constant 1.000000e+00 : f32
    %250 = vector.broadcast %cst_56 : f32 to vector<8x256xf32>
    %251 = arith.addf %250, %249 : vector<8x256xf32>
    %252 = arith.divf %250, %251 : vector<8x256xf32>
    %253 = vector.extract_strided_slice %240 {offsets = [0, 512], sizes = [8, 256], strides = [1, 1]} : vector<8x1024xf32> to vector<8x256xf32>
    %254 = math.tanh %253 : vector<8x256xf32>
    %255 = vector.extract_strided_slice %240 {offsets = [0, 768], sizes = [8, 256], strides = [1, 1]} : vector<8x1024xf32> to vector<8x256xf32>
    %256 = arith.negf %255 : vector<8x256xf32>
    %257 = math.exp %256 : vector<8x256xf32>
    %cst_57 = arith.constant 1.000000e+00 : f32
    %258 = vector.broadcast %cst_57 : f32 to vector<8x256xf32>
    %259 = arith.addf %258, %257 : vector<8x256xf32>
    %260 = arith.divf %258, %259 : vector<8x256xf32>
    %261 = arith.mulf %252, %231 : vector<8x256xf32>
    %262 = arith.mulf %246, %254 : vector<8x256xf32>
    %263 = arith.addf %261, %262 : vector<8x256xf32>
    %264 = math.tanh %263 : vector<8x256xf32>
    %265 = arith.mulf %260, %264 : vector<8x256xf32>
    %c8_i32_58 = arith.constant 8 : i32
    %c0_59 = arith.constant 0 : index
    %c0_60 = arith.constant 0 : index
    %266 = vector.load %arg1[%c0_59, %c0_60] : memref<8x128xbf16, #tpu.memory_space<vmem>>, vector<8x128xbf16>
    %c0_61 = arith.constant 0 : index
    %c0_62 = arith.constant 0 : index
    %267 = vector.load %arg5[%c0_61, %c0_62] : memref<128x256xbf16, #tpu.memory_space<vmem>>, vector<128x256xbf16>
    %cst_63 = arith.constant dense<0.000000e+00> : vector<8x256xf32>
    %268 = tpu.matmul %266, %267, %cst_63 {dimension_numbers = #tpu.dot_dimension_numbers<[1], [0], [0], [1], [0, 0, 1, 1], [], []>} : vector<8x128xbf16>, vector<128x256xbf16>, vector<8x256xf32> -> vector<8x256xf32>
    %c0_64 = arith.constant 0 : index
    %c0_65 = arith.constant 0 : index
    %269 = vector.load %arg6[%c0_64, %c0_65] : memref<1x256xf32, #tpu.memory_space<vmem>>, vector<1x256xf32>
    %270 = vector.broadcast %269 : vector<1x256xf32> to vector<8x256xf32>
    %271 = arith.addf %268, %270 : vector<8x256xf32>
    %272 = arith.negf %271 : vector<8x256xf32>
    %273 = math.exp %272 : vector<8x256xf32>
    %cst_66 = arith.constant 1.000000e+00 : f32
    %274 = vector.broadcast %cst_66 : f32 to vector<8x256xf32>
    %275 = arith.addf %274, %273 : vector<8x256xf32>
    %276 = arith.divf %274, %275 : vector<8x256xf32>
    %277 = arith.mulf %265, %276 : vector<8x256xf32>
    %278 = arith.truncf %277 : vector<8x256xf32> to vector<8x256xbf16>
    %c0_67 = arith.constant 0 : index
    %c0_68 = arith.constant 0 : index
    %279 = vector.load %arg7[%c0_67, %c0_68] : memref<256x128xbf16, #tpu.memory_space<vmem>>, vector<256x128xbf16>
    %cst_69 = arith.constant dense<0.000000e+00> : vector<8x128xf32>
    %280 = tpu.matmul %278, %279, %cst_69 {dimension_numbers = #tpu.dot_dimension_numbers<[1], [0], [0], [1], [0, 0, 1, 1], [], []>} : vector<8x256xbf16>, vector<256x128xbf16>, vector<8x128xf32> -> vector<8x128xf32>
    %c0_70 = arith.constant 0 : index
    %c0_71 = arith.constant 0 : index
    %281 = vector.load %arg8[%c0_70, %c0_71] : memref<1x128xf32, #tpu.memory_space<vmem>>, vector<1x128xf32>
    %282 = vector.broadcast %281 : vector<1x128xf32> to vector<8x128xf32>
    %283 = arith.addf %280, %282 : vector<8x128xf32>
    %cst_72 = arith.constant 0.000000e+00 : f32
    %284 = vector.broadcast %cst_72 : f32 to vector<8x128xf32>
    %285 = arith.maximumf %283, %284 : vector<8x128xf32>
    %286 = arith.truncf %285 : vector<8x128xf32> to vector<8x128xbf16>
    %c0_73 = arith.constant 0 : index
    %c0_74 = arith.constant 0 : index
    %287 = vector.load %arg9[%c0_73, %c0_74] : memref<128x128xbf16, #tpu.memory_space<vmem>>, vector<128x128xbf16>
    %cst_75 = arith.constant dense<0.000000e+00> : vector<8x128xf32>
    %288 = tpu.matmul %286, %287, %cst_75 {dimension_numbers = #tpu.dot_dimension_numbers<[1], [0], [0], [1], [0, 0, 1, 1], [], []>} : vector<8x128xbf16>, vector<128x128xbf16>, vector<8x128xf32> -> vector<8x128xf32>
    %c0_76 = arith.constant 0 : index
    %c0_77 = arith.constant 0 : index
    %289 = vector.load %arg10[%c0_76, %c0_77] : memref<1x128xf32, #tpu.memory_space<vmem>>, vector<1x128xf32>
    %290 = vector.broadcast %289 : vector<1x128xf32> to vector<8x128xf32>
    %291 = arith.addf %288, %290 : vector<8x128xf32>
    %cst_78 = arith.constant 0.000000e+00 : f32
    %292 = vector.broadcast %cst_78 : f32 to vector<8x128xf32>
    %293 = arith.maximumf %291, %292 : vector<8x128xf32>
    %294 = arith.truncf %293 : vector<8x128xf32> to vector<8x128xbf16>
    %c0_79 = arith.constant 0 : index
    %c0_80 = arith.constant 0 : index
    %295 = vector.load %arg11[%c0_79, %c0_80] : memref<128x128xbf16, #tpu.memory_space<vmem>>, vector<128x128xbf16>
    %cst_81 = arith.constant dense<0.000000e+00> : vector<8x128xf32>
    %296 = tpu.matmul %294, %295, %cst_81 {dimension_numbers = #tpu.dot_dimension_numbers<[1], [0], [0], [1], [0, 0, 1, 1], [], []>} : vector<8x128xbf16>, vector<128x128xbf16>, vector<8x128xf32> -> vector<8x128xf32>
    %c0_82 = arith.constant 0 : index
    %c0_83 = arith.constant 0 : index
    %297 = vector.load %arg12[%c0_82, %c0_83] : memref<1x128xf32, #tpu.memory_space<vmem>>, vector<1x128xf32>
    %298 = vector.broadcast %297 : vector<1x128xf32> to vector<8x128xf32>
    %299 = arith.addf %296, %298 : vector<8x128xf32>
    %cst_84 = arith.constant 0.000000e+00 : f32
    %300 = vector.broadcast %cst_84 : f32 to vector<8x128xf32>
    %301 = arith.maximumf %299, %300 : vector<8x128xf32>
    %302 = arith.truncf %301 : vector<8x128xf32> to vector<8x128xbf16>
    %c0_85 = arith.constant 0 : index
    %c0_86 = arith.constant 0 : index
    %303 = vector.load %arg13[%c0_85, %c0_86] : memref<128x128xbf16, #tpu.memory_space<vmem>>, vector<128x128xbf16>
    %cst_87 = arith.constant dense<0.000000e+00> : vector<8x128xf32>
    %304 = tpu.matmul %302, %303, %cst_87 {dimension_numbers = #tpu.dot_dimension_numbers<[1], [0], [0], [1], [0, 0, 1, 1], [], []>} : vector<8x128xbf16>, vector<128x128xbf16>, vector<8x128xf32> -> vector<8x128xf32>
    %c0_88 = arith.constant 0 : index
    %c0_89 = arith.constant 0 : index
    %305 = vector.load %arg14[%c0_88, %c0_89] : memref<1x128xf32, #tpu.memory_space<vmem>>, vector<1x128xf32>
    %306 = vector.broadcast %305 : vector<1x128xf32> to vector<8x128xf32>
    %307 = arith.addf %304, %306 : vector<8x128xf32>
    %308 = math.tanh %307 : vector<8x128xf32>
    %c0_90 = arith.constant 0 : index
    %c0_91 = arith.constant 0 : index
    %309 = vector.load %arg15[%c0_90, %c0_91] : memref<8x128xf32, #tpu.memory_space<vmem>>, vector<8x128xf32>
    tpu.vector_store %arg15[%c0_90, %c0_91], %308 {strides = array<i32>} : memref<8x128xf32, #tpu.memory_space<vmem>>, vector<8x128xf32>,
    return
  }
}

</mosaic_0001>

<llo_original>
// kernel: tinycar_actor_lstm.1
$region0: #{tinycar_actor_lstm.1}
  #allocation0 [shape = 'u32[]', space=smem, size = 0x4, offset = 0x4, fixed_abs, tag = 'smem constant byte address 0x4 - core index']
  #allocation1 [shape = 'u32[144,128]{1,0:T(1,128)}', space=vmem, size = 0x12000, scoped, tag = 'internal scratch']
  #allocation2 [shape = 'f32[64,1024]{1,0:T(8,128)}', space=vmem, size = 0x40000, scoped, tag = 'scratch operand']
  %s0 = inlined_call_operand.vmem [shape: bf16[64,256], index: 0, kind: input, shape index: {}]
  %s1 = inlined_call_operand.vmem [shape: bf16[8,128], index: 1, kind: input, shape index: {}]
  %s2 = inlined_call_operand.vmem [shape: bf16[256,1024], index: 2, kind: input, shape index: {}]
  %s3 = inlined_call_operand.vmem [shape: bf16[256,1024], index: 3, kind: input, shape index: {}]
  %s4 = inlined_call_operand.vmem [shape: f32[1,1024], index: 4, kind: input, shape index: {}]
  %s5 = inlined_call_operand.vmem [shape: bf16[128,256], index: 5, kind: input, shape index: {}]
  %s6 = inlined_call_operand.vmem [shape: f32[1,256], index: 6, kind: input, shape index: {}]
  %s7 = inlined_call_operand.vmem [shape: bf16[256,128], index: 7, kind: input, shape index: {}]
  %s8 = inlined_call_operand.vmem [shape: f32[1,128], index: 8, kind: input, shape index: {}]
  %s9 = inlined_call_operand.vmem [shape: bf16[128,128], index: 9, kind: input, shape index: {}]
  %s10 = inlined_call_operand.vmem [shape: f32[1,128], index: 10, kind: input, shape index: {}]
  %s11 = inlined_call_operand.vmem [shape: bf16[128,128], index: 11, kind: input, shape index: {}]
  %s12 = inlined_call_operand.vmem [shape: f32[1,128], index: 12, kind: input, shape index: {}]
  %s13 = inlined_call_operand.vmem [shape: bf16[128,128], index: 13, kind: input, shape index: {}]
  %s14 = inlined_call_operand.vmem [shape: f32[1,128], index: 14, kind: input, shape index: {}]
  %s15 = inlined_call_operand.vmem [shape: f32[8,128], index: 15, kind: output, shape index: {}]
  %s16 = sld [smem:[#allocation0]]
  $region70: #{tinycar_actor_lstm.1} parent=0
    _
  %s18 = ssub.s32 1, %s16
  %s19 = scalar_select 0, %s18, %s16
  // Predicated region
  $region2: #{tinycar_actor_lstm.1} parent=0 // pred_check
    _
  $region3: #{tinycar_actor_lstm.1} parent=0 // pred_check_branch
    %21 = sbr.rel (0) target = $region5
  $region4: #{tinycar_actor_lstm.1} parent=0 // pred_region
    _
  $region5: #{tinycar_actor_lstm.1} parent=0 // pred_fallthru
    _
  // Predicated region
  $region6: #{tinycar_actor_lstm.1} parent=0 // pred_check
    _
  $region7: #{tinycar_actor_lstm.1} parent=0 // pred_check_branch
    %23 = sbr.rel (0) target = $region9
  $region8: #{tinycar_actor_lstm.1} parent=0 // pred_region
    _
  $region9: #{tinycar_actor_lstm.1} parent=0 // pred_fallthru
    _
  // Predicated region
  $region10: #{tinycar_actor_lstm.1} parent=0 // pred_check
    _
  $region11: #{tinycar_actor_lstm.1} parent=0 // pred_check_branch
    %25 = sbr.rel (0) target = $region13
  $region12: #{tinycar_actor_lstm.1} parent=0 // pred_region
    _
  $region13: #{tinycar_actor_lstm.1} parent=0 // pred_fallthru
    _
  // Predicated region
  $region14: #{tinycar_actor_lstm.1} parent=0 // pred_check
    _
  $region15: #{tinycar_actor_lstm.1} parent=0 // pred_check_branch
    %27 = sbr.rel (0) target = $region17
  $region16: #{tinycar_actor_lstm.1} parent=0 // pred_region
    _
  $region17: #{tinycar_actor_lstm.1} parent=0 // pred_fallthru
    _
  // Predicated region
  $region18: #{tinycar_actor_lstm.1} parent=0 // pred_check
    _
  $region19: #{tinycar_actor_lstm.1} parent=0 // pred_check_branch
    %29 = sbr.rel (0) target = $region21
  $region20: #{tinycar_actor_lstm.1} parent=0 // pred_region
    _
  $region21: #{tinycar_actor_lstm.1} parent=0 // pred_fallthru
    _
  // Predicated region
  $region22: #{tinycar_actor_lstm.1} parent=0 // pred_check
    _
  $region23: #{tinycar_actor_lstm.1} parent=0 // pred_check_branch
    %31 = sbr.rel (0) target = $region25
  $region24: #{tinycar_actor_lstm.1} parent=0 // pred_region
    _
  $region25: #{tinycar_actor_lstm.1} parent=0 // pred_fallthru
    _
  // Predicated region
  $region26: #{tinycar_actor_lstm.1} parent=0 // pred_check
    _
  $region27: #{tinycar_actor_lstm.1} parent=0 // pred_check_branch
    %33 = sbr.rel (0) target = $region29
  $region28: #{tinycar_actor_lstm.1} parent=0 // pred_region
    _
  $region29: #{tinycar_actor_lstm.1} parent=0 // pred_fallthru
    _
  // Predicated region
  $region30: #{tinycar_actor_lstm.1} parent=0 // pred_check
    _
  $region31: #{tinycar_actor_lstm.1} parent=0 // pred_check_branch
    %35 = sbr.rel (0) target = $region33
  $region32: #{tinycar_actor_lstm.1} parent=0 // pred_region
    _
  $region33: #{tinycar_actor_lstm.1} parent=0 // pred_fallthru
    _
  // Predicated region
  $region34: #{tinycar_actor_lstm.1} parent=0 // pred_check
    _
  $region35: #{tinycar_actor_lstm.1} parent=0 // pred_check_branch
    %37 = sbr.rel (0) target = $region37
  $region36: #{tinycar_actor_lstm.1} parent=0 // pred_region
    _
  $region37: #{tinycar_actor_lstm.1} parent=0 // pred_fallthru
    _
  // Predicated region
  $region38: #{tinycar_actor_lstm.1} parent=0 // pred_check
    _
  $region39: #{tinycar_actor_lstm.1} parent=0 // pred_check_branch
    %39 = sbr.rel (0) target = $region41
  $region40: #{tinycar_actor_lstm.1} parent=0 // pred_region
    _
  $region41: #{tinycar_actor_lstm.1} parent=0 // pred_fallthru
    _
  // Predicated region
  $region42: #{tinycar_actor_lstm.1} parent=0 // pred_check
    _
  $region43: #{tinycar_actor_lstm.1} parent=0 // pred_check_branch
    %41 = sbr.rel (0) target = $region45
  $region44: #{tinycar_actor_lstm.1} parent=0 // pred_region
    _
  $region45: #{tinycar_actor_lstm.1} parent=0 // pred_fallthru
    _
  // Predicated region
  $region46: #{tinycar_actor_lstm.1} parent=0 // pred_check
    _
  $region47: #{tinycar_actor_lstm.1} parent=0 // pred_check_branch
    %43 = sbr.rel (0) target = $region49
  $region48: #{tinycar_actor_lstm.1} parent=0 // pred_region
    _
  $region49: #{tinycar_actor_lstm.1} parent=0 // pred_fallthru
    _
  // Predicated region
  $region50: #{tinycar_actor_lstm.1} parent=0 // pred_check
    _
  $region51: #{tinycar_actor_lstm.1} parent=0 // pred_check_branch
    %45 = sbr.rel (0) target = $region53
  $region52: #{tinycar_actor_lstm.1} parent=0 // pred_region
    _
  $region53: #{tinycar_actor_lstm.1} parent=0 // pred_fallthru
    _
  // Predicated region
  $region54: #{tinycar_actor_lstm.1} parent=0 // pred_check
    _
  $region55: #{tinycar_actor_lstm.1} parent=0 // pred_check_branch
    %47 = sbr.rel (0) target = $region57
  $region56: #{tinycar_actor_lstm.1} parent=0 // pred_region
    _
  $region57: #{tinycar_actor_lstm.1} parent=0 // pred_fallthru
    _
  // Predicated region
  $region58: #{tinycar_actor_lstm.1} parent=0 // pred_check
    _
  $region59: #{tinycar_actor_lstm.1} parent=0 // pred_check_branch
    %49 = sbr.rel (0) target = $region61
  $region60: #{tinycar_actor_lstm.1} parent=0 // pred_region
    _
  $region61: #{tinycar_actor_lstm.1} parent=0 // pred_fallthru
    _
  %v51 = vld [vmem:[%s0] sm:$0xff]
  %v52 = vld [vmem:[%s0 + $0x8] sm:$0xff]
  %v53 = vld [vmem:[%s0 + $0x10] sm:$0xff]
  %v54 = vld [vmem:[%s0 + $0x18] sm:$0xff]
  %v55 = vld [vmem:[%s0 + $0x20] sm:$0xff]
  %v56 = vld [vmem:[%s0 + $0x28] sm:$0xff]
  %v57 = vld [vmem:[%s0 + $0x30] sm:$0xff]
  %v58 = vld [vmem:[%s0 + $0x38] sm:$0xff]
  %v59 = vld [vmem:[%s2] sm:$0xff]
  %v60 = vld [vmem:[%s2 + $0x8] sm:$0xff]
  %v61 = vld [vmem:[%s2 + $0x10] sm:$0xff]
  %v62 = vld [vmem:[%s2 + $0x18] sm:$0xff]
  %v63 = vld [vmem:[%s2 + $0x20] sm:$0xff]
  %v64 = vld [vmem:[%s2 + $0x28] sm:$0xff]
  %v65 = vld [vmem:[%s2 + $0x30] sm:$0xff]
  %v66 = vld [vmem:[%s2 + $0x38] sm:$0xff]
  %v67 = vld [vmem:[%s2 + $0x40] sm:$0xff]
  %v68 = vld [vmem:[%s2 + $0x48] sm:$0xff]
  %v69 = vld [vmem:[%s2 + $0x50] sm:$0xff]
  %v70 = vld [vmem:[%s2 + $0x58] sm:$0xff]
  %v71 = vld [vmem:[%s2 + $0x60] sm:$0xff]
  %v72 = vld [vmem:[%s2 + $0x68] sm:$0xff]
  %v73 = vld [vmem:[%s2 + $0x70] sm:$0xff]
  %v74 = vld [vmem:[%s2 + $0x78] sm:$0xff]
  %v75 = vld [vmem:[%s2 + $0x80] sm:$0xff]
  %v76 = vld [vmem:[%s2 + $0x88] sm:$0xff]
  %v77 = vld [vmem:[%s2 + $0x90] sm:$0xff]
  %v78 = vld [vmem:[%s2 + $0x98] sm:$0xff]
  %v79 = vld [vmem:[%s2 + $0xa0] sm:$0xff]
  %v80 = vld [vmem:[%s2 + $0xa8] sm:$0xff]
  %v81 = vld [vmem:[%s2 + $0xb0] sm:$0xff]
  %v82 = vld [vmem:[%s2 + $0xb8] sm:$0xff]
  %v83 = vld [vmem:[%s2 + $0xc0] sm:$0xff]
  %v84 = vld [vmem:[%s2 + $0xc8] sm:$0xff]
  %v85 = vld [vmem:[%s2 + $0xd0] sm:$0xff]
  %v86 = vld [vmem:[%s2 + $0xd8] sm:$0xff]
  %v87 = vld [vmem:[%s2 + $0xe0] sm:$0xff]
  %v88 = vld [vmem:[%s2 + $0xe8] sm:$0xff]
  %v89 = vld [vmem:[%s2 + $0xf0] sm:$0xff]
  %v90 = vld [vmem:[%s2 + $0xf8] sm:$0xff]
  %v91 = vld [vmem:[%s2 + $0x100] sm:$0xff]
  %v92 = vld [vmem:[%s2 + $0x108] sm:$0xff]
  %v93 = vld [vmem:[%s2 + $0x110] sm:$0xff]
  %v94 = vld [vmem:[%s2 + $0x118] sm:$0xff]
  %v95 = vld [vmem:[%s2 + $0x120] sm:$0xff]
  %v96 = vld [vmem:[%s2 + $0x128] sm:$0xff]
  %v97 = vld [vmem:[%s2 + $0x130] sm:$0xff]
  %v98 = vld [vmem:[%s2 + $0x138] sm:$0xff]
  %v99 = vld [vmem:[%s2 + $0x140] sm:$0xff]
  %v100 = vld [vmem:[%s2 + $0x148] sm:$0xff]
  %v101 = vld [vmem:[%s2 + $0x150] sm:$0xff]
  %v102 = vld [vmem:[%s2 + $0x158] sm:$0xff]
  %v103 = vld [vmem:[%s2 + $0x160] sm:$0xff]
  %v104 = vld [vmem:[%s2 + $0x168] sm:$0xff]
  %v105 = vld [vmem:[%s2 + $0x170] sm:$0xff]
  %v106 = vld [vmem:[%s2 + $0x178] sm:$0xff]
  %v107 = vld [vmem:[%s2 + $0x180] sm:$0xff]
  %v108 = vld [vmem:[%s2 + $0x188] sm:$0xff]
  %v109 = vld [vmem:[%s2 + $0x190] sm:$0xff]
  %v110 = vld [vmem:[%s2 + $0x198] sm:$0xff]
  %v111 = vld [vmem:[%s2 + $0x1a0] sm:$0xff]
  %v112 = vld [vmem:[%s2 + $0x1a8] sm:$0xff]
  %v113 = vld [vmem:[%s2 + $0x1b0] sm:$0xff]
  %v114 = vld [vmem:[%s2 + $0x1b8] sm:$0xff]
  %v115 = vld [vmem:[%s2 + $0x1c0] sm:$0xff]
  %v116 = vld [vmem:[%s2 + $0x1c8] sm:$0xff]
  %v117 = vld [vmem:[%s2 + $0x1d0] sm:$0xff]
  %v118 = vld [vmem:[%s2 + $0x1d8] sm:$0xff]
  %v119 = vld [vmem:[%s2 + $0x1e0] sm:$0xff]
  %v120 = vld [vmem:[%s2 + $0x1e8] sm:$0xff]
  %v121 = vld [vmem:[%s2 + $0x1f0] sm:$0xff]
  %v122 = vld [vmem:[%s2 + $0x1f8] sm:$0xff]
  %v123 = vld [vmem:[%s2 + $0x200] sm:$0xff]
  %v124 = vld [vmem:[%s2 + $0x208] sm:$0xff]
  %v125 = vld [vmem:[%s2 + $0x210] sm:$0xff]
  %v126 = vld [vmem:[%s2 + $0x218] sm:$0xff]
  %v127 = vld [vmem:[%s2 + $0x220] sm:$0xff]
  %v128 = vld [vmem:[%s2 + $0x228] sm:$0xff]
  %v129 = vld [vmem:[%s2 + $0x230] sm:$0xff]
  %v130 = vld [vmem:[%s2 + $0x238] sm:$0xff]
  %v131 = vld [vmem:[%s2 + $0x240] sm:$0xff]
  %v132 = vld [vmem:[%s2 + $0x248] sm:$0xff]
  %v133 = vld [vmem:[%s2 + $0x250] sm:$0xff]
  %v134 = vld [vmem:[%s2 + $0x258] sm:$0xff]
  %v135 = vld [vmem:[%s2 + $0x260] sm:$0xff]
  %v136 = vld [vmem:[%s2 + $0x268] sm:$0xff]
  %v137 = vld [vmem:[%s2 + $0x270] sm:$0xff]
  %v138 = vld [vmem:[%s2 + $0x278] sm:$0xff]
  %v139 = vld [vmem:[%s2 + $0x280] sm:$0xff]
  %v140 = vld [vmem:[%s2 + $0x288] sm:$0xff]
  %v141 = vld [vmem:[%s2 + $0x290] sm:$0xff]
  %v142 = vld [vmem:[%s2 + $0x298] sm:$0xff]
  %v143 = vld [vmem:[%s2 + $0x2a0] sm:$0xff]
  %v144 = vld [vmem:[%s2 + $0x2a8] sm:$0xff]
  %v145 = vld [vmem:[%s2 + $0x2b0] sm:$0xff]
  %v146 = vld [vmem:[%s2 + $0x2b8] sm:$0xff]
  %v147 = vld [vmem:[%s2 + $0x2c0] sm:$0xff]
  %v148 = vld [vmem:[%s2 + $0x2c8] sm:$0xff]
  %v149 = vld [vmem:[%s2 + $0x2d0] sm:$0xff]
  %v150 = vld [vmem:[%s2 + $0x2d8] sm:$0xff]
  %v151 = vld [vmem:[%s2 + $0x2e0] sm:$0xff]
  %v152 = vld [vmem:[%s2 + $0x2e8] sm:$0xff]
  %v153 = vld [vmem:[%s2 + $0x2f0] sm:$0xff]
  %v154 = vld [vmem:[%s2 + $0x2f8] sm:$0xff]
  %v155 = vld [vmem:[%s2 + $0x300] sm:$0xff]
  %v156 = vld [vmem:[%s2 + $0x308] sm:$0xff]
  %v157 = vld [vmem:[%s2 + $0x310] sm:$0xff]
  %v158 = vld [vmem:[%s2 + $0x318] sm:$0xff]
  %v159 = vld [vmem:[%s2 + $0x320] sm:$0xff]
  %v160 = vld [vmem:[%s2 + $0x328] sm:$0xff]
  %v161 = vld [vmem:[%s2 + $0x330] sm:$0xff]
  %v162 = vld [vmem:[%s2 + $0x338] sm:$0xff]
  %v163 = vld [vmem:[%s2 + $0x340] sm:$0xff]
  %v164 = vld [vmem:[%s2 + $0x348] sm:$0xff]
  %v165 = vld [vmem:[%s2 + $0x350] sm:$0xff]
  %v166 = vld [vmem:[%s2 + $0x358] sm:$0xff]
  %v167 = vld [vmem:[%s2 + $0x360] sm:$0xff]
  %v168 = vld [vmem:[%s2 + $0x368] sm:$0xff]
  %v169 = vld [vmem:[%s2 + $0x370] sm:$0xff]
  %v170 = vld [vmem:[%s2 + $0x378] sm:$0xff]
  %v171 = vld [vmem:[%s2 + $0x380] sm:$0xff]
  %v172 = vld [vmem:[%s2 + $0x388] sm:$0xff]
  %v173 = vld [vmem:[%s2 + $0x390] sm:$0xff]
  %v174 = vld [vmem:[%s2 + $0x398] sm:$0xff]
  %v175 = vld [vmem:[%s2 + $0x3a0] sm:$0xff]
  %v176 = vld [vmem:[%s2 + $0x3a8] sm:$0xff]
  %v177 = vld [vmem:[%s2 + $0x3b0] sm:$0xff]
  %v178 = vld [vmem:[%s2 + $0x3b8] sm:$0xff]
  %v179 = vld [vmem:[%s2 + $0x3c0] sm:$0xff]
  %v180 = vld [vmem:[%s2 + $0x3c8] sm:$0xff]
  %v181 = vld [vmem:[%s2 + $0x3d0] sm:$0xff]
  %v182 = vld [vmem:[%s2 + $0x3d8] sm:$0xff]
  %v183 = vld [vmem:[%s2 + $0x3e0] sm:$0xff]
  %v184 = vld [vmem:[%s2 + $0x3e8] sm:$0xff]
  %v185 = vld [vmem:[%s2 + $0x3f0] sm:$0xff]
  %v186 = vld [vmem:[%s2 + $0x3f8] sm:$0xff]
  %v187 = vld [vmem:[%s4] sm:$0xff]
  %v189 = vlaneseq
  %v190 = vshrl.u32 %v189, 7
  %v191 = vsub.s32 0, %v190
  %v192 = vrot.slane %v187, %v191
  %v193 = vlaneseq
  %v194 = vshrl.u32 %v193, 7
  %v195 = vsub.s32 1, %v194
  %v196 = vrot.slane %v187, %v195
  %v197 = vlaneseq
  %v198 = vshrl.u32 %v197, 7
  %v199 = vsub.s32 2, %v198
  %v200 = vrot.slane %v187, %v199
  %v201 = vlaneseq
  %v202 = vshrl.u32 %v201, 7
  %v203 = vsub.s32 3, %v202
  %v204 = vrot.slane %v187, %v203
  %v205 = vlaneseq
  %v206 = vshrl.u32 %v205, 7
  %v207 = vsub.s32 4, %v206
  %v208 = vrot.slane %v187, %v207
  %v209 = vlaneseq
  %v210 = vshrl.u32 %v209, 7
  %v211 = vsub.s32 5, %v210
  %v212 = vrot.slane %v187, %v211
  %v213 = vlaneseq
  %v214 = vshrl.u32 %v213, 7
  %v215 = vsub.s32 6, %v214
  %v216 = vrot.slane %v187, %v215
  %v217 = vlaneseq
  %v218 = vshrl.u32 %v217, 7
  %v219 = vsub.s32 7, %v218
  %v220 = vrot.slane %v187, %v219
  %v237 = vunpack.c.l.b16 %v51
  %v238 = vunpack.c.h.b16 %v51
  %v239 = vunpack.c.l.b16 %v52
  %v240 = vunpack.c.h.b16 %v52
  %v241 = vunpack.c.l.b16 %v53
  %v242 = vunpack.c.h.b16 %v53
  %v243 = vunpack.c.l.b16 %v54
  %v244 = vunpack.c.h.b16 %v54
  %v245 = vunpack.c.l.b16 %v55
  %v246 = vunpack.c.h.b16 %v55
  %v247 = vunpack.c.l.b16 %v56
  %v248 = vunpack.c.h.b16 %v56
  %v249 = vunpack.c.l.b16 %v57
  %v250 = vunpack.c.h.b16 %v57
  %v251 = vunpack.c.l.b16 %v58
  %v252 = vunpack.c.h.b16 %v58
  %v253 = vpack.c.b16 %v239, %v237
  %v254 = vpack.c.b16 %v240, %v238
  %v255 = vpack.c.b16 %v243, %v241
  %v256 = vpack.c.b16 %v244, %v242
  %v257 = vpack.c.b16 %v247, %v245
  %v258 = vpack.c.b16 %v248, %v246
  %v259 = vpack.c.b16 %v251, %v249
  %v260 = vpack.c.b16 %v252, %v250
  %v397 = vunpack.c.l.b16 %v59
  %v398 = vunpack.c.h.b16 %v59
  %v399 = vunpack.c.l.b16 %v60
  %v400 = vunpack.c.h.b16 %v60
  %v401 = vunpack.c.l.b16 %v61
  %v402 = vunpack.c.h.b16 %v61
  %v403 = vunpack.c.l.b16 %v62
  %v404 = vunpack.c.h.b16 %v62
  %v405 = vunpack.c.l.b16 %v63
  %v406 = vunpack.c.h.b16 %v63
  %v407 = vunpack.c.l.b16 %v64
  %v408 = vunpack.c.h.b16 %v64
  %v409 = vunpack.c.l.b16 %v65
  %v410 = vunpack.c.h.b16 %v65
  %v411 = vunpack.c.l.b16 %v66
  %v412 = vunpack.c.h.b16 %v66
  %v413 = vunpack.c.l.b16 %v67
  %v414 = vunpack.c.h.b16 %v67
  %v415 = vunpack.c.l.b16 %v68
  %v416 = vunpack.c.h.b16 %v68
  %v417 = vunpack.c.l.b16 %v69
  %v418 = vunpack.c.h.b16 %v69
  %v419 = vunpack.c.l.b16 %v70
  %v420 = vunpack.c.h.b16 %v70
  %v421 = vunpack.c.l.b16 %v71
  %v422 = vunpack.c.h.b16 %v71
  %v423 = vunpack.c.l.b16 %v72
  %v424 = vunpack.c.h.b16 %v72
  %v425 = vunpack.c.l.b16 %v73
  %v426 = vunpack.c.h.b16 %v73
  %v427 = vunpack.c.l.b16 %v74
  %v428 = vunpack.c.h.b16 %v74
  %v429 = vunpack.c.l.b16 %v75
  %v430 = vunpack.c.h.b16 %v75
  %v431 = vunpack.c.l.b16 %v76
  %v432 = vunpack.c.h.b16 %v76
  %v433 = vunpack.c.l.b16 %v77
  %v434 = vunpack.c.h.b16 %v77
  %v435 = vunpack.c.l.b16 %v78
  %v436 = vunpack.c.h.b16 %v78
  %v437 = vunpack.c.l.b16 %v79
  %v438 = vunpack.c.h.b16 %v79
  %v439 = vunpack.c.l.b16 %v80
  %v440 = vunpack.c.h.b16 %v80
  %v441 = vunpack.c.l.b16 %v81
  %v442 = vunpack.c.h.b16 %v81
  %v443 = vunpack.c.l.b16 %v82
  %v444 = vunpack.c.h.b16 %v82
  %v445 = vunpack.c.l.b16 %v83
  %v446 = vunpack.c.h.b16 %v83
  %v447 = vunpack.c.l.b16 %v84
  %v448 = vunpack.c.h.b16 %v84
  %v449 = vunpack.c.l.b16 %v85
  %v450 = vunpack.c.h.b16 %v85
  %v451 = vunpack.c.l.b16 %v86
  %v452 = vunpack.c.h.b16 %v86
  %v453 = vunpack.c.l.b16 %v87
  %v454 = vunpack.c.h.b16 %v87
  %v455 = vunpack.c.l.b16 %v88
  %v456 = vunpack.c.h.b16 %v88
  %v457 = vunpack.c.l.b16 %v89
  %v458 = vunpack.c.h.b16 %v89
  %v459 = vunpack.c.l.b16 %v90
  %v460 = vunpack.c.h.b16 %v90
  %v461 = vunpack.c.l.b16 %v91
  %v462 = vunpack.c.h.b16 %v91
  %v463 = vunpack.c.l.b16 %v92
  %v464 = vunpack.c.h.b16 %v92
  %v465 = vunpack.c.l.b16 %v93
  %v466 = vunpack.c.h.b16 %v93
  %v467 = vunpack.c.l.b16 %v94
  %v468 = vunpack.c.h.b16 %v94
  %v469 = vunpack.c.l.b16 %v95
  %v470 = vunpack.c.h.b16 %v95
  %v471 = vunpack.c.l.b16 %v96
  %v472 = vunpack.c.h.b16 %v96
  %v473 = vunpack.c.l.b16 %v97
  %v474 = vunpack.c.h.b16 %v97
  %v475 = vunpack.c.l.b16 %v98
  %v476 = vunpack.c.h.b16 %v98
  %v477 = vunpack.c.l.b16 %v99
  %v478 = vunpack.c.h.b16 %v99
  %v479 = vunpack.c.l.b16 %v100
  %v480 = vunpack.c.h.b16 %v100
  %v481 = vunpack.c.l.b16 %v101
  %v482 = vunpack.c.h.b16 %v101
  %v483 = vunpack.c.l.b16 %v102
  %v484 = vunpack.c.h.b16 %v102
  %v485 = vunpack.c.l.b16 %v103
  %v486 = vunpack.c.h.b16 %v103
  %v487 = vunpack.c.l.b16 %v104
  %v488 = vunpack.c.h.b16 %v104
  %v489 = vunpack.c.l.b16 %v105
  %v490 = vunpack.c.h.b16 %v105
  %v491 = vunpack.c.l.b16 %v106
  %v492 = vunpack.c.h.b16 %v106
  %v493 = vunpack.c.l.b16 %v107
  %v494 = vunpack.c.h.b16 %v107
  %v495 = vunpack.c.l.b16 %v108
  %v496 = vunpack.c.h.b16 %v108
  %v497 = vunpack.c.l.b16 %v109
  %v498 = vunpack.c.h.b16 %v109
  %v499 = vunpack.c.l.b16 %v110
  %v500 = vunpack.c.h.b16 %v110
  %v501 = vunpack.c.l.b16 %v111
  %v502 = vunpack.c.h.b16 %v111
  %v503 = vunpack.c.l.b16 %v112
  %v504 = vunpack.c.h.b16 %v112
  %v505 = vunpack.c.l.b16 %v113
  %v506 = vunpack.c.h.b16 %v113
  %v507 = vunpack.c.l.b16 %v114
  %v508 = vunpack.c.h.b16 %v114
  %v509 = vunpack.c.l.b16 %v115
  %v510 = vunpack.c.h.b16 %v115
  %v511 = vunpack.c.l.b16 %v116
  %v512 = vunpack.c.h.b16 %v116
  %v513 = vunpack.c.l.b16 %v117
  %v514 = vunpack.c.h.b16 %v117
  %v515 = vunpack.c.l.b16 %v118
  %v516 = vunpack.c.h.b16 %v118
  %v517 = vunpack.c.l.b16 %v119
  %v518 = vunpack.c.h.b16 %v119
  %v519 = vunpack.c.l.b16 %v120
  %v520 = vunpack.c.h.b16 %v120
  %v521 = vunpack.c.l.b16 %v121
  %v522 = vunpack.c.h.b16 %v121
  %v523 = vunpack.c.l.b16 %v122
  %v524 = vunpack.c.h.b16 %v122
  %v525 = vunpack.c.l.b16 %v123
  %v526 = vunpack.c.h.b16 %v123
  %v527 = vunpack.c.l.b16 %v124
  %v528 = vunpack.c.h.b16 %v124
  %v529 = vunpack.c.l.b16 %v125
  %v530 = vunpack.c.h.b16 %v125
  %v531 = vunpack.c.l.b16 %v126
  %v532 = vunpack.c.h.b16 %v126
  %v533 = vunpack.c.l.b16 %v127
  %v534 = vunpack.c.h.b16 %v127
  %v535 = vunpack.c.l.b16 %v128
  %v536 = vunpack.c.h.b16 %v128
  %v537 = vunpack.c.l.b16 %v129
  %v538 = vunpack.c.h.b16 %v129
  %v539 = vunpack.c.l.b16 %v130
  %v540 = vunpack.c.h.b16 %v130
  %v541 = vunpack.c.l.b16 %v131
  %v542 = vunpack.c.h.b16 %v131
  %v543 = vunpack.c.l.b16 %v132
  %v544 = vunpack.c.h.b16 %v132
  %v545 = vunpack.c.l.b16 %v133
  %v546 = vunpack.c.h.b16 %v133
  %v547 = vunpack.c.l.b16 %v134
  %v548 = vunpack.c.h.b16 %v134
  %v549 = vunpack.c.l.b16 %v135
  %v550 = vunpack.c.h.b16 %v135
  %v551 = vunpack.c.l.b16 %v136
  %v552 = vunpack.c.h.b16 %v136
  %v553 = vunpack.c.l.b16 %v137
  %v554 = vunpack.c.h.b16 %v137
  %v555 = vunpack.c.l.b16 %v138
  %v556 = vunpack.c.h.b16 %v138
  %v557 = vunpack.c.l.b16 %v139
  %v558 = vunpack.c.h.b16 %v139
  %v559 = vunpack.c.l.b16 %v140
  %v560 = vunpack.c.h.b16 %v140
  %v561 = vunpack.c.l.b16 %v141
  %v562 = vunpack.c.h.b16 %v141
  %v563 = vunpack.c.l.b16 %v142
  %v564 = vunpack.c.h.b16 %v142
  %v565 = vunpack.c.l.b16 %v143
  %v566 = vunpack.c.h.b16 %v143
  %v567 = vunpack.c.l.b16 %v144
  %v568 = vunpack.c.h.b16 %v144
  %v569 = vunpack.c.l.b16 %v145
  %v570 = vunpack.c.h.b16 %v145
  %v571 = vunpack.c.l.b16 %v146
  %v572 = vunpack.c.h.b16 %v146
  %v573 = vunpack.c.l.b16 %v147
  %v574 = vunpack.c.h.b16 %v147
  %v575 = vunpack.c.l.b16 %v148
  %v576 = vunpack.c.h.b16 %v148
  %v577 = vunpack.c.l.b16 %v149
  %v578 = vunpack.c.h.b16 %v149
  %v579 = vunpack.c.l.b16 %v150
  %v580 = vunpack.c.h.b16 %v150
  %v581 = vunpack.c.l.b16 %v151
  %v582 = vunpack.c.h.b16 %v151
  %v583 = vunpack.c.l.b16 %v152
  %v584 = vunpack.c.h.b16 %v152
  %v585 = vunpack.c.l.b16 %v153
  %v586 = vunpack.c.h.b16 %v153
  %v587 = vunpack.c.l.b16 %v154
  %v588 = vunpack.c.h.b16 %v154
  %v589 = vunpack.c.l.b16 %v155
  %v590 = vunpack.c.h.b16 %v155
  %v591 = vunpack.c.l.b16 %v156
  %v592 = vunpack.c.h.b16 %v156
  %v593 = vunpack.c.l.b16 %v157
  %v594 = vunpack.c.h.b16 %v157
  %v595 = vunpack.c.l.b16 %v158
  %v596 = vunpack.c.h.b16 %v158
  %v597 = vunpack.c.l.b16 %v159
  %v598 = vunpack.c.h.b16 %v159
  %v599 = vunpack.c.l.b16 %v160
  %v600 = vunpack.c.h.b16 %v160
  %v601 = vunpack.c.l.b16 %v161
  %v602 = vunpack.c.h.b16 %v161
  %v603 = vunpack.c.l.b16 %v162
  %v604 = vunpack.c.h.b16 %v162
  %v605 = vunpack.c.l.b16 %v163
  %v606 = vunpack.c.h.b16 %v163
  %v607 = vunpack.c.l.b16 %v164
  %v608 = vunpack.c.h.b16 %v164
  %v609 = vunpack.c.l.b16 %v165
  %v610 = vunpack.c.h.b16 %v165
  %v611 = vunpack.c.l.b16 %v166
  %v612 = vunpack.c.h.b16 %v166
  %v613 = vunpack.c.l.b16 %v167
  %v614 = vunpack.c.h.b16 %v167
  %v615 = vunpack.c.l.b16 %v168
  %v616 = vunpack.c.h.b16 %v168
  %v617 = vunpack.c.l.b16 %v169
  %v618 = vunpack.c.h.b16 %v169
  %v619 = vunpack.c.l.b16 %v170
  %v620 = vunpack.c.h.b16 %v170
  %v621 = vunpack.c.l.b16 %v171
  %v622 = vunpack.c.h.b16 %v171
  %v623 = vunpack.c.l.b16 %v172
  %v624 = vunpack.c.h.b16 %v172
  %v625 = vunpack.c.l.b16 %v173
  %v626 = vunpack.c.h.b16 %v173
  %v627 = vunpack.c.l.b16 %v174
  %v628 = vunpack.c.h.b16 %v174
  %v629 = vunpack.c.l.b16 %v175
  %v630 = vunpack.c.h.b16 %v175
  %v631 = vunpack.c.l.b16 %v176
  %v632 = vunpack.c.h.b16 %v176
  %v633 = vunpack.c.l.b16 %v177
  %v634 = vunpack.c.h.b16 %v177
  %v635 = vunpack.c.l.b16 %v178
  %v636 = vunpack.c.h.b16 %v178
  %v637 = vunpack.c.l.b16 %v179
  %v638 = vunpack.c.h.b16 %v179
  %v639 = vunpack.c.l.b16 %v180
  %v640 = vunpack.c.h.b16 %v180
  %v641 = vunpack.c.l.b16 %v181
  %v642 = vunpack.c.h.b16 %v181
  %v643 = vunpack.c.l.b16 %v182
  %v644 = vunpack.c.h.b16 %v182
  %v645 = vunpack.c.l.b16 %v183
  %v646 = vunpack.c.h.b16 %v183
  %v647 = vunpack.c.l.b16 %v184
  %v648 = vunpack.c.h.b16 %v184
  %v649 = vunpack.c.l.b16 %v185
  %v650 = vunpack.c.h.b16 %v185
  %v651 = vunpack.c.l.b16 %v186
  %v652 = vunpack.c.h.b16 %v186
  %v653 = vpack.c.b16 %v405, %v397
  %v654 = vpack.c.b16 %v406, %v398
  %v655 = vpack.c.b16 %v407, %v399
  %v656 = vpack.c.b16 %v408, %v400
  %v657 = vpack.c.b16 %v409, %v401
  %v658 = vpack.c.b16 %v410, %v402
  %v659 = vpack.c.b16 %v411, %v403
  %v660 = vpack.c.b16 %v412, %v404
  %v661 = vpack.c.b16 %v421, %v413
  %v662 = vpack.c.b16 %v422, %v414
  %v663 = vpack.c.b16 %v423, %v415
  %v664 = vpack.c.b16 %v424, %v416
  %v665 = vpack.c.b16 %v425, %v417
  %v666 = vpack.c.b16 %v426, %v418
  %v667 = vpack.c.b16 %v427, %v419
  %v668 = vpack.c.b16 %v428, %v420
  %v669 = vpack.c.b16 %v437, %v429
  %v670 = vpack.c.b16 %v438, %v430
  %v671 = vpack.c.b16 %v439, %v431
  %v672 = vpack.c.b16 %v440, %v432
  %v673 = vpack.c.b16 %v441, %v433
  %v674 = vpack.c.b16 %v442, %v434
  %v675 = vpack.c.b16 %v443, %v435
  %v676 = vpack.c.b16 %v444, %v436
  %v677 = vpack.c.b16 %v453, %v445
  %v678 = vpack.c.b16 %v454, %v446
  %v679 = vpack.c.b16 %v455, %v447
  %v680 = vpack.c.b16 %v456, %v448
  %v681 = vpack.c.b16 %v457, %v449
  %v682 = vpack.c.b16 %v458, %v450
  %v683 = vpack.c.b16 %v459, %v451
  %v684 = vpack.c.b16 %v460, %v452
  %v685 = vpack.c.b16 %v469, %v461
  %v686 = vpack.c.b16 %v470, %v462
  %v687 = vpack.c.b16 %v471, %v463
  %v688 = vpack.c.b16 %v472, %v464
  %v689 = vpack.c.b16 %v473, %v465
  %v690 = vpack.c.b16 %v474, %v466
  %v691 = vpack.c.b16 %v475, %v467
  %v692 = vpack.c.b16 %v476, %v468
  %v693 = vpack.c.b16 %v485, %v477
  %v694 = vpack.c.b16 %v486, %v478
  %v695 = vpack.c.b16 %v487, %v479
  %v696 = vpack.c.b16 %v488, %v480
  %v697 = vpack.c.b16 %v489, %v481
  %v698 = vpack.c.b16 %v490, %v482
  %v699 = vpack.c.b16 %v491, %v483
  %v700 = vpack.c.b16 %v492, %v484
  %v701 = vpack.c.b16 %v501, %v493
  %v702 = vpack.c.b16 %v502, %v494
  %v703 = vpack.c.b16 %v503, %v495
  %v704 = vpack.c.b16 %v504, %v496
  %v705 = vpack.c.b16 %v505, %v497
  %v706 = vpack.c.b16 %v506, %v498
  %v707 = vpack.c.b16 %v507, %v499
  %v708 = vpack.c.b16 %v508, %v500
  %v709 = vpack.c.b16 %v517, %v509
  %v710 = vpack.c.b16 %v518, %v510
  %v711 = vpack.c.b16 %v519, %v511
  %v712 = vpack.c.b16 %v520, %v512
  %v713 = vpack.c.b16 %v521, %v513
  %v714 = vpack.c.b16 %v522, %v514
  %v715 = vpack.c.b16 %v523, %v515
  %v716 = vpack.c.b16 %v524, %v516
  %v717 = vpack.c.b16 %v533, %v525
  %v718 = vpack.c.b16 %v534, %v526
  %v719 = vpack.c.b16 %v535, %v527
  %v720 = vpack.c.b16 %v536, %v528
  %v721 = vpack.c.b16 %v537, %v529
  %v722 = vpack.c.b16 %v538, %v530
  %v723 = vpack.c.b16 %v539, %v531
  %v724 = vpack.c.b16 %v540, %v532
  %v725 = vpack.c.b16 %v549, %v541
  %v726 = vpack.c.b16 %v550, %v542
  %v727 = vpack.c.b16 %v551, %v543
  %v728 = vpack.c.b16 %v552, %v544
  %v729 = vpack.c.b16 %v553, %v545
  %v730 = vpack.c.b16 %v554, %v546
  %v731 = vpack.c.b16 %v555, %v547
  %v732 = vpack.c.b16 %v556, %v548
  %v733 = vpack.c.b16 %v565, %v557
  %v734 = vpack.c.b16 %v566, %v558
  %v735 = vpack.c.b16 %v567, %v559
  %v736 = vpack.c.b16 %v568, %v560
  %v737 = vpack.c.b16 %v569, %v561
  %v738 = vpack.c.b16 %v570, %v562
  %v739 = vpack.c.b16 %v571, %v563
  %v740 = vpack.c.b16 %v572, %v564
  %v741 = vpack.c.b16 %v581, %v573
  %v742 = vpack.c.b16 %v582, %v574
  %v743 = vpack.c.b16 %v583, %v575
  %v744 = vpack.c.b16 %v584, %v576
  %v745 = vpack.c.b16 %v585, %v577
  %v746 = vpack.c.b16 %v586, %v578
  %v747 = vpack.c.b16 %v587, %v579
  %v748 = vpack.c.b16 %v588, %v580
  %v749 = vpack.c.b16 %v597, %v589
  %v750 = vpack.c.b16 %v598, %v590
  %v751 = vpack.c.b16 %v599, %v591
  %v752 = vpack.c.b16 %v600, %v592
  %v753 = vpack.c.b16 %v601, %v593
  %v754 = vpack.c.b16 %v602, %v594
  %v755 = vpack.c.b16 %v603, %v595
  %v756 = vpack.c.b16 %v604, %v596
  %v757 = vpack.c.b16 %v613, %v605
  %v758 = vpack.c.b16 %v614, %v606
  %v759 = vpack.c.b16 %v615, %v607
  %v760 = vpack.c.b16 %v616, %v608
  %v761 = vpack.c.b16 %v617, %v609
  %v762 = vpack.c.b16 %v618, %v610
  %v763 = vpack.c.b16 %v619, %v611
  %v764 = vpack.c.b16 %v620, %v612
  %v765 = vpack.c.b16 %v629, %v621
  %v766 = vpack.c.b16 %v630, %v622
  %v767 = vpack.c.b16 %v631, %v623
  %v768 = vpack.c.b16 %v632, %v624
  %v769 = vpack.c.b16 %v633, %v625
  %v770 = vpack.c.b16 %v634, %v626
  %v771 = vpack.c.b16 %v635, %v627
  %v772 = vpack.c.b16 %v636, %v628
  %v773 = vpack.c.b16 %v645, %v637
  %v774 = vpack.c.b16 %v646, %v638
  %v775 = vpack.c.b16 %v647, %v639
  %v776 = vpack.c.b16 %v648, %v640
  %v777 = vpack.c.b16 %v649, %v641
  %v778 = vpack.c.b16 %v650, %v642
  %v779 = vpack.c.b16 %v651, %v643
  %v780 = vpack.c.b16 %v652, %v644
  %909 = vmatprep.subr.bf16.mxu0 %v654
  %910 = vmatpush1.bf16.msra.mxu0 %v653
  %911 = vmatprep.subr.bf16.mxu0 %v662
  %912 = vmatpush1.bf16.msra.mxu0 %v661
  %913 = vmatprep.subr.bf16.mxu0 %v670
  %914 = vmatpush1.bf16.msra.mxu0 %v669
  %915 = vmatprep.subr.bf16.mxu0 %v678
  %916 = vmatpush1.bf16.msra.mxu0 %v677
  %917 = vmatprep.subr.bf16.mxu0 %v686
  %918 = vmatpush1.bf16.msra.mxu0 %v685
  %919 = vmatprep.subr.bf16.mxu0 %v694
  %920 = vmatpush1.bf16.msra.mxu0 %v693
  %921 = vmatprep.subr.bf16.mxu0 %v702
  %922 = vmatpush1.bf16.msra.mxu0 %v701
  %923 = vmatprep.subr.bf16.mxu0 %v710
  %924 = vmatpush1.bf16.msra.mxu0 %v709
  %925 = vmatprep.subr.bf16.mxu0 %v718
  %926 = vmatpush1.bf16.msra.mxu0 %v717
  %927 = vmatprep.subr.bf16.mxu0 %v726
  %928 = vmatpush1.bf16.msra.mxu0 %v725
  %929 = vmatprep.subr.bf16.mxu0 %v734
  %930 = vmatpush1.bf16.msra.mxu0 %v733
  %931 = vmatprep.subr.bf16.mxu0 %v742
  %932 = vmatpush1.bf16.msra.mxu0 %v741
  %933 = vmatprep.subr.bf16.mxu0 %v750
  %934 = vmatpush1.bf16.msra.mxu0 %v749
  %935 = vmatprep.subr.bf16.mxu0 %v758
  %936 = vmatpush1.bf16.msra.mxu0 %v757
  %937 = vmatprep.subr.bf16.mxu0 %v766
  %938 = vmatpush1.bf16.msra.mxu0 %v765
  %939 = vmatprep.subr.bf16.mxu0 %v774
  %940 = vmatpush1.bf16.msra.mxu0 %v773
  %941 = vmatprep.mubr.bf16.mxu0 %v254
  %942 = vmatmul.mubr.bf16.gmra.mrb[0].mxu0 %v253
  %v943 = vpop.f32.mrb[0].mxu0
  %v944 = vadd.f32 %v192, %v943
  %v945 = vpop.f32.mrb[0].mxu0
  %v946 = vadd.f32 %v196, %v945
  %v947 = vpop.f32.mrb[0].mxu0
  %v948 = vadd.f32 %v192, %v947
  %v949 = vpop.f32.mrb[0].mxu0
  %v950 = vadd.f32 %v196, %v949
  %951 = vmatprep.mubr.bf16.mxu0 %v256
  %952 = vmatmul.mubr.bf16.gmra.mrb[0].mxu0 %v255
  %v953 = vpop.f32.mrb[0].mxu0
  %v954 = vadd.f32 %v192, %v953
  %v955 = vpop.f32.mrb[0].mxu0
  %v956 = vadd.f32 %v196, %v955
  %v957 = vpop.f32.mrb[0].mxu0
  %v958 = vadd.f32 %v192, %v957
  %v959 = vpop.f32.mrb[0].mxu0
  %v960 = vadd.f32 %v196, %v959
  %961 = vmatprep.mubr.bf16.mxu0 %v258
  %962 = vmatmul.mubr.bf16.gmra.mrb[0].mxu0 %v257
  %v963 = vpop.f32.mrb[0].mxu0
  %v964 = vadd.f32 %v192, %v963
  %v965 = vpop.f32.mrb[0].mxu0
  %v966 = vadd.f32 %v196, %v965
  %v967 = vpop.f32.mrb[0].mxu0
  %v968 = vadd.f32 %v192, %v967
  %v969 = vpop.f32.mrb[0].mxu0
  %v970 = vadd.f32 %v196, %v969
  %971 = vmatprep.mubr.bf16.mxu0 %v260
  %972 = vmatmul.mubr.bf16.gmra.mrb[0].mxu0 %v259
  %v973 = vpop.f32.mrb[0].mxu0
  %v974 = vadd.f32 %v192, %v973
  %v975 = vpop.f32.mrb[0].mxu0
  %v976 = vadd.f32 %v196, %v975
  %v977 = vpop.f32.mrb[0].mxu0
  %v978 = vadd.f32 %v192, %v977
  %v979 = vpop.f32.mrb[0].mxu0
  %v980 = vadd.f32 %v196, %v979
  %981 = vdwg.mxu0
  %982 = vmatprep.subr.bf16.mxu0 %v656
  %983 = vmatpush1.bf16.msra.mxu0 %v655
  %984 = vmatprep.subr.bf16.mxu0 %v664
  %985 = vmatpush1.bf16.msra.mxu0 %v663
  %986 = vmatprep.subr.bf16.mxu0 %v672
  %987 = vmatpush1.bf16.msra.mxu0 %v671
  %988 = vmatprep.subr.bf16.mxu0 %v680
  %989 = vmatpush1.bf16.msra.mxu0 %v679
  %990 = vmatprep.subr.bf16.mxu0 %v688
  %991 = vmatpush1.bf16.msra.mxu0 %v687
  %992 = vmatprep.subr.bf16.mxu0 %v696
  %993 = vmatpush1.bf16.msra.mxu0 %v695
  %994 = vmatprep.subr.bf16.mxu0 %v704
  %995 = vmatpush1.bf16.msra.mxu0 %v703
  %996 = vmatprep.subr.bf16.mxu0 %v712
  %997 = vmatpush1.bf16.msra.mxu0 %v711
  %998 = vmatprep.subr.bf16.mxu0 %v720
  %999 = vmatpush1.bf16.msra.mxu0 %v719
  %1000 = vmatprep.subr.bf16.mxu0 %v728
  %1001 = vmatpush1.bf16.msra.mxu0 %v727
  %1002 = vmatprep.subr.bf16.mxu0 %v736
  %1003 = vmatpush1.bf16.msra.mxu0 %v735
  %1004 = vmatprep.subr.bf16.mxu0 %v744
  %1005 = vmatpush1.bf16.msra.mxu0 %v743
  %1006 = vmatprep.subr.bf16.mxu0 %v752
  %1007 = vmatpush1.bf16.msra.mxu0 %v751
  %1008 = vmatprep.subr.bf16.mxu0 %v760
  %1009 = vmatpush1.bf16.msra.mxu0 %v759
  %1010 = vmatprep.subr.bf16.mxu0 %v768
  %1011 = vmatpush1.bf16.msra.mxu0 %v767
  %1012 = vmatprep.subr.bf16.mxu0 %v776
  %1013 = vmatpush1.bf16.msra.mxu0 %v775
  %1014 = vmatprep.mubr.bf16.mxu0 %v254
  %1015 = vmatmul.mubr.bf16.gmra.mrb[0].mxu0 %v253
  %v1016 = vpop.f32.mrb[0].mxu0
  %v1017 = vadd.f32 %v200, %v1016
  %v1018 = vpop.f32.mrb[0].mxu0
  %v1019 = vadd.f32 %v204, %v1018
  %v1020 = vpop.f32.mrb[0].mxu0
  %v1021 = vadd.f32 %v200, %v1020
  %v1022 = vpop.f32.mrb[0].mxu0
  %v1023 = vadd.f32 %v204, %v1022
  %1024 = vmatprep.mubr.bf16.mxu0 %v256
  %1025 = vmatmul.mubr.bf16.gmra.mrb[0].mxu0 %v255
  %v1026 = vpop.f32.mrb[0].mxu0
  %v1027 = vadd.f32 %v200, %v1026
  %v1028 = vpop.f32.mrb[0].mxu0
  %v1029 = vadd.f32 %v204, %v1028
  %v1030 = vpop.f32.mrb[0].mxu0
  %v1031 = vadd.f32 %v200, %v1030
  %v1032 = vpop.f32.mrb[0].mxu0
  %v1033 = vadd.f32 %v204, %v1032
  %1034 = vmatprep.mubr.bf16.mxu0 %v258
  %1035 = vmatmul.mubr.bf16.gmra.mrb[0].mxu0 %v257
  %v1036 = vpop.f32.mrb[0].mxu0
  %v1037 = vadd.f32 %v200, %v1036
  %v1038 = vpop.f32.mrb[0].mxu0
  %v1039 = vadd.f32 %v204, %v1038
  %v1040 = vpop.f32.mrb[0].mxu0
  %v1041 = vadd.f32 %v200, %v1040
  %v1042 = vpop.f32.mrb[0].mxu0
  %v1043 = vadd.f32 %v204, %v1042
  %1044 = vmatprep.mubr.bf16.mxu0 %v260
  %1045 = vmatmul.mubr.bf16.gmra.mrb[0].mxu0 %v259
  %v1046 = vpop.f32.mrb[0].mxu0
  %v1047 = vadd.f32 %v200, %v1046
  %v1048 = vpop.f32.mrb[0].mxu0
  %v1049 = vadd.f32 %v204, %v1048
  %v1050 = vpop.f32.mrb[0].mxu0
  %v1051 = vadd.f32 %v200, %v1050
  %v1052 = vpop.f32.mrb[0].mxu0
  %v1053 = vadd.f32 %v204, %v1052
  %1054 = vdwg.mxu0
  %1055 = vmatprep.subr.bf16.mxu0 %v658
  %1056 = vmatpush1.bf16.msra.mxu0 %v657
  %1057 = vmatprep.subr.bf16.mxu0 %v666
  %1058 = vmatpush1.bf16.msra.mxu0 %v665
  %1059 = vmatprep.subr.bf16.mxu0 %v674
  %1060 = vmatpush1.bf16.msra.mxu0 %v673
  %1061 = vmatprep.subr.bf16.mxu0 %v682
  %1062 = vmatpush1.bf16.msra.mxu0 %v681
  %1063 = vmatprep.subr.bf16.mxu0 %v690
  %1064 = vmatpush1.bf16.msra.mxu0 %v689
  %1065 = vmatprep.subr.bf16.mxu0 %v698
  %1066 = vmatpush1.bf16.msra.mxu0 %v697
  %1067 = vmatprep.subr.bf16.mxu0 %v706
  %1068 = vmatpush1.bf16.msra.mxu0 %v705
  %1069 = vmatprep.subr.bf16.mxu0 %v714
  %1070 = vmatpush1.bf16.msra.mxu0 %v713
  %1071 = vmatprep.subr.bf16.mxu0 %v722
  %1072 = vmatpush1.bf16.msra.mxu0 %v721
  %1073 = vmatprep.subr.bf16.mxu0 %v730
  %1074 = vmatpush1.bf16.msra.mxu0 %v729
  %1075 = vmatprep.subr.bf16.mxu0 %v738
  %1076 = vmatpush1.bf16.msra.mxu0 %v737
  %1077 = vmatprep.subr.bf16.mxu0 %v746
  %1078 = vmatpush1.bf16.msra.mxu0 %v745
  %1079 = vmatprep.subr.bf16.mxu0 %v754
  %1080 = vmatpush1.bf16.msra.mxu0 %v753
  %1081 = vmatprep.subr.bf16.mxu0 %v762
  %1082 = vmatpush1.bf16.msra.mxu0 %v761
  %1083 = vmatprep.subr.bf16.mxu0 %v770
  %1084 = vmatpush1.bf16.msra.mxu0 %v769
  %1085 = vmatprep.subr.bf16.mxu0 %v778
  %1086 = vmatpush1.bf16.msra.mxu0 %v777
  %1087 = vmatprep.mubr.bf16.mxu0 %v254
  %1088 = vmatmul.mubr.bf16.gmra.mrb[0].mxu0 %v253
  %v1089 = vpop.f32.mrb[0].mxu0
  %v1090 = vadd.f32 %v208, %v1089
  %v1091 = vpop.f32.mrb[0].mxu0
  %v1092 = vadd.f32 %v212, %v1091
  %v1093 = vpop.f32.mrb[0].mxu0
  %v1094 = vadd.f32 %v208, %v1093
  %v1095 = vpop.f32.mrb[0].mxu0
  %v1096 = vadd.f32 %v212, %v1095
  %1097 = vmatprep.mubr.bf16.mxu0 %v256
  %1098 = vmatmul.mubr.bf16.gmra.mrb[0].mxu0 %v255
  %v1099 = vpop.f32.mrb[0].mxu0
  %v1100 = vadd.f32 %v208, %v1099
  %v1101 = vpop.f32.mrb[0].mxu0
  %v1102 = vadd.f32 %v212, %v1101
  %v1103 = vpop.f32.mrb[0].mxu0
  %v1104 = vadd.f32 %v208, %v1103
  %v1105 = vpop.f32.mrb[0].mxu0
  %v1106 = vadd.f32 %v212, %v1105
  %1107 = vmatprep.mubr.bf16.mxu0 %v258
  %1108 = vmatmul.mubr.bf16.gmra.mrb[0].mxu0 %v257
  %v1109 = vpop.f32.mrb[0].mxu0
  %v1110 = vadd.f32 %v208, %v1109
  %v1111 = vpop.f32.mrb[0].mxu0
  %v1112 = vadd.f32 %v212, %v1111
  %v1113 = vpop.f32.mrb[0].mxu0
  %v1114 = vadd.f32 %v208, %v1113
  %v1115 = vpop.f32.mrb[0].mxu0
  %v1116 = vadd.f32 %v212, %v1115
  %1117 = vmatprep.mubr.bf16.mxu0 %v260
  %1118 = vmatmul.mubr.bf16.gmra.mrb[0].mxu0 %v259
  %v1119 = vpop.f32.mrb[0].mxu0
  %v1120 = vadd.f32 %v208, %v1119
  %v1121 = vpop.f32.mrb[0].mxu0
  %v1122 = vadd.f32 %v212, %v1121
  %v1123 = vpop.f32.mrb[0].mxu0
  %v1124 = vadd.f32 %v208, %v1123
  %v1125 = vpop.f32.mrb[0].mxu0
  %v1126 = vadd.f32 %v212, %v1125
  %1127 = vdwg.mxu0
  %1128 = vmatprep.subr.bf16.mxu0 %v660
  %1129 = vmatpush1.bf16.msra.mxu0 %v659
  %1130 = vmatprep.subr.bf16.mxu0 %v668
  %1131 = vmatpush1.bf16.msra.mxu0 %v667
  %1132 = vmatprep.subr.bf16.mxu0 %v676
  %1133 = vmatpush1.bf16.msra.mxu0 %v675
  %1134 = vmatprep.subr.bf16.mxu0 %v684
  %1135 = vmatpush1.bf16.msra.mxu0 %v683
  %1136 = vmatprep.subr.bf16.mxu0 %v692
  %1137 = vmatpush1.bf16.msra.mxu0 %v691
  %1138 = vmatprep.subr.bf16.mxu0 %v700
  %1139 = vmatpush1.bf16.msra.mxu0 %v699
  %1140 = vmatprep.subr.bf16.mxu0 %v708
  %1141 = vmatpush1.bf16.msra.mxu0 %v707
  %1142 = vmatprep.subr.bf16.mxu0 %v716
  %1143 = vmatpush1.bf16.msra.mxu0 %v715
  %1144 = vmatprep.subr.bf16.mxu0 %v724
  %1145 = vmatpush1.bf16.msra.mxu0 %v723
  %1146 = vmatprep.subr.bf16.mxu0 %v732
  %1147 = vmatpush1.bf16.msra.mxu0 %v731
  %1148 = vmatprep.subr.bf16.mxu0 %v740
  %1149 = vmatpush1.bf16.msra.mxu0 %v739
  %1150 = vmatprep.subr.bf16.mxu0 %v748
  %1151 = vmatpush1.bf16.msra.mxu0 %v747
  %1152 = vmatprep.subr.bf16.mxu0 %v756
  %1153 = vmatpush1.bf16.msra.mxu0 %v755
  %1154 = vmatprep.subr.bf16.mxu0 %v764
  %1155 = vmatpush1.bf16.msra.mxu0 %v763
  %1156 = vmatprep.subr.bf16.mxu0 %v772
  %1157 = vmatpush1.bf16.msra.mxu0 %v771
  %1158 = vmatprep.subr.bf16.mxu0 %v780
  %1159 = vmatpush1.bf16.msra.mxu0 %v779
  %1160 = vmatprep.mubr.bf16.mxu0 %v254
  %1161 = vmatmul.mubr.bf16.gmra.mrb[0].mxu0 %v253
  %v1162 = vpop.f32.mrb[0].mxu0
  %v1163 = vadd.f32 %v216, %v1162
  %v1164 = vpop.f32.mrb[0].mxu0
  %v1165 = vadd.f32 %v220, %v1164
  %v1166 = vpop.f32.mrb[0].mxu0
  %v1167 = vadd.f32 %v216, %v1166
  %v1168 = vpop.f32.mrb[0].mxu0
  %v1169 = vadd.f32 %v220, %v1168
  %1170 = vmatprep.mubr.bf16.mxu0 %v256
  %1171 = vmatmul.mubr.bf16.gmra.mrb[0].mxu0 %v255
  %v1172 = vpop.f32.mrb[0].mxu0
  %v1173 = vadd.f32 %v216, %v1172
  %v1174 = vpop.f32.mrb[0].mxu0
  %v1175 = vadd.f32 %v220, %v1174
  %v1176 = vpop.f32.mrb[0].mxu0
  %v1177 = vadd.f32 %v216, %v1176
  %v1178 = vpop.f32.mrb[0].mxu0
  %v1179 = vadd.f32 %v220, %v1178
  %1180 = vmatprep.mubr.bf16.mxu0 %v258
  %1181 = vmatmul.mubr.bf16.gmra.mrb[0].mxu0 %v257
  %v1182 = vpop.f32.mrb[0].mxu0
  %v1183 = vadd.f32 %v216, %v1182
  %v1184 = vpop.f32.mrb[0].mxu0
  %v1185 = vadd.f32 %v220, %v1184
  %v1186 = vpop.f32.mrb[0].mxu0
  %v1187 = vadd.f32 %v216, %v1186
  %v1188 = vpop.f32.mrb[0].mxu0
  %v1189 = vadd.f32 %v220, %v1188
  %1190 = vmatprep.mubr.bf16.mxu0 %v260
  %1191 = vmatmul.mubr.bf16.gmra.mrb[0].mxu0 %v259
  %v1192 = vpop.f32.mrb[0].mxu0
  %v1193 = vadd.f32 %v216, %v1192
  %v1194 = vpop.f32.mrb[0].mxu0
  %v1195 = vadd.f32 %v220, %v1194
  %v1196 = vpop.f32.mrb[0].mxu0
  %v1197 = vadd.f32 %v216, %v1196
  %v1198 = vpop.f32.mrb[0].mxu0
  %v1199 = vadd.f32 %v220, %v1198
  %1200 = vdwg.mxu0
  %1201 = vst [vmem:[#allocation2] sm:$0xff] %v944
  %1202 = vst [vmem:[#allocation2 + $0x8] sm:$0xff] %v946
  %1203 = vst [vmem:[#allocation2 + $0x10] sm:$0xff] %v1017
  %1204 = vst [vmem:[#allocation2 + $0x18] sm:$0xff] %v1019
  %1205 = vst [vmem:[#allocation2 + $0x20] sm:$0xff] %v1090
  %1206 = vst [vmem:[#allocation2 + $0x28] sm:$0xff] %v1092
  %1207 = vst [vmem:[#allocation2 + $0x30] sm:$0xff] %v1163
  %1208 = vst [vmem:[#allocation2 + $0x38] sm:$0xff] %v1165
  %1209 = vst [vmem:[#allocation2 + $0x40] sm:$0xff] %v948
  %1210 = vst [vmem:[#allocation2 + $0x48] sm:$0xff] %v950
  %1211 = vst [vmem:[#allocation2 + $0x50] sm:$0xff] %v1021
  %1212 = vst [vmem:[#allocation2 + $0x58] sm:$0xff] %v1023
  %1213 = vst [vmem:[#allocation2 + $0x60] sm:$0xff] %v1094
  %1214 = vst [vmem:[#allocation2 + $0x68] sm:$0xff] %v1096
  %1215 = vst [vmem:[#allocation2 + $0x70] sm:$0xff] %v1167
  %1216 = vst [vmem:[#allocation2 + $0x78] sm:$0xff] %v1169
  %1217 = vst [vmem:[#allocation2 + $0x80] sm:$0xff] %v954
  %1218 = vst [vmem:[#allocation2 + $0x88] sm:$0xff] %v956
  %1219 = vst [vmem:[#allocation2 + $0x90] sm:$0xff] %v1027
  %1220 = vst [vmem:[#allocation2 + $0x98] sm:$0xff] %v1029
  %1221 = vst [vmem:[#allocation2 + $0xa0] sm:$0xff] %v1100
  %1222 = vst [vmem:[#allocation2 + $0xa8] sm:$0xff] %v1102
  %1223 = vst [vmem:[#allocation2 + $0xb0] sm:$0xff] %v1173
  %1224 = vst [vmem:[#allocation2 + $0xb8] sm:$0xff] %v1175
  %1225 = vst [vmem:[#allocation2 + $0xc0] sm:$0xff] %v958
  %1226 = vst [vmem:[#allocation2 + $0xc8] sm:$0xff] %v960
  %1227 = vst [vmem:[#allocation2 + $0xd0] sm:$0xff] %v1031
  %1228 = vst [vmem:[#allocation2 + $0xd8] sm:$0xff] %v1033
  %1229 = vst [vmem:[#allocation2 + $0xe0] sm:$0xff] %v1104
  %1230 = vst [vmem:[#allocation2 + $0xe8] sm:$0xff] %v1106
  %1231 = vst [vmem:[#allocation2 + $0xf0] sm:$0xff] %v1177
  %1232 = vst [vmem:[#allocation2 + $0xf8] sm:$0xff] %v1179
  %1233 = vst [vmem:[#allocation2 + $0x100] sm:$0xff] %v964
  %1234 = vst [vmem:[#allocation2 + $0x108] sm:$0xff] %v966
  %1235 = vst [vmem:[#allocation2 + $0x110] sm:$0xff] %v1037
  %1236 = vst [vmem:[#allocation2 + $0x118] sm:$0xff] %v1039
  %1237 = vst [vmem:[#allocation2 + $0x120] sm:$0xff] %v1110
  %1238 = vst [vmem:[#allocation2 + $0x128] sm:$0xff] %v1112
  %1239 = vst [vmem:[#allocation2 + $0x130] sm:$0xff] %v1183
  %1240 = vst [vmem:[#allocation2 + $0x138] sm:$0xff] %v1185
  %1241 = vst [vmem:[#allocation2 + $0x140] sm:$0xff] %v968
  %1242 = vst [vmem:[#allocation2 + $0x148] sm:$0xff] %v970
  %1243 = vst [vmem:[#allocation2 + $0x150] sm:$0xff] %v1041
  %1244 = vst [vmem:[#allocation2 + $0x158] sm:$0xff] %v1043
  %1245 = vst [vmem:[#allocation2 + $0x160] sm:$0xff] %v1114
  %1246 = vst [vmem:[#allocation2 + $0x168] sm:$0xff] %v1116
  %1247 = vst [vmem:[#allocation2 + $0x170] sm:$0xff] %v1187
  %1248 = vst [vmem:[#allocation2 + $0x178] sm:$0xff] %v1189
  %1249 = vst [vmem:[#allocation2 + $0x180] sm:$0xff] %v974
  %1250 = vst [vmem:[#allocation2 + $0x188] sm:$0xff] %v976
  %1251 = vst [vmem:[#allocation2 + $0x190] sm:$0xff] %v1047
  %1252 = vst [vmem:[#allocation2 + $0x198] sm:$0xff] %v1049
  %1253 = vst [vmem:[#allocation2 + $0x1a0] sm:$0xff] %v1120
  %1254 = vst [vmem:[#allocation2 + $0x1a8] sm:$0xff] %v1122
  %1255 = vst [vmem:[#allocation2 + $0x1b0] sm:$0xff] %v1193
  %1256 = vst [vmem:[#allocation2 + $0x1b8] sm:$0xff] %v1195
  %1257 = vst [vmem:[#allocation2 + $0x1c0] sm:$0xff] %v978
  %1258 = vst [vmem:[#allocation2 + $0x1c8] sm:$0xff] %v980
  %1259 = vst [vmem:[#allocation2 + $0x1d0] sm:$0xff] %v1051
  %1260 = vst [vmem:[#allocation2 + $0x1d8] sm:$0xff] %v1053
  %1261 = vst [vmem:[#allocation2 + $0x1e0] sm:$0xff] %v1124
  %1262 = vst [vmem:[#allocation2 + $0x1e8] sm:$0xff] %v1126
  %1263 = vst [vmem:[#allocation2 + $0x1f0] sm:$0xff] %v1197
  %1264 = vst [vmem:[#allocation2 + $0x1f8] sm:$0xff] %v1199
  %v1265 = vld [vmem:[%s3] sm:$0xff]
  %v1266 = vld [vmem:[%s3 + $0x8] sm:$0xff]
  %v1267 = vld [vmem:[%s3 + $0x10] sm:$0xff]
  %v1268 = vld [vmem:[%s3 + $0x18] sm:$0xff]
  %v1269 = vld [vmem:[%s3 + $0x20] sm:$0xff]
  %v1270 = vld [vmem:[%s3 + $0x28] sm:$0xff]
  %v1271 = vld [vmem:[%s3 + $0x30] sm:$0xff]
  %v1272 = vld [vmem:[%s3 + $0x38] sm:$0xff]
  %v1273 = vld [vmem:[%s3 + $0x40] sm:$0xff]
  %v1274 = vld [vmem:[%s3 + $0x48] sm:$0xff]
  %v1275 = vld [vmem:[%s3 + $0x50] sm:$0xff]
  %v1276 = vld [vmem:[%s3 + $0x58] sm:$0xff]
  %v1277 = vld [vmem:[%s3 + $0x60] sm:$0xff]
  %v1278 = vld [vmem:[%s3 + $0x68] sm:$0xff]
  %v1279 = vld [vmem:[%s3 + $0x70] sm:$0xff]
  %v1280 = vld [vmem:[%s3 + $0x78] sm:$0xff]
  %v1281 = vld [vmem:[%s3 + $0x80] sm:$0xff]
  %v1282 = vld [vmem:[%s3 + $0x88] sm:$0xff]
  %v1283 = vld [vmem:[%s3 + $0x90] sm:$0xff]
  %v1284 = vld [vmem:[%s3 + $0x98] sm:$0xff]
  %v1285 = vld [vmem:[%s3 + $0xa0] sm:$0xff]
  %v1286 = vld [vmem:[%s3 + $0xa8] sm:$0xff]
  %v1287 = vld [vmem:[%s3 + $0xb0] sm:$0xff]
  %v1288 = vld [vmem:[%s3 + $0xb8] sm:$0xff]
  %v1289 = vld [vmem:[%s3 + $0xc0] sm:$0xff]
  %v1290 = vld [vmem:[%s3 + $0xc8] sm:$0xff]
  %v1291 = vld [vmem:[%s3 + $0xd0] sm:$0xff]
  %v1292 = vld [vmem:[%s3 + $0xd8] sm:$0xff]
  %v1293 = vld [vmem:[%s3 + $0xe0] sm:$0xff]
  %v1294 = vld [vmem:[%s3 + $0xe8] sm:$0xff]
  %v1295 = vld [vmem:[%s3 + $0xf0] sm:$0xff]
  %v1296 = vld [vmem:[%s3 + $0xf8] sm:$0xff]
  %v1297 = vld [vmem:[%s3 + $0x100] sm:$0xff]
  %v1298 = vld [vmem:[%s3 + $0x108] sm:$0xff]
  %v1299 = vld [vmem:[%s3 + $0x110] sm:$0xff]
  %v1300 = vld [vmem:[%s3 + $0x118] sm:$0xff]
  %v1301 = vld [vmem:[%s3 + $0x120] sm:$0xff]
  %v1302 = vld [vmem:[%s3 + $0x128] sm:$0xff]
  %v1303 = vld [vmem:[%s3 + $0x130] sm:$0xff]
  %v1304 = vld [vmem:[%s3 + $0x138] sm:$0xff]
  %v1305 = vld [vmem:[%s3 + $0x140] sm:$0xff]
  %v1306 = vld [vmem:[%s3 + $0x148] sm:$0xff]
  %v1307 = vld [vmem:[%s3 + $0x150] sm:$0xff]
  %v1308 = vld [vmem:[%s3 + $0x158] sm:$0xff]
  %v1309 = vld [vmem:[%s3 + $0x160] sm:$0xff]
  %v1310 = vld [vmem:[%s3 + $0x168] sm:$0xff]
  %v1311 = vld [vmem:[%s3 + $0x170] sm:$0xff]
  %v1312 = vld [vmem:[%s3 + $0x178] sm:$0xff]
  %v1313 = vld [vmem:[%s3 + $0x180] sm:$0xff]
  %v1314 = vld [vmem:[%s3 + $0x188] sm:$0xff]
  %v1315 = vld [vmem:[%s3 + $0x190] sm:$0xff]
  %v1316 = vld [vmem:[%s3 + $0x198] sm:$0xff]
  %v1317 = vld [vmem:[%s3 + $0x1a0] sm:$0xff]
  %v1318 = vld [vmem:[%s3 + $0x1a8] sm:$0xff]
  %v1319 = vld [vmem:[%s3 + $0x1b0] sm:$0xff]
  %v1320 = vld [vmem:[%s3 + $0x1b8] sm:$0xff]
  %v1321 = vld [vmem:[%s3 + $0x1c0] sm:$0xff]
  %v1322 = vld [vmem:[%s3 + $0x1c8] sm:$0xff]
  %v1323 = vld [vmem:[%s3 + $0x1d0] sm:$0xff]
  %v1324 = vld [vmem:[%s3 + $0x1d8] sm:$0xff]
  %v1325 = vld [vmem:[%s3 + $0x1e0] sm:$0xff]
  %v1326 = vld [vmem:[%s3 + $0x1e8] sm:$0xff]
  %v1327 = vld [vmem:[%s3 + $0x1f0] sm:$0xff]
  %v1328 = vld [vmem:[%s3 + $0x1f8] sm:$0xff]
  %v1329 = vld [vmem:[%s3 + $0x200] sm:$0xff]
  %v1330 = vld [vmem:[%s3 + $0x208] sm:$0xff]
  %v1331 = vld [vmem:[%s3 + $0x210] sm:$0xff]
  %v1332 = vld [vmem:[%s3 + $0x218] sm:$0xff]
  %v1333 = vld [vmem:[%s3 + $0x220] sm:$0xff]
  %v1334 = vld [vmem:[%s3 + $0x228] sm:$0xff]
  %v1335 = vld [vmem:[%s3 + $0x230] sm:$0xff]
  %v1336 = vld [vmem:[%s3 + $0x238] sm:$0xff]
  %v1337 = vld [vmem:[%s3 + $0x240] sm:$0xff]
  %v1338 = vld [vmem:[%s3 + $0x248] sm:$0xff]
  %v1339 = vld [vmem:[%s3 + $0x250] sm:$0xff]
  %v1340 = vld [vmem:[%s3 + $0x258] sm:$0xff]
  %v1341 = vld [vmem:[%s3 + $0x260] sm:$0xff]
  %v1342 = vld [vmem:[%s3 + $0x268] sm:$0xff]
  %v1343 = vld [vmem:[%s3 + $0x270] sm:$0xff]
  %v1344 = vld [vmem:[%s3 + $0x278] sm:$0xff]
  %v1345 = vld [vmem:[%s3 + $0x280] sm:$0xff]
  %v1346 = vld [vmem:[%s3 + $0x288] sm:$0xff]
  %v1347 = vld [vmem:[%s3 + $0x290] sm:$0xff]
  %v1348 = vld [vmem:[%s3 + $0x298] sm:$0xff]
  %v1349 = vld [vmem:[%s3 + $0x2a0] sm:$0xff]
  %v1350 = vld [vmem:[%s3 + $0x2a8] sm:$0xff]
  %v1351 = vld [vmem:[%s3 + $0x2b0] sm:$0xff]
  %v1352 = vld [vmem:[%s3 + $0x2b8] sm:$0xff]
  %v1353 = vld [vmem:[%s3 + $0x2c0] sm:$0xff]
  %v1354 = vld [vmem:[%s3 + $0x2c8] sm:$0xff]
  %v1355 = vld [vmem:[%s3 + $0x2d0] sm:$0xff]
  %v1356 = vld [vmem:[%s3 + $0x2d8] sm:$0xff]
  %v1357 = vld [vmem:[%s3 + $0x2e0] sm:$0xff]
  %v1358 = vld [vmem:[%s3 + $0x2e8] sm:$0xff]
  %v1359 = vld [vmem:[%s3 + $0x2f0] sm:$0xff]
  %v1360 = vld [vmem:[%s3 + $0x2f8] sm:$0xff]
  %v1361 = vld [vmem:[%s3 + $0x300] sm:$0xff]
  %v1362 = vld [vmem:[%s3 + $0x308] sm:$0xff]
  %v1363 = vld [vmem:[%s3 + $0x310] sm:$0xff]
  %v1364 = vld [vmem:[%s3 + $0x318] sm:$0xff]
  %v1365 = vld [vmem:[%s3 + $0x320] sm:$0xff]
  %v1366 = vld [vmem:[%s3 + $0x328] sm:$0xff]
  %v1367 = vld [vmem:[%s3 + $0x330] sm:$0xff]
  %v1368 = vld [vmem:[%s3 + $0x338] sm:$0xff]
  %v1369 = vld [vmem:[%s3 + $0x340] sm:$0xff]
  %v1370 = vld [vmem:[%s3 + $0x348] sm:$0xff]
  %v1371 = vld [vmem:[%s3 + $0x350] sm:$0xff]
  %v1372 = vld [vmem:[%s3 + $0x358] sm:$0xff]
  %v1373 = vld [vmem:[%s3 + $0x360] sm:$0xff]
  %v1374 = vld [vmem:[%s3 + $0x368] sm:$0xff]
  %v1375 = vld [vmem:[%s3 + $0x370] sm:$0xff]
  %v1376 = vld [vmem:[%s3 + $0x378] sm:$0xff]
  %v1377 = vld [vmem:[%s3 + $0x380] sm:$0xff]
  %v1378 = vld [vmem:[%s3 + $0x388] sm:$0xff]
  %v1379 = vld [vmem:[%s3 + $0x390] sm:$0xff]
  %v1380 = vld [vmem:[%s3 + $0x398] sm:$0xff]
  %v1381 = vld [vmem:[%s3 + $0x3a0] sm:$0xff]
  %v1382 = vld [vmem:[%s3 + $0x3a8] sm:$0xff]
  %v1383 = vld [vmem:[%s3 + $0x3b0] sm:$0xff]
  %v1384 = vld [vmem:[%s3 + $0x3b8] sm:$0xff]
  %v1385 = vld [vmem:[%s3 + $0x3c0] sm:$0xff]
  %v1386 = vld [vmem:[%s3 + $0x3c8] sm:$0xff]
  %v1387 = vld [vmem:[%s3 + $0x3d0] sm:$0xff]
  %v1388 = vld [vmem:[%s3 + $0x3d8] sm:$0xff]
  %v1389 = vld [vmem:[%s3 + $0x3e0] sm:$0xff]
  %v1390 = vld [vmem:[%s3 + $0x3e8] sm:$0xff]
  %v1391 = vld [vmem:[%s3 + $0x3f0] sm:$0xff]
  %v1392 = vld [vmem:[%s3 + $0x3f8] sm:$0xff]
  %s1393 = smul.u32 0, 8
  %s1394 = smul.addr %s1393, 8
  %s1395 = scalar_lea.vmem [#allocation2], %s1394
  %v1396 = vld [vmem:[%s1395] sm:$0xff]
  %v1397 = vld [vmem:[%s1395 + $0x8] sm:$0xff]
  %v1398 = vld [vmem:[%s1395 + $0x10] sm:$0xff]
  %v1399 = vld [vmem:[%s1395 + $0x18] sm:$0xff]
  %v1400 = vld [vmem:[%s1395 + $0x20] sm:$0xff]
  %v1401 = vld [vmem:[%s1395 + $0x28] sm:$0xff]
  %v1402 = vld [vmem:[%s1395 + $0x30] sm:$0xff]
  %v1403 = vld [vmem:[%s1395 + $0x38] sm:$0xff]
  %v1532 = vunpack.c.l.b16 %v1265
  %v1533 = vunpack.c.h.b16 %v1265
  %v1534 = vunpack.c.l.b16 %v1266
  %v1535 = vunpack.c.h.b16 %v1266
  %v1536 = vunpack.c.l.b16 %v1267
  %v1537 = vunpack.c.h.b16 %v1267
  %v1538 = vunpack.c.l.b16 %v1268
  %v1539 = vunpack.c.h.b16 %v1268
  %v1540 = vunpack.c.l.b16 %v1269
  %v1541 = vunpack.c.h.b16 %v1269
  %v1542 = vunpack.c.l.b16 %v1270
  %v1543 = vunpack.c.h.b16 %v1270
  %v1544 = vunpack.c.l.b16 %v1271
  %v1545 = vunpack.c.h.b16 %v1271
  %v1546 = vunpack.c.l.b16 %v1272
  %v1547 = vunpack.c.h.b16 %v1272
  %v1548 = vunpack.c.l.b16 %v1273
  %v1549 = vunpack.c.h.b16 %v1273
  %v1550 = vunpack.c.l.b16 %v1274
  %v1551 = vunpack.c.h.b16 %v1274
  %v1552 = vunpack.c.l.b16 %v1275
  %v1553 = vunpack.c.h.b16 %v1275
  %v1554 = vunpack.c.l.b16 %v1276
  %v1555 = vunpack.c.h.b16 %v1276
  %v1556 = vunpack.c.l.b16 %v1277
  %v1557 = vunpack.c.h.b16 %v1277
  %v1558 = vunpack.c.l.b16 %v1278
  %v1559 = vunpack.c.h.b16 %v1278
  %v1560 = vunpack.c.l.b16 %v1279
  %v1561 = vunpack.c.h.b16 %v1279
  %v1562 = vunpack.c.l.b16 %v1280
  %v1563 = vunpack.c.h.b16 %v1280
  %v1564 = vunpack.c.l.b16 %v1281
  %v1565 = vunpack.c.h.b16 %v1281
  %v1566 = vunpack.c.l.b16 %v1282
  %v1567 = vunpack.c.h.b16 %v1282
  %v1568 = vunpack.c.l.b16 %v1283
  %v1569 = vunpack.c.h.b16 %v1283
  %v1570 = vunpack.c.l.b16 %v1284
  %v1571 = vunpack.c.h.b16 %v1284
  %v1572 = vunpack.c.l.b16 %v1285
  %v1573 = vunpack.c.h.b16 %v1285
  %v1574 = vunpack.c.l.b16 %v1286
  %v1575 = vunpack.c.h.b16 %v1286
  %v1576 = vunpack.c.l.b16 %v1287
  %v1577 = vunpack.c.h.b16 %v1287
  %v1578 = vunpack.c.l.b16 %v1288
  %v1579 = vunpack.c.h.b16 %v1288
  %v1580 = vunpack.c.l.b16 %v1289
  %v1581 = vunpack.c.h.b16 %v1289
  %v1582 = vunpack.c.l.b16 %v1290
  %v1583 = vunpack.c.h.b16 %v1290
  %v1584 = vunpack.c.l.b16 %v1291
  %v1585 = vunpack.c.h.b16 %v1291
  %v1586 = vunpack.c.l.b16 %v1292
  %v1587 = vunpack.c.h.b16 %v1292
  %v1588 = vunpack.c.l.b16 %v1293
  %v1589 = vunpack.c.h.b16 %v1293
  %v1590 = vunpack.c.l.b16 %v1294
  %v1591 = vunpack.c.h.b16 %v1294
  %v1592 = vunpack.c.l.b16 %v1295
  %v1593 = vunpack.c.h.b16 %v1295
  %v1594 = vunpack.c.l.b16 %v1296
  %v1595 = vunpack.c.h.b16 %v1296
  %v1596 = vunpack.c.l.b16 %v1297
  %v1597 = vunpack.c.h.b16 %v1297
  %v1598 = vunpack.c.l.b16 %v1298
  %v1599 = vunpack.c.h.b16 %v1298
  %v1600 = vunpack.c.l.b16 %v1299
  %v1601 = vunpack.c.h.b16 %v1299
  %v1602 = vunpack.c.l.b16 %v1300
  %v1603 = vunpack.c.h.b16 %v1300
  %v1604 = vunpack.c.l.b16 %v1301
  %v1605 = vunpack.c.h.b16 %v1301
  %v1606 = vunpack.c.l.b16 %v1302
  %v1607 = vunpack.c.h.b16 %v1302
  %v1608 = vunpack.c.l.b16 %v1303
  %v1609 = vunpack.c.h.b16 %v1303
  %v1610 = vunpack.c.l.b16 %v1304
  %v1611 = vunpack.c.h.b16 %v1304
  %v1612 = vunpack.c.l.b16 %v1305
  %v1613 = vunpack.c.h.b16 %v1305
  %v1614 = vunpack.c.l.b16 %v1306
  %v1615 = vunpack.c.h.b16 %v1306
  %v1616 = vunpack.c.l.b16 %v1307
  %v1617 = vunpack.c.h.b16 %v1307
  %v1618 = vunpack.c.l.b16 %v1308
  %v1619 = vunpack.c.h.b16 %v1308
  %v1620 = vunpack.c.l.b16 %v1309
  %v1621 = vunpack.c.h.b16 %v1309
  %v1622 = vunpack.c.l.b16 %v1310
  %v1623 = vunpack.c.h.b16 %v1310
  %v1624 = vunpack.c.l.b16 %v1311
  %v1625 = vunpack.c.h.b16 %v1311
  %v1626 = vunpack.c.l.b16 %v1312
  %v1627 = vunpack.c.h.b16 %v1312
  %v1628 = vunpack.c.l.b16 %v1313
  %v1629 = vunpack.c.h.b16 %v1313
  %v1630 = vunpack.c.l.b16 %v1314
  %v1631 = vunpack.c.h.b16 %v1314
  %v1632 = vunpack.c.l.b16 %v1315
  %v1633 = vunpack.c.h.b16 %v1315
  %v1634 = vunpack.c.l.b16 %v1316
  %v1635 = vunpack.c.h.b16 %v1316
  %v1636 = vunpack.c.l.b16 %v1317
  %v1637 = vunpack.c.h.b16 %v1317
  %v1638 = vunpack.c.l.b16 %v1318
  %v1639 = vunpack.c.h.b16 %v1318
  %v1640 = vunpack.c.l.b16 %v1319
  %v1641 = vunpack.c.h.b16 %v1319
  %v1642 = vunpack.c.l.b16 %v1320
  %v1643 = vunpack.c.h.b16 %v1320
  %v1644 = vunpack.c.l.b16 %v1321
  %v1645 = vunpack.c.h.b16 %v1321
  %v1646 = vunpack.c.l.b16 %v1322
  %v1647 = vunpack.c.h.b16 %v1322
  %v1648 = vunpack.c.l.b16 %v1323
  %v1649 = vunpack.c.h.b16 %v1323
  %v1650 = vunpack.c.l.b16 %v1324
  %v1651 = vunpack.c.h.b16 %v1324
  %v1652 = vunpack.c.l.b16 %v1325
  %v1653 = vunpack.c.h.b16 %v1325
  %v1654 = vunpack.c.l.b16 %v1326
  %v1655 = vunpack.c.h.b16 %v1326
  %v1656 = vunpack.c.l.b16 %v1327
  %v1657 = vunpack.c.h.b16 %v1327
  %v1658 = vunpack.c.l.b16 %v1328
  %v1659 = vunpack.c.h.b16 %v1328
  %v1660 = vunpack.c.l.b16 %v1329
  %v1661 = vunpack.c.h.b16 %v1329
  %v1662 = vunpack.c.l.b16 %v1330
  %v1663 = vunpack.c.h.b16 %v1330
  %v1664 = vunpack.c.l.b16 %v1331
  %v1665 = vunpack.c.h.b16 %v1331
  %v1666 = vunpack.c.l.b16 %v1332
  %v1667 = vunpack.c.h.b16 %v1332
  %v1668 = vunpack.c.l.b16 %v1333
  %v1669 = vunpack.c.h.b16 %v1333
  %v1670 = vunpack.c.l.b16 %v1334
  %v1671 = vunpack.c.h.b16 %v1334
  %v1672 = vunpack.c.l.b16 %v1335
  %v1673 = vunpack.c.h.b16 %v1335
  %v1674 = vunpack.c.l.b16 %v1336
  %v1675 = vunpack.c.h.b16 %v1336
  %v1676 = vunpack.c.l.b16 %v1337
  %v1677 = vunpack.c.h.b16 %v1337
  %v1678 = vunpack.c.l.b16 %v1338
  %v1679 = vunpack.c.h.b16 %v1338
  %v1680 = vunpack.c.l.b16 %v1339
  %v1681 = vunpack.c.h.b16 %v1339
  %v1682 = vunpack.c.l.b16 %v1340
  %v1683 = vunpack.c.h.b16 %v1340
  %v1684 = vunpack.c.l.b16 %v1341
  %v1685 = vunpack.c.h.b16 %v1341
  %v1686 = vunpack.c.l.b16 %v1342
  %v1687 = vunpack.c.h.b16 %v1342
  %v1688 = vunpack.c.l.b16 %v1343
  %v1689 = vunpack.c.h.b16 %v1343
  %v1690 = vunpack.c.l.b16 %v1344
  %v1691 = vunpack.c.h.b16 %v1344
  %v1692 = vunpack.c.l.b16 %v1345
  %v1693 = vunpack.c.h.b16 %v1345
  %v1694 = vunpack.c.l.b16 %v1346
  %v1695 = vunpack.c.h.b16 %v1346
  %v1696 = vunpack.c.l.b16 %v1347
  %v1697 = vunpack.c.h.b16 %v1347
  %v1698 = vunpack.c.l.b16 %v1348
  %v1699 = vunpack.c.h.b16 %v1348
  %v1700 = vunpack.c.l.b16 %v1349
  %v1701 = vunpack.c.h.b16 %v1349
  %v1702 = vunpack.c.l.b16 %v1350
  %v1703 = vunpack.c.h.b16 %v1350
  %v1704 = vunpack.c.l.b16 %v1351
  %v1705 = vunpack.c.h.b16 %v1351
  %v1706 = vunpack.c.l.b16 %v1352
  %v1707 = vunpack.c.h.b16 %v1352
  %v1708 = vunpack.c.l.b16 %v1353
  %v1709 = vunpack.c.h.b16 %v1353
  %v1710 = vunpack.c.l.b16 %v1354
  %v1711 = vunpack.c.h.b16 %v1354
  %v1712 = vunpack.c.l.b16 %v1355
  %v1713 = vunpack.c.h.b16 %v1355
  %v1714 = vunpack.c.l.b16 %v1356
  %v1715 = vunpack.c.h.b16 %v1356
  %v1716 = vunpack.c.l.b16 %v1357
  %v1717 = vunpack.c.h.b16 %v1357
  %v1718 = vunpack.c.l.b16 %v1358
  %v1719 = vunpack.c.h.b16 %v1358
  %v1720 = vunpack.c.l.b16 %v1359
  %v1721 = vunpack.c.h.b16 %v1359
  %v1722 = vunpack.c.l.b16 %v1360
  %v1723 = vunpack.c.h.b16 %v1360
  %v1724 = vunpack.c.l.b16 %v1361
  %v1725 = vunpack.c.h.b16 %v1361
  %v1726 = vunpack.c.l.b16 %v1362
  %v1727 = vunpack.c.h.b16 %v1362
  %v1728 = vunpack.c.l.b16 %v1363
  %v1729 = vunpack.c.h.b16 %v1363
  %v1730 = vunpack.c.l.b16 %v1364
  %v1731 = vunpack.c.h.b16 %v1364
  %v1732 = vunpack.c.l.b16 %v1365
  %v1733 = vunpack.c.h.b16 %v1365
  %v1734 = vunpack.c.l.b16 %v1366
  %v1735 = vunpack.c.h.b16 %v1366
  %v1736 = vunpack.c.l.b16 %v1367
  %v1737 = vunpack.c.h.b16 %v1367
  %v1738 = vunpack.c.l.b16 %v1368
  %v1739 = vunpack.c.h.b16 %v1368
  %v1740 = vunpack.c.l.b16 %v1369
  %v1741 = vunpack.c.h.b16 %v1369
  %v1742 = vunpack.c.l.b16 %v1370
  %v1743 = vunpack.c.h.b16 %v1370
  %v1744 = vunpack.c.l.b16 %v1371
  %v1745 = vunpack.c.h.b16 %v1371
  %v1746 = vunpack.c.l.b16 %v1372
  %v1747 = vunpack.c.h.b16 %v1372
  %v1748 = vunpack.c.l.b16 %v1373
  %v1749 = vunpack.c.h.b16 %v1373
  %v1750 = vunpack.c.l.b16 %v1374
  %v1751 = vunpack.c.h.b16 %v1374
  %v1752 = vunpack.c.l.b16 %v1375
  %v1753 = vunpack.c.h.b16 %v1375
  %v1754 = vunpack.c.l.b16 %v1376
  %v1755 = vunpack.c.h.b16 %v1376
  %v1756 = vunpack.c.l.b16 %v1377
  %v1757 = vunpack.c.h.b16 %v1377
  %v1758 = vunpack.c.l.b16 %v1378
  %v1759 = vunpack.c.h.b16 %v1378
  %v1760 = vunpack.c.l.b16 %v1379
  %v1761 = vunpack.c.h.b16 %v1379
  %v1762 = vunpack.c.l.b16 %v1380
  %v1763 = vunpack.c.h.b16 %v1380
  %v1764 = vunpack.c.l.b16 %v1381
  %v1765 = vunpack.c.h.b16 %v1381
  %v1766 = vunpack.c.l.b16 %v1382
  %v1767 = vunpack.c.h.b16 %v1382
  %v1768 = vunpack.c.l.b16 %v1383
  %v1769 = vunpack.c.h.b16 %v1383
  %v1770 = vunpack.c.l.b16 %v1384
  %v1771 = vunpack.c.h.b16 %v1384
  %v1772 = vunpack.c.l.b16 %v1385
  %v1773 = vunpack.c.h.b16 %v1385
  %v1774 = vunpack.c.l.b16 %v1386
  %v1775 = vunpack.c.h.b16 %v1386
  %v1776 = vunpack.c.l.b16 %v1387
  %v1777 = vunpack.c.h.b16 %v1387
  %v1778 = vunpack.c.l.b16 %v1388
  %v1779 = vunpack.c.h.b16 %v1388
  %v1780 = vunpack.c.l.b16 %v1389
  %v1781 = vunpack.c.h.b16 %v1389
  %v1782 = vunpack.c.l.b16 %v1390
  %v1783 = vunpack.c.h.b16 %v1390
  %v1784 = vunpack.c.l.b16 %v1391
  %v1785 = vunpack.c.h.b16 %v1391
  %v1786 = vunpack.c.l.b16 %v1392
  %v1787 = vunpack.c.h.b16 %v1392
  %v1788 = vpack.c.b16 %v1540, %v1532
  %v1789 = vpack.c.b16 %v1541, %v1533
  %v1790 = vpack.c.b16 %v1542, %v1534
  %v1791 = vpack.c.b16 %v1543, %v1535
  %v1792 = vpack.c.b16 %v1544, %v1536
  %v1793 = vpack.c.b16 %v1545, %v1537
  %v1794 = vpack.c.b16 %v1546, %v1538
  %v1795 = vpack.c.b16 %v1547, %v1539
  %v1796 = vpack.c.b16 %v1556, %v1548
  %v1797 = vpack.c.b16 %v1557, %v1549
  %v1798 = vpack.c.b16 %v1558, %v1550
  %v1799 = vpack.c.b16 %v1559, %v1551
  %v1800 = vpack.c.b16 %v1560, %v1552
  %v1801 = vpack.c.b16 %v1561, %v1553
  %v1802 = vpack.c.b16 %v1562, %v1554
  %v1803 = vpack.c.b16 %v1563, %v1555
  %v1804 = vpack.c.b16 %v1572, %v1564
  %v1805 = vpack.c.b16 %v1573, %v1565
  %v1806 = vpack.c.b16 %v1574, %v1566
  %v1807 = vpack.c.b16 %v1575, %v1567
  %v1808 = vpack.c.b16 %v1576, %v1568
  %v1809 = vpack.c.b16 %v1577, %v1569
  %v1810 = vpack.c.b16 %v1578, %v1570
  %v1811 = vpack.c.b16 %v1579, %v1571
  %v1812 = vpack.c.b16 %v1588, %v1580
  %v1813 = vpack.c.b16 %v1589, %v1581
  %v1814 = vpack.c.b16 %v1590, %v1582
  %v1815 = vpack.c.b16 %v1591, %v1583
  %v1816 = vpack.c.b16 %v1592, %v1584
  %v1817 = vpack.c.b16 %v1593, %v1585
  %v1818 = vpack.c.b16 %v1594, %v1586
  %v1819 = vpack.c.b16 %v1595, %v1587
  %v1820 = vpack.c.b16 %v1604, %v1596
  %v1821 = vpack.c.b16 %v1605, %v1597
  %v1822 = vpack.c.b16 %v1606, %v1598
  %v1823 = vpack.c.b16 %v1607, %v1599
  %v1824 = vpack.c.b16 %v1608, %v1600
  %v1825 = vpack.c.b16 %v1609, %v1601
  %v1826 = vpack.c.b16 %v1610, %v1602
  %v1827 = vpack.c.b16 %v1611, %v1603
  %v1828 = vpack.c.b16 %v1620, %v1612
  %v1829 = vpack.c.b16 %v1621, %v1613
  %v1830 = vpack.c.b16 %v1622, %v1614
  %v1831 = vpack.c.b16 %v1623, %v1615
  %v1832 = vpack.c.b16 %v1624, %v1616
  %v1833 = vpack.c.b16 %v1625, %v1617
  %v1834 = vpack.c.b16 %v1626, %v1618
  %v1835 = vpack.c.b16 %v1627, %v1619
  %v1836 = vpack.c.b16 %v1636, %v1628
  %v1837 = vpack.c.b16 %v1637, %v1629
  %v1838 = vpack.c.b16 %v1638, %v1630
  %v1839 = vpack.c.b16 %v1639, %v1631
  %v1840 = vpack.c.b16 %v1640, %v1632
  %v1841 = vpack.c.b16 %v1641, %v1633
  %v1842 = vpack.c.b16 %v1642, %v1634
  %v1843 = vpack.c.b16 %v1643, %v1635
  %v1844 = vpack.c.b16 %v1652, %v1644
  %v1845 = vpack.c.b16 %v1653, %v1645
  %v1846 = vpack.c.b16 %v1654, %v1646
  %v1847 = vpack.c.b16 %v1655, %v1647
  %v1848 = vpack.c.b16 %v1656, %v1648
  %v1849 = vpack.c.b16 %v1657, %v1649
  %v1850 = vpack.c.b16 %v1658, %v1650
  %v1851 = vpack.c.b16 %v1659, %v1651
  %v1852 = vpack.c.b16 %v1668, %v1660
  %v1853 = vpack.c.b16 %v1669, %v1661
  %v1854 = vpack.c.b16 %v1670, %v1662
  %v1855 = vpack.c.b16 %v1671, %v1663
  %v1856 = vpack.c.b16 %v1672, %v1664
  %v1857 = vpack.c.b16 %v1673, %v1665
  %v1858 = vpack.c.b16 %v1674, %v1666
  %v1859 = vpack.c.b16 %v1675, %v1667
  %v1860 = vpack.c.b16 %v1684, %v1676
  %v1861 = vpack.c.b16 %v1685, %v1677
  %v1862 = vpack.c.b16 %v1686, %v1678
  %v1863 = vpack.c.b16 %v1687, %v1679
  %v1864 = vpack.c.b16 %v1688, %v1680
  %v1865 = vpack.c.b16 %v1689, %v1681
  %v1866 = vpack.c.b16 %v1690, %v1682
  %v1867 = vpack.c.b16 %v1691, %v1683
  %v1868 = vpack.c.b16 %v1700, %v1692
  %v1869 = vpack.c.b16 %v1701, %v1693
  %v1870 = vpack.c.b16 %v1702, %v1694
  %v1871 = vpack.c.b16 %v1703, %v1695
  %v1872 = vpack.c.b16 %v1704, %v1696
  %v1873 = vpack.c.b16 %v1705, %v1697
  %v1874 = vpack.c.b16 %v1706, %v1698
  %v1875 = vpack.c.b16 %v1707, %v1699
  %v1876 = vpack.c.b16 %v1716, %v1708
  %v1877 = vpack.c.b16 %v1717, %v1709
  %v1878 = vpack.c.b16 %v1718, %v1710
  %v1879 = vpack.c.b16 %v1719, %v1711
  %v1880 = vpack.c.b16 %v1720, %v1712
  %v1881 = vpack.c.b16 %v1721, %v1713
  %v1882 = vpack.c.b16 %v1722, %v1714
  %v1883 = vpack.c.b16 %v1723, %v1715
  %v1884 = vpack.c.b16 %v1732, %v1724
  %v1885 = vpack.c.b16 %v1733, %v1725
  %v1886 = vpack.c.b16 %v1734, %v1726
  %v1887 = vpack.c.b16 %v1735, %v1727
  %v1888 = vpack.c.b16 %v1736, %v1728
  %v1889 = vpack.c.b16 %v1737, %v1729
  %v1890 = vpack.c.b16 %v1738, %v1730
  %v1891 = vpack.c.b16 %v1739, %v1731
  %v1892 = vpack.c.b16 %v1748, %v1740
  %v1893 = vpack.c.b16 %v1749, %v1741
  %v1894 = vpack.c.b16 %v1750, %v1742
  %v1895 = vpack.c.b16 %v1751, %v1743
  %v1896 = vpack.c.b16 %v1752, %v1744
  %v1897 = vpack.c.b16 %v1753, %v1745
  %v1898 = vpack.c.b16 %v1754, %v1746
  %v1899 = vpack.c.b16 %v1755, %v1747
  %v1900 = vpack.c.b16 %v1764, %v1756
  %v1901 = vpack.c.b16 %v1765, %v1757
  %v1902 = vpack.c.b16 %v1766, %v1758
  %v1903 = vpack.c.b16 %v1767, %v1759
  %v1904 = vpack.c.b16 %v1768, %v1760
  %v1905 = vpack.c.b16 %v1769, %v1761
  %v1906 = vpack.c.b16 %v1770, %v1762
  %v1907 = vpack.c.b16 %v1771, %v1763
  %v1908 = vpack.c.b16 %v1780, %v1772
  %v1909 = vpack.c.b16 %v1781, %v1773
  %v1910 = vpack.c.b16 %v1782, %v1774
  %v1911 = vpack.c.b16 %v1783, %v1775
  %v1912 = vpack.c.b16 %v1784, %v1776
  %v1913 = vpack.c.b16 %v1785, %v1777
  %v1914 = vpack.c.b16 %v1786, %v1778
  %v1915 = vpack.c.b16 %v1787, %v1779
  %2044 = vmatprep.subr.bf16.mxu0 %v1789
  %2045 = vmatpush1.bf16.msra.mxu0 %v1788
  %2046 = vmatprep.subr.bf16.mxu0 %v1797
  %2047 = vmatpush1.bf16.msra.mxu0 %v1796
  %2048 = vmatprep.subr.bf16.mxu0 %v1805
  %2049 = vmatpush1.bf16.msra.mxu0 %v1804
  %2050 = vmatprep.subr.bf16.mxu0 %v1813
  %2051 = vmatpush1.bf16.msra.mxu0 %v1812
  %2052 = vmatprep.subr.bf16.mxu0 %v1821
  %2053 = vmatpush1.bf16.msra.mxu0 %v1820
  %2054 = vmatprep.subr.bf16.mxu0 %v1829
  %2055 = vmatpush1.bf16.msra.mxu0 %v1828
  %2056 = vmatprep.subr.bf16.mxu0 %v1837
  %2057 = vmatpush1.bf16.msra.mxu0 %v1836
  %2058 = vmatprep.subr.bf16.mxu0 %v1845
  %2059 = vmatpush1.bf16.msra.mxu0 %v1844
  %2060 = vmatprep.subr.bf16.mxu0 %v1853
  %2061 = vmatpush1.bf16.msra.mxu0 %v1852
  %2062 = vmatprep.subr.bf16.mxu0 %v1861
  %2063 = vmatpush1.bf16.msra.mxu0 %v1860
  %2064 = vmatprep.subr.bf16.mxu0 %v1869
  %2065 = vmatpush1.bf16.msra.mxu0 %v1868
  %2066 = vmatprep.subr.bf16.mxu0 %v1877
  %2067 = vmatpush1.bf16.msra.mxu0 %v1876
  %2068 = vmatprep.subr.bf16.mxu0 %v1885
  %2069 = vmatpush1.bf16.msra.mxu0 %v1884
  %2070 = vmatprep.subr.bf16.mxu0 %v1893
  %2071 = vmatpush1.bf16.msra.mxu0 %v1892
  %2072 = vmatprep.subr.bf16.mxu0 %v1901
  %2073 = vmatpush1.bf16.msra.mxu0 %v1900
  %2074 = vmatprep.subr.bf16.mxu0 %v1909
  %2075 = vmatpush1.bf16.msra.mxu0 %v1908
  %2076 = vmatprep.mubr.bf16.mxu0 0
  %2077 = vmatmul.mubr.bf16.gmra.mrb[0].mxu0 0
  %v2078 = vpop.f32.mrb[0].mxu0
  %v2079 = vadd.f32 0.0, %v2078
  %v2080 = vpop.f32.mrb[0].mxu0
  %v2081 = vadd.f32 0.0, %v2080
  %v2082 = vpop.f32.mrb[0].mxu0
  %v2083 = vpop.f32.mrb[0].mxu0
  %2084 = vdwg.mxu0
  %2085 = vmatprep.subr.bf16.mxu0 %v1791
  %2086 = vmatpush1.bf16.msra.mxu0 %v1790
  %2087 = vmatprep.subr.bf16.mxu0 %v1799
  %2088 = vmatpush1.bf16.msra.mxu0 %v1798
  %2089 = vmatprep.subr.bf16.mxu0 %v1807
  %2090 = vmatpush1.bf16.msra.mxu0 %v1806
  %2091 = vmatprep.subr.bf16.mxu0 %v1815
  %2092 = vmatpush1.bf16.msra.mxu0 %v1814
  %2093 = vmatprep.subr.bf16.mxu0 %v1823
  %2094 = vmatpush1.bf16.msra.mxu0 %v1822
  %2095 = vmatprep.subr.bf16.mxu0 %v1831
  %2096 = vmatpush1.bf16.msra.mxu0 %v1830
  %2097 = vmatprep.subr.bf16.mxu0 %v1839
  %2098 = vmatpush1.bf16.msra.mxu0 %v1838
  %2099 = vmatprep.subr.bf16.mxu0 %v1847
  %2100 = vmatpush1.bf16.msra.mxu0 %v1846
  %2101 = vmatprep.subr.bf16.mxu0 %v1855
  %2102 = vmatpush1.bf16.msra.mxu0 %v1854
  %2103 = vmatprep.subr.bf16.mxu0 %v1863
  %2104 = vmatpush1.bf16.msra.mxu0 %v1862
  %2105 = vmatprep.subr.bf16.mxu0 %v1871
  %2106 = vmatpush1.bf16.msra.mxu0 %v1870
  %2107 = vmatprep.subr.bf16.mxu0 %v1879
  %2108 = vmatpush1.bf16.msra.mxu0 %v1878
  %2109 = vmatprep.subr.bf16.mxu0 %v1887
  %2110 = vmatpush1.bf16.msra.mxu0 %v1886
  %2111 = vmatprep.subr.bf16.mxu0 %v1895
  %2112 = vmatpush1.bf16.msra.mxu0 %v1894
  %2113 = vmatprep.subr.bf16.mxu0 %v1903
  %2114 = vmatpush1.bf16.msra.mxu0 %v1902
  %2115 = vmatprep.subr.bf16.mxu0 %v1911
  %2116 = vmatpush1.bf16.msra.mxu0 %v1910
  %2117 = vmatprep.mubr.bf16.mxu0 0
  %2118 = vmatmul.mubr.bf16.gmra.mrb[0].mxu0 0
  %v2119 = vpop.f32.mrb[0].mxu0
  %v2120 = vadd.f32 0.0, %v2119
  %v2121 = vpop.f32.mrb[0].mxu0
  %v2122 = vadd.f32 0.0, %v2121
  %v2123 = vpop.f32.mrb[0].mxu0
  %v2124 = vpop.f32.mrb[0].mxu0
  %2125 = vdwg.mxu0
  %2126 = vmatprep.subr.bf16.mxu0 %v1793
  %2127 = vmatpush1.bf16.msra.mxu0 %v1792
  %2128 = vmatprep.subr.bf16.mxu0 %v1801
  %2129 = vmatpush1.bf16.msra.mxu0 %v1800
  %2130 = vmatprep.subr.bf16.mxu0 %v1809
  %2131 = vmatpush1.bf16.msra.mxu0 %v1808
  %2132 = vmatprep.subr.bf16.mxu0 %v1817
  %2133 = vmatpush1.bf16.msra.mxu0 %v1816
  %2134 = vmatprep.subr.bf16.mxu0 %v1825
  %2135 = vmatpush1.bf16.msra.mxu0 %v1824
  %2136 = vmatprep.subr.bf16.mxu0 %v1833
  %2137 = vmatpush1.bf16.msra.mxu0 %v1832
  %2138 = vmatprep.subr.bf16.mxu0 %v1841
  %2139 = vmatpush1.bf16.msra.mxu0 %v1840
  %2140 = vmatprep.subr.bf16.mxu0 %v1849
  %2141 = vmatpush1.bf16.msra.mxu0 %v1848
  %2142 = vmatprep.subr.bf16.mxu0 %v1857
  %2143 = vmatpush1.bf16.msra.mxu0 %v1856
  %2144 = vmatprep.subr.bf16.mxu0 %v1865
  %2145 = vmatpush1.bf16.msra.mxu0 %v1864
  %2146 = vmatprep.subr.bf16.mxu0 %v1873
  %2147 = vmatpush1.bf16.msra.mxu0 %v1872
  %2148 = vmatprep.subr.bf16.mxu0 %v1881
  %2149 = vmatpush1.bf16.msra.mxu0 %v1880
  %2150 = vmatprep.subr.bf16.mxu0 %v1889
  %2151 = vmatpush1.bf16.msra.mxu0 %v1888
  %2152 = vmatprep.subr.bf16.mxu0 %v1897
  %2153 = vmatpush1.bf16.msra.mxu0 %v1896
  %2154 = vmatprep.subr.bf16.mxu0 %v1905
  %2155 = vmatpush1.bf16.msra.mxu0 %v1904
  %2156 = vmatprep.subr.bf16.mxu0 %v1913
  %2157 = vmatpush1.bf16.msra.mxu0 %v1912
  %2158 = vmatprep.mubr.bf16.mxu0 0
  %2159 = vmatmul.mubr.bf16.gmra.mrb[0].mxu0 0
  %v2160 = vpop.f32.mrb[0].mxu0
  %v2161 = vadd.f32 0.0, %v2160
  %v2162 = vpop.f32.mrb[0].mxu0
  %v2163 = vadd.f32 0.0, %v2162
  %v2164 = vpop.f32.mrb[0].mxu0
  %v2165 = vpop.f32.mrb[0].mxu0
  %2166 = vdwg.mxu0
  %2167 = vmatprep.subr.bf16.mxu0 %v1795
  %2168 = vmatpush1.bf16.msra.mxu0 %v1794
  %2169 = vmatprep.subr.bf16.mxu0 %v1803
  %2170 = vmatpush1.bf16.msra.mxu0 %v1802
  %2171 = vmatprep.subr.bf16.mxu0 %v1811
  %2172 = vmatpush1.bf16.msra.mxu0 %v1810
  %2173 = vmatprep.subr.bf16.mxu0 %v1819
  %2174 = vmatpush1.bf16.msra.mxu0 %v1818
  %2175 = vmatprep.subr.bf16.mxu0 %v1827
  %2176 = vmatpush1.bf16.msra.mxu0 %v1826
  %2177 = vmatprep.subr.bf16.mxu0 %v1835
  %2178 = vmatpush1.bf16.msra.mxu0 %v1834
  %2179 = vmatprep.subr.bf16.mxu0 %v1843
  %2180 = vmatpush1.bf16.msra.mxu0 %v1842
  %2181 = vmatprep.subr.bf16.mxu0 %v1851
  %2182 = vmatpush1.bf16.msra.mxu0 %v1850
  %2183 = vmatprep.subr.bf16.mxu0 %v1859
  %2184 = vmatpush1.bf16.msra.mxu0 %v1858
  %2185 = vmatprep.subr.bf16.mxu0 %v1867
  %2186 = vmatpush1.bf16.msra.mxu0 %v1866
  %2187 = vmatprep.subr.bf16.mxu0 %v1875
  %2188 = vmatpush1.bf16.msra.mxu0 %v1874
  %2189 = vmatprep.subr.bf16.mxu0 %v1883
  %2190 = vmatpush1.bf16.msra.mxu0 %v1882
  %2191 = vmatprep.subr.bf16.mxu0 %v1891
  %2192 = vmatpush1.bf16.msra.mxu0 %v1890
  %2193 = vmatprep.subr.bf16.mxu0 %v1899
  %2194 = vmatpush1.bf16.msra.mxu0 %v1898
  %2195 = vmatprep.subr.bf16.mxu0 %v1907
  %2196 = vmatpush1.bf16.msra.mxu0 %v1906
  %2197 = vmatprep.subr.bf16.mxu0 %v1915
  %2198 = vmatpush1.bf16.msra.mxu0 %v1914
  %2199 = vmatprep.mubr.bf16.mxu0 0
  %2200 = vmatmul.mubr.bf16.gmra.mrb[0].mxu0 0
  %v2201 = vpop.f32.mrb[0].mxu0
  %v2202 = vadd.f32 0.0, %v2201
  %v2203 = vpop.f32.mrb[0].mxu0
  %v2204 = vadd.f32 0.0, %v2203
  %v2205 = vpop.f32.mrb[0].mxu0
  %v2206 = vpop.f32.mrb[0].mxu0
  %2207 = vdwg.mxu0
  %v2208 = vadd.f32 %v1396, %v2079
  %v2209 = vadd.f32 %v1397, %v2081
  %v2210 = vadd.f32 %v1398, %v2120
  %v2211 = vadd.f32 %v1399, %v2122
  %v2212 = vadd.f32 %v1400, %v2161
  %v2213 = vadd.f32 %v1401, %v2163
  %v2214 = vadd.f32 %v1402, %v2202
  %v2215 = vadd.f32 %v1403, %v2204
  %v2216 = vxor.u32 %v2208, 2147483648
  %v2217 = vxor.u32 %v2209, 2147483648
  %v2218 = vmul.f32 %v2216, 1.442695
  %v2219 = vpow.pop %v2218
  %v2220 = vmul.f32 %v2217, 1.442695
  %v2221 = vpow.pop %v2220
  %v2222 = vadd.f32 %v2219, 1.0
  %v2223 = vadd.f32 %v2221, 1.0
  %v2224 = vrcp.pop %v2222
  %v2225 = vmul.f32 1.0, %v2224
  %v2226 = vrcp.pop %v2223
  %v2227 = vmul.f32 1.0, %v2226
  %v2228 = vxor.u32 %v2210, 2147483648
  %v2229 = vxor.u32 %v2211, 2147483648
  %v2230 = vmul.f32 %v2228, 1.442695
  %v2231 = vpow.pop %v2230
  %v2232 = vmul.f32 %v2229, 1.442695
  %v2233 = vpow.pop %v2232
  %v2234 = vadd.f32 %v2231, 1.0
  %v2235 = vadd.f32 %v2233, 1.0
  %v2236 = vrcp.pop %v2234
  %v2237 = vmul.f32 1.0, %v2236
  %v2238 = vrcp.pop %v2235
  %v2239 = vmul.f32 1.0, %v2238
  %v2240 = vtanh.pop %v2212
  %v2241 = vtanh.pop %v2213
  %v2242 = vxor.u32 %v2214, 2147483648
  %v2243 = vxor.u32 %v2215, 2147483648
  %v2244 = vmul.f32 %v2242, 1.442695
  %v2245 = vpow.pop %v2244
  %v2246 = vmul.f32 %v2243, 1.442695
  %v2247 = vpow.pop %v2246
  %v2248 = vadd.f32 %v2245, 1.0
  %v2249 = vadd.f32 %v2247, 1.0
  %v2250 = vrcp.pop %v2248
  %v2251 = vmul.f32 1.0, %v2250
  %v2252 = vrcp.pop %v2249
  %v2253 = vmul.f32 1.0, %v2252
  %v2254 = vmul.f32 %v2237, 0.0
  %v2255 = vmul.f32 %v2239, 0.0
  %v2256 = vmul.f32 %v2225, %v2240
  %v2257 = vmul.f32 %v2227, %v2241
  %v2258 = vadd.f32 %v2254, %v2256
  %v2259 = vadd.f32 %v2255, %v2257
  %v2260 = vtanh.pop %v2258
  %v2261 = vtanh.pop %v2259
  %v2262 = vmul.f32 %v2251, %v2260
  %v2263 = vmul.f32 %v2253, %v2261
  %s2264 = smul.u32 1, 8
  %s2265 = smul.addr %s2264, 8
  %s2266 = scalar_lea.vmem [#allocation2], %s2265
  %v2267 = vld [vmem:[%s2266] sm:$0xff]
  %v2268 = vld [vmem:[%s2266 + $0x8] sm:$0xff]
  %v2269 = vld [vmem:[%s2266 + $0x10] sm:$0xff]
  %v2270 = vld [vmem:[%s2266 + $0x18] sm:$0xff]
  %v2271 = vld [vmem:[%s2266 + $0x20] sm:$0xff]
  %v2272 = vld [vmem:[%s2266 + $0x28] sm:$0xff]
  %v2273 = vld [vmem:[%s2266 + $0x30] sm:$0xff]
  %v2274 = vld [vmem:[%s2266 + $0x38] sm:$0xff]
  %v2275 = vpack.c.bf16 %v2262, %v2262
  %v2276 = vpack.c.bf16 %v2263, %v2263
  %2277 = vmatprep.subr.bf16.mxu0 %v1789
  %2278 = vmatpush1.bf16.msra.mxu0 %v1788
  %2279 = vmatprep.subr.bf16.mxu0 %v1797
  %2280 = vmatpush1.bf16.msra.mxu0 %v1796
  %2281 = vmatprep.subr.bf16.mxu0 %v1805
  %2282 = vmatpush1.bf16.msra.mxu0 %v1804
  %2283 = vmatprep.subr.bf16.mxu0 %v1813
  %2284 = vmatpush1.bf16.msra.mxu0 %v1812
  %2285 = vmatprep.subr.bf16.mxu0 %v1821
  %2286 = vmatpush1.bf16.msra.mxu0 %v1820
  %2287 = vmatprep.subr.bf16.mxu0 %v1829
  %2288 = vmatpush1.bf16.msra.mxu0 %v1828
  %2289 = vmatprep.subr.bf16.mxu0 %v1837
  %2290 = vmatpush1.bf16.msra.mxu0 %v1836
  %2291 = vmatprep.subr.bf16.mxu0 %v1845
  %2292 = vmatpush1.bf16.msra.mxu0 %v1844
  %2293 = vmatprep.subr.bf16.mxu0 %v1853
  %2294 = vmatpush1.bf16.msra.mxu0 %v1852
  %2295 = vmatprep.subr.bf16.mxu0 %v1861
  %2296 = vmatpush1.bf16.msra.mxu0 %v1860
  %2297 = vmatprep.subr.bf16.mxu0 %v1869
  %2298 = vmatpush1.bf16.msra.mxu0 %v1868
  %2299 = vmatprep.subr.bf16.mxu0 %v1877
  %2300 = vmatpush1.bf16.msra.mxu0 %v1876
  %2301 = vmatprep.subr.bf16.mxu0 %v1885
  %2302 = vmatpush1.bf16.msra.mxu0 %v1884
  %2303 = vmatprep.subr.bf16.mxu0 %v1893
  %2304 = vmatpush1.bf16.msra.mxu0 %v1892
  %2305 = vmatprep.subr.bf16.mxu0 %v1901
  %2306 = vmatpush1.bf16.msra.mxu0 %v1900
  %2307 = vmatprep.subr.bf16.mxu0 %v1909
  %2308 = vmatpush1.bf16.msra.mxu0 %v1908
  %2309 = vmatprep.mubr.bf16.mxu0 %v2276
  %2310 = vmatmul.mubr.bf16.gmra.mrb[0].mxu0 %v2275
  %v2311 = vpop.f32.mrb[0].mxu0
  %v2312 = vadd.f32 0.0, %v2311
  %v2313 = vpop.f32.mrb[0].mxu0
  %v2314 = vadd.f32 0.0, %v2313
  %v2315 = vpop.f32.mrb[0].mxu0
  %v2316 = vpop.f32.mrb[0].mxu0
  %2317 = vdwg.mxu0
  %2318 = vmatprep.subr.bf16.mxu0 %v1791
  %2319 = vmatpush1.bf16.msra.mxu0 %v1790
  %2320 = vmatprep.subr.bf16.mxu0 %v1799
  %2321 = vmatpush1.bf16.msra.mxu0 %v1798
  %2322 = vmatprep.subr.bf16.mxu0 %v1807
  %2323 = vmatpush1.bf16.msra.mxu0 %v1806
  %2324 = vmatprep.subr.bf16.mxu0 %v1815
  %2325 = vmatpush1.bf16.msra.mxu0 %v1814
  %2326 = vmatprep.subr.bf16.mxu0 %v1823
  %2327 = vmatpush1.bf16.msra.mxu0 %v1822
  %2328 = vmatprep.subr.bf16.mxu0 %v1831
  %2329 = vmatpush1.bf16.msra.mxu0 %v1830
  %2330 = vmatprep.subr.bf16.mxu0 %v1839
  %2331 = vmatpush1.bf16.msra.mxu0 %v1838
  %2332 = vmatprep.subr.bf16.mxu0 %v1847
  %2333 = vmatpush1.bf16.msra.mxu0 %v1846
  %2334 = vmatprep.subr.bf16.mxu0 %v1855
  %2335 = vmatpush1.bf16.msra.mxu0 %v1854
  %2336 = vmatprep.subr.bf16.mxu0 %v1863
  %2337 = vmatpush1.bf16.msra.mxu0 %v1862
  %2338 = vmatprep.subr.bf16.mxu0 %v1871
  %2339 = vmatpush1.bf16.msra.mxu0 %v1870
  %2340 = vmatprep.subr.bf16.mxu0 %v1879
  %2341 = vmatpush1.bf16.msra.mxu0 %v1878
  %2342 = vmatprep.subr.bf16.mxu0 %v1887
  %2343 = vmatpush1.bf16.msra.mxu0 %v1886
  %2344 = vmatprep.subr.bf16.mxu0 %v1895
  %2345 = vmatpush1.bf16.msra.mxu0 %v1894
  %2346 = vmatprep.subr.bf16.mxu0 %v1903
  %2347 = vmatpush1.bf16.msra.mxu0 %v1902
  %2348 = vmatprep.subr.bf16.mxu0 %v1911
  %2349 = vmatpush1.bf16.msra.mxu0 %v1910
  %2350 = vmatprep.mubr.bf16.mxu0 %v2276
  %2351 = vmatmul.mubr.bf16.gmra.mrb[0].mxu0 %v2275
  %v2352 = vpop.f32.mrb[0].mxu0
  %v2353 = vadd.f32 0.0, %v2352
  %v2354 = vpop.f32.mrb[0].mxu0
  %v2355 = vadd.f32 0.0, %v2354
  %v2356 = vpop.f32.mrb[0].mxu0
  %v2357 = vpop.f32.mrb[0].mxu0
  %2358 = vdwg.mxu0
  %2359 = vmatprep.subr.bf16.mxu0 %v1793
  %2360 = vmatpush1.bf16.msra.mxu0 %v1792
  %2361 = vmatprep.subr.bf16.mxu0 %v1801
  %2362 = vmatpush1.bf16.msra.mxu0 %v1800
  %2363 = vmatprep.subr.bf16.mxu0 %v1809
  %2364 = vmatpush1.bf16.msra.mxu0 %v1808
  %2365 = vmatprep.subr.bf16.mxu0 %v1817
  %2366 = vmatpush1.bf16.msra.mxu0 %v1816
  %2367 = vmatprep.subr.bf16.mxu0 %v1825
  %2368 = vmatpush1.bf16.msra.mxu0 %v1824
  %2369 = vmatprep.subr.bf16.mxu0 %v1833
  %2370 = vmatpush1.bf16.msra.mxu0 %v1832
  %2371 = vmatprep.subr.bf16.mxu0 %v1841
  %2372 = vmatpush1.bf16.msra.mxu0 %v1840
  %2373 = vmatprep.subr.bf16.mxu0 %v1849
  %2374 = vmatpush1.bf16.msra.mxu0 %v1848
  %2375 = vmatprep.subr.bf16.mxu0 %v1857
  %2376 = vmatpush1.bf16.msra.mxu0 %v1856
  %2377 = vmatprep.subr.bf16.mxu0 %v1865
  %2378 = vmatpush1.bf16.msra.mxu0 %v1864
  %2379 = vmatprep.subr.bf16.mxu0 %v1873
  %2380 = vmatpush1.bf16.msra.mxu0 %v1872
  %2381 = vmatprep.subr.bf16.mxu0 %v1881
  %2382 = vmatpush1.bf16.msra.mxu0 %v1880
  %2383 = vmatprep.subr.bf16.mxu0 %v1889
  %2384 = vmatpush1.bf16.msra.mxu0 %v1888
  %2385 = vmatprep.subr.bf16.mxu0 %v1897
  %2386 = vmatpush1.bf16.msra.mxu0 %v1896
  %2387 = vmatprep.subr.bf16.mxu0 %v1905
  %2388 = vmatpush1.bf16.msra.mxu0 %v1904
  %2389 = vmatprep.subr.bf16.mxu0 %v1913
  %2390 = vmatpush1.bf16.msra.mxu0 %v1912
  %2391 = vmatprep.mubr.bf16.mxu0 %v2276
  %2392 = vmatmul.mubr.bf16.gmra.mrb[0].mxu0 %v2275
  %v2393 = vpop.f32.mrb[0].mxu0
  %v2394 = vadd.f32 0.0, %v2393
  %v2395 = vpop.f32.mrb[0].mxu0
  %v2396 = vadd.f32 0.0, %v2395
  %v2397 = vpop.f32.mrb[0].mxu0
  %v2398 = vpop.f32.mrb[0].mxu0
  %2399 = vdwg.mxu0
  %2400 = vmatprep.subr.bf16.mxu0 %v1795
  %2401 = vmatpush1.bf16.msra.mxu0 %v1794
  %2402 = vmatprep.subr.bf16.mxu0 %v1803
  %2403 = vmatpush1.bf16.msra.mxu0 %v1802
  %2404 = vmatprep.subr.bf16.mxu0 %v1811
  %2405 = vmatpush1.bf16.msra.mxu0 %v1810
  %2406 = vmatprep.subr.bf16.mxu0 %v1819
  %2407 = vmatpush1.bf16.msra.mxu0 %v1818
  %2408 = vmatprep.subr.bf16.mxu0 %v1827
  %2409 = vmatpush1.bf16.msra.mxu0 %v1826
  %2410 = vmatprep.subr.bf16.mxu0 %v1835
  %2411 = vmatpush1.bf16.msra.mxu0 %v1834
  %2412 = vmatprep.subr.bf16.mxu0 %v1843
  %2413 = vmatpush1.bf16.msra.mxu0 %v1842
  %2414 = vmatprep.subr.bf16.mxu0 %v1851
  %2415 = vmatpush1.bf16.msra.mxu0 %v1850
  %2416 = vmatprep.subr.bf16.mxu0 %v1859
  %2417 = vmatpush1.bf16.msra.mxu0 %v1858
  %2418 = vmatprep.subr.bf16.mxu0 %v1867
  %2419 = vmatpush1.bf16.msra.mxu0 %v1866
  %2420 = vmatprep.subr.bf16.mxu0 %v1875
  %2421 = vmatpush1.bf16.msra.mxu0 %v1874
  %2422 = vmatprep.subr.bf16.mxu0 %v1883
  %2423 = vmatpush1.bf16.msra.mxu0 %v1882
  %2424 = vmatprep.subr.bf16.mxu0 %v1891
  %2425 = vmatpush1.bf16.msra.mxu0 %v1890
  %2426 = vmatprep.subr.bf16.mxu0 %v1899
  %2427 = vmatpush1.bf16.msra.mxu0 %v1898
  %2428 = vmatprep.subr.bf16.mxu0 %v1907
  %2429 = vmatpush1.bf16.msra.mxu0 %v1906
  %2430 = vmatprep.subr.bf16.mxu0 %v1915
  %2431 = vmatpush1.bf16.msra.mxu0 %v1914
  %2432 = vmatprep.mubr.bf16.mxu0 %v2276
  %2433 = vmatmul.mubr.bf16.gmra.mrb[0].mxu0 %v2275
  %v2434 = vpop.f32.mrb[0].mxu0
  %v2435 = vadd.f32 0.0, %v2434
  %v2436 = vpop.f32.mrb[0].mxu0
  %v2437 = vadd.f32 0.0, %v2436
  %v2438 = vpop.f32.mrb[0].mxu0
  %v2439 = vpop.f32.mrb[0].mxu0
  %2440 = vdwg.mxu0
  %v2441 = vadd.f32 %v2267, %v2312
  %v2442 = vadd.f32 %v2268, %v2314
  %v2443 = vadd.f32 %v2269, %v2353
  %v2444 = vadd.f32 %v2270, %v2355
  %v2445 = vadd.f32 %v2271, %v2394
  %v2446 = vadd.f32 %v2272, %v2396
  %v2447 = vadd.f32 %v2273, %v2435
  %v2448 = vadd.f32 %v2274, %v2437
  %v2449 = vxor.u32 %v2441, 2147483648
  %v2450 = vxor.u32 %v2442, 2147483648
  %v2451 = vmul.f32 %v2449, 1.442695
  %v2452 = vpow.pop %v2451
  %v2453 = vmul.f32 %v2450, 1.442695
  %v2454 = vpow.pop %v2453
  %v2455 = vadd.f32 %v2452, 1.0
  %v2456 = vadd.f32 %v2454, 1.0
  %v2457 = vrcp.pop %v2455
  %v2458 = vmul.f32 1.0, %v2457
  %v2459 = vrcp.pop %v2456
  %v2460 = vmul.f32 1.0, %v2459
  %v2461 = vxor.u32 %v2443, 2147483648
  %v2462 = vxor.u32 %v2444, 2147483648
  %v2463 = vmul.f32 %v2461, 1.442695
  %v2464 = vpow.pop %v2463
  %v2465 = vmul.f32 %v2462, 1.442695
  %v2466 = vpow.pop %v2465
  %v2467 = vadd.f32 %v2464, 1.0
  %v2468 = vadd.f32 %v2466, 1.0
  %v2469 = vrcp.pop %v2467
  %v2470 = vmul.f32 1.0, %v2469
  %v2471 = vrcp.pop %v2468
  %v2472 = vmul.f32 1.0, %v2471
  %v2473 = vtanh.pop %v2445
  %v2474 = vtanh.pop %v2446
  %v2475 = vxor.u32 %v2447, 2147483648
  %v2476 = vxor.u32 %v2448, 2147483648
  %v2477 = vmul.f32 %v2475, 1.442695
  %v2478 = vpow.pop %v2477
  %v2479 = vmul.f32 %v2476, 1.442695
  %v2480 = vpow.pop %v2479
  %v2481 = vadd.f32 %v2478, 1.0
  %v2482 = vadd.f32 %v2480, 1.0
  %v2483 = vrcp.pop %v2481
  %v2484 = vmul.f32 1.0, %v2483
  %v2485 = vrcp.pop %v2482
  %v2486 = vmul.f32 1.0, %v2485
  %v2487 = vmul.f32 %v2470, %v2258
  %v2488 = vmul.f32 %v2472, %v2259
  %v2489 = vmul.f32 %v2458, %v2473
  %v2490 = vmul.f32 %v2460, %v2474
  %v2491 = vadd.f32 %v2487, %v2489
  %v2492 = vadd.f32 %v2488, %v2490
  %v2493 = vtanh.pop %v2491
  %v2494 = vtanh.pop %v2492
  %v2495 = vmul.f32 %v2484, %v2493
  %v2496 = vmul.f32 %v2486, %v2494
  %s2497 = smul.u32 2, 8
  %s2498 = smul.addr %s2497, 8
  %s2499 = scalar_lea.vmem [#allocation2], %s2498
  %v2500 = vld [vmem:[%s2499] sm:$0xff]
  %v2501 = vld [vmem:[%s2499 + $0x8] sm:$0xff]
  %v2502 = vld [vmem:[%s2499 + $0x10] sm:$0xff]
  %v2503 = vld [vmem:[%s2499 + $0x18] sm:$0xff]
  %v2504 = vld [vmem:[%s2499 + $0x20] sm:$0xff]
  %v2505 = vld [vmem:[%s2499 + $0x28] sm:$0xff]
  %v2506 = vld [vmem:[%s2499 + $0x30] sm:$0xff]
  %v2507 = vld [vmem:[%s2499 + $0x38] sm:$0xff]
  %v2508 = vpack.c.bf16 %v2495, %v2495
  %v2509 = vpack.c.bf16 %v2496, %v2496
  %2510 = vmatprep.subr.bf16.mxu0 %v1789
  %2511 = vmatpush1.bf16.msra.mxu0 %v1788
  %2512 = vmatprep.subr.bf16.mxu0 %v1797
  %2513 = vmatpush1.bf16.msra.mxu0 %v1796
  %2514 = vmatprep.subr.bf16.mxu0 %v1805
  %2515 = vmatpush1.bf16.msra.mxu0 %v1804
  %2516 = vmatprep.subr.bf16.mxu0 %v1813
  %2517 = vmatpush1.bf16.msra.mxu0 %v1812
  %2518 = vmatprep.subr.bf16.mxu0 %v1821
  %2519 = vmatpush1.bf16.msra.mxu0 %v1820
  %2520 = vmatprep.subr.bf16.mxu0 %v1829
  %2521 = vmatpush1.bf16.msra.mxu0 %v1828
  %2522 = vmatprep.subr.bf16.mxu0 %v1837
  %2523 = vmatpush1.bf16.msra.mxu0 %v1836
  %2524 = vmatprep.subr.bf16.mxu0 %v1845
  %2525 = vmatpush1.bf16.msra.mxu0 %v1844
  %2526 = vmatprep.subr.bf16.mxu0 %v1853
  %2527 = vmatpush1.bf16.msra.mxu0 %v1852
  %2528 = vmatprep.subr.bf16.mxu0 %v1861
  %2529 = vmatpush1.bf16.msra.mxu0 %v1860
  %2530 = vmatprep.subr.bf16.mxu0 %v1869
  %2531 = vmatpush1.bf16.msra.mxu0 %v1868
  %2532 = vmatprep.subr.bf16.mxu0 %v1877
  %2533 = vmatpush1.bf16.msra.mxu0 %v1876
  %2534 = vmatprep.subr.bf16.mxu0 %v1885
  %2535 = vmatpush1.bf16.msra.mxu0 %v1884
  %2536 = vmatprep.subr.bf16.mxu0 %v1893
  %2537 = vmatpush1.bf16.msra.mxu0 %v1892
  %2538 = vmatprep.subr.bf16.mxu0 %v1901
  %2539 = vmatpush1.bf16.msra.mxu0 %v1900
  %2540 = vmatprep.subr.bf16.mxu0 %v1909
  %2541 = vmatpush1.bf16.msra.mxu0 %v1908
  %2542 = vmatprep.mubr.bf16.mxu0 %v2509
  %2543 = vmatmul.mubr.bf16.gmra.mrb[0].mxu0 %v2508
  %v2544 = vpop.f32.mrb[0].mxu0
  %v2545 = vadd.f32 0.0, %v2544
  %v2546 = vpop.f32.mrb[0].mxu0
  %v2547 = vadd.f32 0.0, %v2546
  %v2548 = vpop.f32.mrb[0].mxu0
  %v2549 = vpop.f32.mrb[0].mxu0
  %2550 = vdwg.mxu0
  %2551 = vmatprep.subr.bf16.mxu0 %v1791
  %2552 = vmatpush1.bf16.msra.mxu0 %v1790
  %2553 = vmatprep.subr.bf16.mxu0 %v1799
  %2554 = vmatpush1.bf16.msra.mxu0 %v1798
  %2555 = vmatprep.subr.bf16.mxu0 %v1807
  %2556 = vmatpush1.bf16.msra.mxu0 %v1806
  %2557 = vmatprep.subr.bf16.mxu0 %v1815
  %2558 = vmatpush1.bf16.msra.mxu0 %v1814
  %2559 = vmatprep.subr.bf16.mxu0 %v1823
  %2560 = vmatpush1.bf16.msra.mxu0 %v1822
  %2561 = vmatprep.subr.bf16.mxu0 %v1831
  %2562 = vmatpush1.bf16.msra.mxu0 %v1830
  %2563 = vmatprep.subr.bf16.mxu0 %v1839
  %2564 = vmatpush1.bf16.msra.mxu0 %v1838
  %2565 = vmatprep.subr.bf16.mxu0 %v1847
  %2566 = vmatpush1.bf16.msra.mxu0 %v1846
  %2567 = vmatprep.subr.bf16.mxu0 %v1855
  %2568 = vmatpush1.bf16.msra.mxu0 %v1854
  %2569 = vmatprep.subr.bf16.mxu0 %v1863
  %2570 = vmatpush1.bf16.msra.mxu0 %v1862
  %2571 = vmatprep.subr.bf16.mxu0 %v1871
  %2572 = vmatpush1.bf16.msra.mxu0 %v1870
  %2573 = vmatprep.subr.bf16.mxu0 %v1879
  %2574 = vmatpush1.bf16.msra.mxu0 %v1878
  %2575 = vmatprep.subr.bf16.mxu0 %v1887
  %2576 = vmatpush1.bf16.msra.mxu0 %v1886
  %2577 = vmatprep.subr.bf16.mxu0 %v1895
  %2578 = vmatpush1.bf16.msra.mxu0 %v1894
  %2579 = vmatprep.subr.bf16.mxu0 %v1903
  %2580 = vmatpush1.bf16.msra.mxu0 %v1902
  %2581 = vmatprep.subr.bf16.mxu0 %v1911
  %2582 = vmatpush1.bf16.msra.mxu0 %v1910
  %2583 = vmatprep.mubr.bf16.mxu0 %v2509
  %2584 = vmatmul.mubr.bf16.gmra.mrb[0].mxu0 %v2508
  %v2585 = vpop.f32.mrb[0].mxu0
  %v2586 = vadd.f32 0.0, %v2585
  %v2587 = vpop.f32.mrb[0].mxu0
  %v2588 = vadd.f32 0.0, %v2587
  %v2589 = vpop.f32.mrb[0].mxu0
  %v2590 = vpop.f32.mrb[0].mxu0
  %2591 = vdwg.mxu0
  %2592 = vmatprep.subr.bf16.mxu0 %v1793
  %2593 = vmatpush1.bf16.msra.mxu0 %v1792
  %2594 = vmatprep.subr.bf16.mxu0 %v1801
  %2595 = vmatpush1.bf16.msra.mxu0 %v1800
  %2596 = vmatprep.subr.bf16.mxu0 %v1809
  %2597 = vmatpush1.bf16.msra.mxu0 %v1808
  %2598 = vmatprep.subr.bf16.mxu0 %v1817
  %2599 = vmatpush1.bf16.msra.mxu0 %v1816
  %2600 = vmatprep.subr.bf16.mxu0 %v1825
  %2601 = vmatpush1.bf16.msra.mxu0 %v1824
  %2602 = vmatprep.subr.bf16.mxu0 %v1833
  %2603 = vmatpush1.bf16.msra.mxu0 %v1832
  %2604 = vmatprep.subr.bf16.mxu0 %v1841
  %2605 = vmatpush1.bf16.msra.mxu0 %v1840
  %2606 = vmatprep.subr.bf16.mxu0 %v1849
  %2607 = vmatpush1.bf16.msra.mxu0 %v1848
  %2608 = vmatprep.subr.bf16.mxu0 %v1857
  %2609 = vmatpush1.bf16.msra.mxu0 %v1856
  %2610 = vmatprep.subr.bf16.mxu0 %v1865
  %2611 = vmatpush1.bf16.msra.mxu0 %v1864
  %2612 = vmatprep.subr.bf16.mxu0 %v1873
  %2613 = vmatpush1.bf16.msra.mxu0 %v1872
  %2614 = vmatprep.subr.bf16.mxu0 %v1881
  %2615 = vmatpush1.bf16.msra.mxu0 %v1880
  %2616 = vmatprep.subr.bf16.mxu0 %v1889
  %2617 = vmatpush1.bf16.msra.mxu0 %v1888
  %2618 = vmatprep.subr.bf16.mxu0 %v1897
  %2619 = vmatpush1.bf16.msra.mxu0 %v1896
  %2620 = vmatprep.subr.bf16.mxu0 %v1905
  %2621 = vmatpush1.bf16.msra.mxu0 %v1904
  %2622 = vmatprep.subr.bf16.mxu0 %v1913
  %2623 = vmatpush1.bf16.msra.mxu0 %v1912
  %2624 = vmatprep.mubr.bf16.mxu0 %v2509
  %2625 = vmatmul.mubr.bf16.gmra.mrb[0].mxu0 %v2508
  %v2626 = vpop.f32.mrb[0].mxu0
  %v2627 = vadd.f32 0.0, %v2626
  %v2628 = vpop.f32.mrb[0].mxu0
  %v2629 = vadd.f32 0.0, %v2628
  %v2630 = vpop.f32.mrb[0].mxu0
  %v2631 = vpop.f32.mrb[0].mxu0
  %2632 = vdwg.mxu0
  %2633 = vmatprep.subr.bf16.mxu0 %v1795
  %2634 = vmatpush1.bf16.msra.mxu0 %v1794
  %2635 = vmatprep.subr.bf16.mxu0 %v1803
  %2636 = vmatpush1.bf16.msra.mxu0 %v1802
  %2637 = vmatprep.subr.bf16.mxu0 %v1811
  %2638 = vmatpush1.bf16.msra.mxu0 %v1810
  %2639 = vmatprep.subr.bf16.mxu0 %v1819
  %2640 = vmatpush1.bf16.msra.mxu0 %v1818
  %2641 = vmatprep.subr.bf16.mxu0 %v1827
  %2642 = vmatpush1.bf16.msra.mxu0 %v1826
  %2643 = vmatprep.subr.bf16.mxu0 %v1835
  %2644 = vmatpush1.bf16.msra.mxu0 %v1834
  %2645 = vmatprep.subr.bf16.mxu0 %v1843
  %2646 = vmatpush1.bf16.msra.mxu0 %v1842
  %2647 = vmatprep.subr.bf16.mxu0 %v1851
  %2648 = vmatpush1.bf16.msra.mxu0 %v1850
  %2649 = vmatprep.subr.bf16.mxu0 %v1859
  %2650 = vmatpush1.bf16.msra.mxu0 %v1858
  %2651 = vmatprep.subr.bf16.mxu0 %v1867
  %2652 = vmatpush1.bf16.msra.mxu0 %v1866
  %2653 = vmatprep.subr.bf16.mxu0 %v1875
  %2654 = vmatpush1.bf16.msra.mxu0 %v1874
  %2655 = vmatprep.subr.bf16.mxu0 %v1883
  %2656 = vmatpush1.bf16.msra.mxu0 %v1882
  %2657 = vmatprep.subr.bf16.mxu0 %v1891
  %2658 = vmatpush1.bf16.msra.mxu0 %v1890
  %2659 = vmatprep.subr.bf16.mxu0 %v1899
  %2660 = vmatpush1.bf16.msra.mxu0 %v1898
  %2661 = vmatprep.subr.bf16.mxu0 %v1907
  %2662 = vmatpush1.bf16.msra.mxu0 %v1906
  %2663 = vmatprep.subr.bf16.mxu0 %v1915
  %2664 = vmatpush1.bf16.msra.mxu0 %v1914
  %2665 = vmatprep.mubr.bf16.mxu0 %v2509
  %2666 = vmatmul.mubr.bf16.gmra.mrb[0].mxu0 %v2508
  %v2667 = vpop.f32.mrb[0].mxu0
  %v2668 = vadd.f32 0.0, %v2667
  %v2669 = vpop.f32.mrb[0].mxu0
  %v2670 = vadd.f32 0.0, %v2669
  %v2671 = vpop.f32.mrb[0].mxu0
  %v2672 = vpop.f32.mrb[0].mxu0
  %2673 = vdwg.mxu0
  %v2674 = vadd.f32 %v2500, %v2545
  %v2675 = vadd.f32 %v2501, %v2547
  %v2676 = vadd.f32 %v2502, %v2586
  %v2677 = vadd.f32 %v2503, %v2588
  %v2678 = vadd.f32 %v2504, %v2627
  %v2679 = vadd.f32 %v2505, %v2629
  %v2680 = vadd.f32 %v2506, %v2668
  %v2681 = vadd.f32 %v2507, %v2670
  %v2682 = vxor.u32 %v2674, 2147483648
  %v2683 = vxor.u32 %v2675, 2147483648
  %v2684 = vmul.f32 %v2682, 1.442695
  %v2685 = vpow.pop %v2684
  %v2686 = vmul.f32 %v2683, 1.442695
  %v2687 = vpow.pop %v2686
  %v2688 = vadd.f32 %v2685, 1.0
  %v2689 = vadd.f32 %v2687, 1.0
  %v2690 = vrcp.pop %v2688
  %v2691 = vmul.f32 1.0, %v2690
  %v2692 = vrcp.pop %v2689
  %v2693 = vmul.f32 1.0, %v2692
  %v2694 = vxor.u32 %v2676, 2147483648
  %v2695 = vxor.u32 %v2677, 2147483648
  %v2696 = vmul.f32 %v2694, 1.442695
  %v2697 = vpow.pop %v2696
  %v2698 = vmul.f32 %v2695, 1.442695
  %v2699 = vpow.pop %v2698
  %v2700 = vadd.f32 %v2697, 1.0
  %v2701 = vadd.f32 %v2699, 1.0
  %v2702 = vrcp.pop %v2700
  %v2703 = vmul.f32 1.0, %v2702
  %v2704 = vrcp.pop %v2701
  %v2705 = vmul.f32 1.0, %v2704
  %v2706 = vtanh.pop %v2678
  %v2707 = vtanh.pop %v2679
  %v2708 = vxor.u32 %v2680, 2147483648
  %v2709 = vxor.u32 %v2681, 2147483648
  %v2710 = vmul.f32 %v2708, 1.442695
  %v2711 = vpow.pop %v2710
  %v2712 = vmul.f32 %v2709, 1.442695
  %v2713 = vpow.pop %v2712
  %v2714 = vadd.f32 %v2711, 1.0
  %v2715 = vadd.f32 %v2713, 1.0
  %v2716 = vrcp.pop %v2714
  %v2717 = vmul.f32 1.0, %v2716
  %v2718 = vrcp.pop %v2715
  %v2719 = vmul.f32 1.0, %v2718
  %v2720 = vmul.f32 %v2703, %v2491
  %v2721 = vmul.f32 %v2705, %v2492
  %v2722 = vmul.f32 %v2691, %v2706
  %v2723 = vmul.f32 %v2693, %v2707
  %v2724 = vadd.f32 %v2720, %v2722
  %v2725 = vadd.f32 %v2721, %v2723
  %v2726 = vtanh.pop %v2724
  %v2727 = vtanh.pop %v2725
  %v2728 = vmul.f32 %v2717, %v2726
  %v2729 = vmul.f32 %v2719, %v2727
  %s2730 = smul.u32 3, 8
  %s2731 = smul.addr %s2730, 8
  %s2732 = scalar_lea.vmem [#allocation2], %s2731
  %v2733 = vld [vmem:[%s2732] sm:$0xff]
  %v2734 = vld [vmem:[%s2732 + $0x8] sm:$0xff]
  %v2735 = vld [vmem:[%s2732 + $0x10] sm:$0xff]
  %v2736 = vld [vmem:[%s2732 + $0x18] sm:$0xff]
  %v2737 = vld [vmem:[%s2732 + $0x20] sm:$0xff]
  %v2738 = vld [vmem:[%s2732 + $0x28] sm:$0xff]
  %v2739 = vld [vmem:[%s2732 + $0x30] sm:$0xff]
  %v2740 = vld [vmem:[%s2732 + $0x38] sm:$0xff]
  %v2741 = vpack.c.bf16 %v2728, %v2728
  %v2742 = vpack.c.bf16 %v2729, %v2729
  %2743 = vmatprep.subr.bf16.mxu0 %v1789
  %2744 = vmatpush1.bf16.msra.mxu0 %v1788
  %2745 = vmatprep.subr.bf16.mxu0 %v1797
  %2746 = vmatpush1.bf16.msra.mxu0 %v1796
  %2747 = vmatprep.subr.bf16.mxu0 %v1805
  %2748 = vmatpush1.bf16.msra.mxu0 %v1804
  %2749 = vmatprep.subr.bf16.mxu0 %v1813
  %2750 = vmatpush1.bf16.msra.mxu0 %v1812
  %2751 = vmatprep.subr.bf16.mxu0 %v1821
  %2752 = vmatpush1.bf16.msra.mxu0 %v1820
  %2753 = vmatprep.subr.bf16.mxu0 %v1829
  %2754 = vmatpush1.bf16.msra.mxu0 %v1828
  %2755 = vmatprep.subr.bf16.mxu0 %v1837
  %2756 = vmatpush1.bf16.msra.mxu0 %v1836
  %2757 = vmatprep.subr.bf16.mxu0 %v1845
  %2758 = vmatpush1.bf16.msra.mxu0 %v1844
  %2759 = vmatprep.subr.bf16.mxu0 %v1853
  %2760 = vmatpush1.bf16.msra.mxu0 %v1852
  %2761 = vmatprep.subr.bf16.mxu0 %v1861
  %2762 = vmatpush1.bf16.msra.mxu0 %v1860
  %2763 = vmatprep.subr.bf16.mxu0 %v1869
  %2764 = vmatpush1.bf16.msra.mxu0 %v1868
  %2765 = vmatprep.subr.bf16.mxu0 %v1877
  %2766 = vmatpush1.bf16.msra.mxu0 %v1876
  %2767 = vmatprep.subr.bf16.mxu0 %v1885
  %2768 = vmatpush1.bf16.msra.mxu0 %v1884
  %2769 = vmatprep.subr.bf16.mxu0 %v1893
  %2770 = vmatpush1.bf16.msra.mxu0 %v1892
  %2771 = vmatprep.subr.bf16.mxu0 %v1901
  %2772 = vmatpush1.bf16.msra.mxu0 %v1900
  %2773 = vmatprep.subr.bf16.mxu0 %v1909
  %2774 = vmatpush1.bf16.msra.mxu0 %v1908
  %2775 = vmatprep.mubr.bf16.mxu0 %v2742
  %2776 = vmatmul.mubr.bf16.gmra.mrb[0].mxu0 %v2741
  %v2777 = vpop.f32.mrb[0].mxu0
  %v2778 = vadd.f32 0.0, %v2777
  %v2779 = vpop.f32.mrb[0].mxu0
  %v2780 = vadd.f32 0.0, %v2779
  %v2781 = vpop.f32.mrb[0].mxu0
  %v2782 = vpop.f32.mrb[0].mxu0
  %2783 = vdwg.mxu0
  %2784 = vmatprep.subr.bf16.mxu0 %v1791
  %2785 = vmatpush1.bf16.msra.mxu0 %v1790
  %2786 = vmatprep.subr.bf16.mxu0 %v1799
  %2787 = vmatpush1.bf16.msra.mxu0 %v1798
  %2788 = vmatprep.subr.bf16.mxu0 %v1807
  %2789 = vmatpush1.bf16.msra.mxu0 %v1806
  %2790 = vmatprep.subr.bf16.mxu0 %v1815
  %2791 = vmatpush1.bf16.msra.mxu0 %v1814
  %2792 = vmatprep.subr.bf16.mxu0 %v1823
  %2793 = vmatpush1.bf16.msra.mxu0 %v1822
  %2794 = vmatprep.subr.bf16.mxu0 %v1831
  %2795 = vmatpush1.bf16.msra.mxu0 %v1830
  %2796 = vmatprep.subr.bf16.mxu0 %v1839
  %2797 = vmatpush1.bf16.msra.mxu0 %v1838
  %2798 = vmatprep.subr.bf16.mxu0 %v1847
  %2799 = vmatpush1.bf16.msra.mxu0 %v1846
  %2800 = vmatprep.subr.bf16.mxu0 %v1855
  %2801 = vmatpush1.bf16.msra.mxu0 %v1854
  %2802 = vmatprep.subr.bf16.mxu0 %v1863
  %2803 = vmatpush1.bf16.msra.mxu0 %v1862
  %2804 = vmatprep.subr.bf16.mxu0 %v1871
  %2805 = vmatpush1.bf16.msra.mxu0 %v1870
  %2806 = vmatprep.subr.bf16.mxu0 %v1879
  %2807 = vmatpush1.bf16.msra.mxu0 %v1878
  %2808 = vmatprep.subr.bf16.mxu0 %v1887
  %2809 = vmatpush1.bf16.msra.mxu0 %v1886
  %2810 = vmatprep.subr.bf16.mxu0 %v1895
  %2811 = vmatpush1.bf16.msra.mxu0 %v1894
  %2812 = vmatprep.subr.bf16.mxu0 %v1903
  %2813 = vmatpush1.bf16.msra.mxu0 %v1902
  %2814 = vmatprep.subr.bf16.mxu0 %v1911
  %2815 = vmatpush1.bf16.msra.mxu0 %v1910
  %2816 = vmatprep.mubr.bf16.mxu0 %v2742
  %2817 = vmatmul.mubr.bf16.gmra.mrb[0].mxu0 %v2741
  %v2818 = vpop.f32.mrb[0].mxu0
  %v2819 = vadd.f32 0.0, %v2818
  %v2820 = vpop.f32.mrb[0].mxu0
  %v2821 = vadd.f32 0.0, %v2820
  %v2822 = vpop.f32.mrb[0].mxu0
  %v2823 = vpop.f32.mrb[0].mxu0
  %2824 = vdwg.mxu0
  %2825 = vmatprep.subr.bf16.mxu0 %v1793
  %2826 = vmatpush1.bf16.msra.mxu0 %v1792
  %2827 = vmatprep.subr.bf16.mxu0 %v1801
  %2828 = vmatpush1.bf16.msra.mxu0 %v1800
  %2829 = vmatprep.subr.bf16.mxu0 %v1809
  %2830 = vmatpush1.bf16.msra.mxu0 %v1808
  %2831 = vmatprep.subr.bf16.mxu0 %v1817
  %2832 = vmatpush1.bf16.msra.mxu0 %v1816
  %2833 = vmatprep.subr.bf16.mxu0 %v1825
  %2834 = vmatpush1.bf16.msra.mxu0 %v1824
  %2835 = vmatprep.subr.bf16.mxu0 %v1833
  %2836 = vmatpush1.bf16.msra.mxu0 %v1832
  %2837 = vmatprep.subr.bf16.mxu0 %v1841
  %2838 = vmatpush1.bf16.msra.mxu0 %v1840
  %2839 = vmatprep.subr.bf16.mxu0 %v1849
  %2840 = vmatpush1.bf16.msra.mxu0 %v1848
  %2841 = vmatprep.subr.bf16.mxu0 %v1857
  %2842 = vmatpush1.bf16.msra.mxu0 %v1856
  %2843 = vmatprep.subr.bf16.mxu0 %v1865
  %2844 = vmatpush1.bf16.msra.mxu0 %v1864
  %2845 = vmatprep.subr.bf16.mxu0 %v1873
  %2846 = vmatpush1.bf16.msra.mxu0 %v1872
  %2847 = vmatprep.subr.bf16.mxu0 %v1881
  %2848 = vmatpush1.bf16.msra.mxu0 %v1880
  %2849 = vmatprep.subr.bf16.mxu0 %v1889
  %2850 = vmatpush1.bf16.msra.mxu0 %v1888
  %2851 = vmatprep.subr.bf16.mxu0 %v1897
  %2852 = vmatpush1.bf16.msra.mxu0 %v1896
  %2853 = vmatprep.subr.bf16.mxu0 %v1905
  %2854 = vmatpush1.bf16.msra.mxu0 %v1904
  %2855 = vmatprep.subr.bf16.mxu0 %v1913
  %2856 = vmatpush1.bf16.msra.mxu0 %v1912
  %2857 = vmatprep.mubr.bf16.mxu0 %v2742
  %2858 = vmatmul.mubr.bf16.gmra.mrb[0].mxu0 %v2741
  %v2859 = vpop.f32.mrb[0].mxu0
  %v2860 = vadd.f32 0.0, %v2859
  %v2861 = vpop.f32.mrb[0].mxu0
  %v2862 = vadd.f32 0.0, %v2861
  %v2863 = vpop.f32.mrb[0].mxu0
  %v2864 = vpop.f32.mrb[0].mxu0
  %2865 = vdwg.mxu0
  %2866 = vmatprep.subr.bf16.mxu0 %v1795
  %2867 = vmatpush1.bf16.msra.mxu0 %v1794
  %2868 = vmatprep.subr.bf16.mxu0 %v1803
  %2869 = vmatpush1.bf16.msra.mxu0 %v1802
  %2870 = vmatprep.subr.bf16.mxu0 %v1811
  %2871 = vmatpush1.bf16.msra.mxu0 %v1810
  %2872 = vmatprep.subr.bf16.mxu0 %v1819
  %2873 = vmatpush1.bf16.msra.mxu0 %v1818
  %2874 = vmatprep.subr.bf16.mxu0 %v1827
  %2875 = vmatpush1.bf16.msra.mxu0 %v1826
  %2876 = vmatprep.subr.bf16.mxu0 %v1835
  %2877 = vmatpush1.bf16.msra.mxu0 %v1834
  %2878 = vmatprep.subr.bf16.mxu0 %v1843
  %2879 = vmatpush1.bf16.msra.mxu0 %v1842
  %2880 = vmatprep.subr.bf16.mxu0 %v1851
  %2881 = vmatpush1.bf16.msra.mxu0 %v1850
  %2882 = vmatprep.subr.bf16.mxu0 %v1859
  %2883 = vmatpush1.bf16.msra.mxu0 %v1858
  %2884 = vmatprep.subr.bf16.mxu0 %v1867
  %2885 = vmatpush1.bf16.msra.mxu0 %v1866
  %2886 = vmatprep.subr.bf16.mxu0 %v1875
  %2887 = vmatpush1.bf16.msra.mxu0 %v1874
  %2888 = vmatprep.subr.bf16.mxu0 %v1883
  %2889 = vmatpush1.bf16.msra.mxu0 %v1882
  %2890 = vmatprep.subr.bf16.mxu0 %v1891
  %2891 = vmatpush1.bf16.msra.mxu0 %v1890
  %2892 = vmatprep.subr.bf16.mxu0 %v1899
  %2893 = vmatpush1.bf16.msra.mxu0 %v1898
  %2894 = vmatprep.subr.bf16.mxu0 %v1907
  %2895 = vmatpush1.bf16.msra.mxu0 %v1906
  %2896 = vmatprep.subr.bf16.mxu0 %v1915
  %2897 = vmatpush1.bf16.msra.mxu0 %v1914
  %2898 = vmatprep.mubr.bf16.mxu0 %v2742
  %2899 = vmatmul.mubr.bf16.gmra.mrb[0].mxu0 %v2741
  %v2900 = vpop.f32.mrb[0].mxu0
  %v2901 = vadd.f32 0.0, %v2900
  %v2902 = vpop.f32.mrb[0].mxu0
  %v2903 = vadd.f32 0.0, %v2902
  %v2904 = vpop.f32.mrb[0].mxu0
  %v2905 = vpop.f32.mrb[0].mxu0
  %2906 = vdwg.mxu0
  %v2907 = vadd.f32 %v2733, %v2778
  %v2908 = vadd.f32 %v2734, %v2780
  %v2909 = vadd.f32 %v2735, %v2819
  %v2910 = vadd.f32 %v2736, %v2821
  %v2911 = vadd.f32 %v2737, %v2860
  %v2912 = vadd.f32 %v2738, %v2862
  %v2913 = vadd.f32 %v2739, %v2901
  %v2914 = vadd.f32 %v2740, %v2903
  %v2915 = vxor.u32 %v2907, 2147483648
  %v2916 = vxor.u32 %v2908, 2147483648
  %v2917 = vmul.f32 %v2915, 1.442695
  %v2918 = vpow.pop %v2917
  %v2919 = vmul.f32 %v2916, 1.442695
  %v2920 = vpow.pop %v2919
  %v2921 = vadd.f32 %v2918, 1.0
  %v2922 = vadd.f32 %v2920, 1.0
  %v2923 = vrcp.pop %v2921
  %v2924 = vmul.f32 1.0, %v2923
  %v2925 = vrcp.pop %v2922
  %v2926 = vmul.f32 1.0, %v2925
  %v2927 = vxor.u32 %v2909, 2147483648
  %v2928 = vxor.u32 %v2910, 2147483648
  %v2929 = vmul.f32 %v2927, 1.442695
  %v2930 = vpow.pop %v2929
  %v2931 = vmul.f32 %v2928, 1.442695
  %v2932 = vpow.pop %v2931
  %v2933 = vadd.f32 %v2930, 1.0
  %v2934 = vadd.f32 %v2932, 1.0
  %v2935 = vrcp.pop %v2933
  %v2936 = vmul.f32 1.0, %v2935
  %v2937 = vrcp.pop %v2934
  %v2938 = vmul.f32 1.0, %v2937
  %v2939 = vtanh.pop %v2911
  %v2940 = vtanh.pop %v2912
  %v2941 = vxor.u32 %v2913, 2147483648
  %v2942 = vxor.u32 %v2914, 2147483648
  %v2943 = vmul.f32 %v2941, 1.442695
  %v2944 = vpow.pop %v2943
  %v2945 = vmul.f32 %v2942, 1.442695
  %v2946 = vpow.pop %v2945
  %v2947 = vadd.f32 %v2944, 1.0
  %v2948 = vadd.f32 %v2946, 1.0
  %v2949 = vrcp.pop %v2947
  %v2950 = vmul.f32 1.0, %v2949
  %v2951 = vrcp.pop %v2948
  %v2952 = vmul.f32 1.0, %v2951
  %v2953 = vmul.f32 %v2936, %v2724
  %v2954 = vmul.f32 %v2938, %v2725
  %v2955 = vmul.f32 %v2924, %v2939
  %v2956 = vmul.f32 %v2926, %v2940
  %v2957 = vadd.f32 %v2953, %v2955
  %v2958 = vadd.f32 %v2954, %v2956
  %v2959 = vtanh.pop %v2957
  %v2960 = vtanh.pop %v2958
  %v2961 = vmul.f32 %v2950, %v2959
  %v2962 = vmul.f32 %v2952, %v2960
  %s2963 = smul.u32 4, 8
  %s2964 = smul.addr %s2963, 8
  %s2965 = scalar_lea.vmem [#allocation2], %s2964
  %v2966 = vld [vmem:[%s2965] sm:$0xff]
  %v2967 = vld [vmem:[%s2965 + $0x8] sm:$0xff]
  %v2968 = vld [vmem:[%s2965 + $0x10] sm:$0xff]
  %v2969 = vld [vmem:[%s2965 + $0x18] sm:$0xff]
  %v2970 = vld [vmem:[%s2965 + $0x20] sm:$0xff]
  %v2971 = vld [vmem:[%s2965 + $0x28] sm:$0xff]
  %v2972 = vld [vmem:[%s2965 + $0x30] sm:$0xff]
  %v2973 = vld [vmem:[%s2965 + $0x38] sm:$0xff]
  %v2974 = vpack.c.bf16 %v2961, %v2961
  %v2975 = vpack.c.bf16 %v2962, %v2962
  %2976 = vmatprep.subr.bf16.mxu0 %v1789
  %2977 = vmatpush1.bf16.msra.mxu0 %v1788
  %2978 = vmatprep.subr.bf16.mxu0 %v1797
  %2979 = vmatpush1.bf16.msra.mxu0 %v1796
  %2980 = vmatprep.subr.bf16.mxu0 %v1805
  %2981 = vmatpush1.bf16.msra.mxu0 %v1804
  %2982 = vmatprep.subr.bf16.mxu0 %v1813
  %2983 = vmatpush1.bf16.msra.mxu0 %v1812
  %2984 = vmatprep.subr.bf16.mxu0 %v1821
  %2985 = vmatpush1.bf16.msra.mxu0 %v1820
  %2986 = vmatprep.subr.bf16.mxu0 %v1829
  %2987 = vmatpush1.bf16.msra.mxu0 %v1828
  %2988 = vmatprep.subr.bf16.mxu0 %v1837
  %2989 = vmatpush1.bf16.msra.mxu0 %v1836
  %2990 = vmatprep.subr.bf16.mxu0 %v1845
  %2991 = vmatpush1.bf16.msra.mxu0 %v1844
  %2992 = vmatprep.subr.bf16.mxu0 %v1853
  %2993 = vmatpush1.bf16.msra.mxu0 %v1852
  %2994 = vmatprep.subr.bf16.mxu0 %v1861
  %2995 = vmatpush1.bf16.msra.mxu0 %v1860
  %2996 = vmatprep.subr.bf16.mxu0 %v1869
  %2997 = vmatpush1.bf16.msra.mxu0 %v1868
  %2998 = vmatprep.subr.bf16.mxu0 %v1877
  %2999 = vmatpush1.bf16.msra.mxu0 %v1876
  %3000 = vmatprep.subr.bf16.mxu0 %v1885
  %3001 = vmatpush1.bf16.msra.mxu0 %v1884
  %3002 = vmatprep.subr.bf16.mxu0 %v1893
  %3003 = vmatpush1.bf16.msra.mxu0 %v1892
  %3004 = vmatprep.subr.bf16.mxu0 %v1901
  %3005 = vmatpush1.bf16.msra.mxu0 %v1900
  %3006 = vmatprep.subr.bf16.mxu0 %v1909
  %3007 = vmatpush1.bf16.msra.mxu0 %v1908
  %3008 = vmatprep.mubr.bf16.mxu0 %v2975
  %3009 = vmatmul.mubr.bf16.gmra.mrb[0].mxu0 %v2974
  %v3010 = vpop.f32.mrb[0].mxu0
  %v3011 = vadd.f32 0.0, %v3010
  %v3012 = vpop.f32.mrb[0].mxu0
  %v3013 = vadd.f32 0.0, %v3012
  %v3014 = vpop.f32.mrb[0].mxu0
  %v3015 = vpop.f32.mrb[0].mxu0
  %3016 = vdwg.mxu0
  %3017 = vmatprep.subr.bf16.mxu0 %v1791
  %3018 = vmatpush1.bf16.msra.mxu0 %v1790
  %3019 = vmatprep.subr.bf16.mxu0 %v1799
  %3020 = vmatpush1.bf16.msra.mxu0 %v1798
  %3021 = vmatprep.subr.bf16.mxu0 %v1807
  %3022 = vmatpush1.bf16.msra.mxu0 %v1806
  %3023 = vmatprep.subr.bf16.mxu0 %v1815
  %3024 = vmatpush1.bf16.msra.mxu0 %v1814
  %3025 = vmatprep.subr.bf16.mxu0 %v1823
  %3026 = vmatpush1.bf16.msra.mxu0 %v1822
  %3027 = vmatprep.subr.bf16.mxu0 %v1831
  %3028 = vmatpush1.bf16.msra.mxu0 %v1830
  %3029 = vmatprep.subr.bf16.mxu0 %v1839
  %3030 = vmatpush1.bf16.msra.mxu0 %v1838
  %3031 = vmatprep.subr.bf16.mxu0 %v1847
  %3032 = vmatpush1.bf16.msra.mxu0 %v1846
  %3033 = vmatprep.subr.bf16.mxu0 %v1855
  %3034 = vmatpush1.bf16.msra.mxu0 %v1854
  %3035 = vmatprep.subr.bf16.mxu0 %v1863
  %3036 = vmatpush1.bf16.msra.mxu0 %v1862
  %3037 = vmatprep.subr.bf16.mxu0 %v1871
  %3038 = vmatpush1.bf16.msra.mxu0 %v1870
  %3039 = vmatprep.subr.bf16.mxu0 %v1879
  %3040 = vmatpush1.bf16.msra.mxu0 %v1878
  %3041 = vmatprep.subr.bf16.mxu0 %v1887
  %3042 = vmatpush1.bf16.msra.mxu0 %v1886
  %3043 = vmatprep.subr.bf16.mxu0 %v1895
  %3044 = vmatpush1.bf16.msra.mxu0 %v1894
  %3045 = vmatprep.subr.bf16.mxu0 %v1903
  %3046 = vmatpush1.bf16.msra.mxu0 %v1902
  %3047 = vmatprep.subr.bf16.mxu0 %v1911
  %3048 = vmatpush1.bf16.msra.mxu0 %v1910
  %3049 = vmatprep.mubr.bf16.mxu0 %v2975
  %3050 = vmatmul.mubr.bf16.gmra.mrb[0].mxu0 %v2974
  %v3051 = vpop.f32.mrb[0].mxu0
  %v3052 = vadd.f32 0.0, %v3051
  %v3053 = vpop.f32.mrb[0].mxu0
  %v3054 = vadd.f32 0.0, %v3053
  %v3055 = vpop.f32.mrb[0].mxu0
  %v3056 = vpop.f32.mrb[0].mxu0
  %3057 = vdwg.mxu0
  %3058 = vmatprep.subr.bf16.mxu0 %v1793
  %3059 = vmatpush1.bf16.msra.mxu0 %v1792
  %3060 = vmatprep.subr.bf16.mxu0 %v1801
  %3061 = vmatpush1.bf16.msra.mxu0 %v1800
  %3062 = vmatprep.subr.bf16.mxu0 %v1809
  %3063 = vmatpush1.bf16.msra.mxu0 %v1808
  %3064 = vmatprep.subr.bf16.mxu0 %v1817
  %3065 = vmatpush1.bf16.msra.mxu0 %v1816
  %3066 = vmatprep.subr.bf16.mxu0 %v1825
  %3067 = vmatpush1.bf16.msra.mxu0 %v1824
  %3068 = vmatprep.subr.bf16.mxu0 %v1833
  %3069 = vmatpush1.bf16.msra.mxu0 %v1832
  %3070 = vmatprep.subr.bf16.mxu0 %v1841
  %3071 = vmatpush1.bf16.msra.mxu0 %v1840
  %3072 = vmatprep.subr.bf16.mxu0 %v1849
  %3073 = vmatpush1.bf16.msra.mxu0 %v1848
  %3074 = vmatprep.subr.bf16.mxu0 %v1857
  %3075 = vmatpush1.bf16.msra.mxu0 %v1856
  %3076 = vmatprep.subr.bf16.mxu0 %v1865
  %3077 = vmatpush1.bf16.msra.mxu0 %v1864
  %3078 = vmatprep.subr.bf16.mxu0 %v1873
  %3079 = vmatpush1.bf16.msra.mxu0 %v1872
  %3080 = vmatprep.subr.bf16.mxu0 %v1881
  %3081 = vmatpush1.bf16.msra.mxu0 %v1880
  %3082 = vmatprep.subr.bf16.mxu0 %v1889
  %3083 = vmatpush1.bf16.msra.mxu0 %v1888
  %3084 = vmatprep.subr.bf16.mxu0 %v1897
  %3085 = vmatpush1.bf16.msra.mxu0 %v1896
  %3086 = vmatprep.subr.bf16.mxu0 %v1905
  %3087 = vmatpush1.bf16.msra.mxu0 %v1904
  %3088 = vmatprep.subr.bf16.mxu0 %v1913
  %3089 = vmatpush1.bf16.msra.mxu0 %v1912
  %3090 = vmatprep.mubr.bf16.mxu0 %v2975
  %3091 = vmatmul.mubr.bf16.gmra.mrb[0].mxu0 %v2974
  %v3092 = vpop.f32.mrb[0].mxu0
  %v3093 = vadd.f32 0.0, %v3092
  %v3094 = vpop.f32.mrb[0].mxu0
  %v3095 = vadd.f32 0.0, %v3094
  %v3096 = vpop.f32.mrb[0].mxu0
  %v3097 = vpop.f32.mrb[0].mxu0
  %3098 = vdwg.mxu0
  %3099 = vmatprep.subr.bf16.mxu0 %v1795
  %3100 = vmatpush1.bf16.msra.mxu0 %v1794
  %3101 = vmatprep.subr.bf16.mxu0 %v1803
  %3102 = vmatpush1.bf16.msra.mxu0 %v1802
  %3103 = vmatprep.subr.bf16.mxu0 %v1811
  %3104 = vmatpush1.bf16.msra.mxu0 %v1810
  %3105 = vmatprep.subr.bf16.mxu0 %v1819
  %3106 = vmatpush1.bf16.msra.mxu0 %v1818
  %3107 = vmatprep.subr.bf16.mxu0 %v1827
  %3108 = vmatpush1.bf16.msra.mxu0 %v1826
  %3109 = vmatprep.subr.bf16.mxu0 %v1835
  %3110 = vmatpush1.bf16.msra.mxu0 %v1834
  %3111 = vmatprep.subr.bf16.mxu0 %v1843
  %3112 = vmatpush1.bf16.msra.mxu0 %v1842
  %3113 = vmatprep.subr.bf16.mxu0 %v1851
  %3114 = vmatpush1.bf16.msra.mxu0 %v1850
  %3115 = vmatprep.subr.bf16.mxu0 %v1859
  %3116 = vmatpush1.bf16.msra.mxu0 %v1858
  %3117 = vmatprep.subr.bf16.mxu0 %v1867
  %3118 = vmatpush1.bf16.msra.mxu0 %v1866
  %3119 = vmatprep.subr.bf16.mxu0 %v1875
  %3120 = vmatpush1.bf16.msra.mxu0 %v1874
  %3121 = vmatprep.subr.bf16.mxu0 %v1883
  %3122 = vmatpush1.bf16.msra.mxu0 %v1882
  %3123 = vmatprep.subr.bf16.mxu0 %v1891
  %3124 = vmatpush1.bf16.msra.mxu0 %v1890
  %3125 = vmatprep.subr.bf16.mxu0 %v1899
  %3126 = vmatpush1.bf16.msra.mxu0 %v1898
  %3127 = vmatprep.subr.bf16.mxu0 %v1907
  %3128 = vmatpush1.bf16.msra.mxu0 %v1906
  %3129 = vmatprep.subr.bf16.mxu0 %v1915
  %3130 = vmatpush1.bf16.msra.mxu0 %v1914
  %3131 = vmatprep.mubr.bf16.mxu0 %v2975
  %3132 = vmatmul.mubr.bf16.gmra.mrb[0].mxu0 %v2974
  %v3133 = vpop.f32.mrb[0].mxu0
  %v3134 = vadd.f32 0.0, %v3133
  %v3135 = vpop.f32.mrb[0].mxu0
  %v3136 = vadd.f32 0.0, %v3135
  %v3137 = vpop.f32.mrb[0].mxu0
  %v3138 = vpop.f32.mrb[0].mxu0
  %3139 = vdwg.mxu0
  %v3140 = vadd.f32 %v2966, %v3011
  %v3141 = vadd.f32 %v2967, %v3013
  %v3142 = vadd.f32 %v2968, %v3052
  %v3143 = vadd.f32 %v2969, %v3054
  %v3144 = vadd.f32 %v2970, %v3093
  %v3145 = vadd.f32 %v2971, %v3095
  %v3146 = vadd.f32 %v2972, %v3134
  %v3147 = vadd.f32 %v2973, %v3136
  %v3148 = vxor.u32 %v3140, 2147483648
  %v3149 = vxor.u32 %v3141, 2147483648
  %v3150 = vmul.f32 %v3148, 1.442695
  %v3151 = vpow.pop %v3150
  %v3152 = vmul.f32 %v3149, 1.442695
  %v3153 = vpow.pop %v3152
  %v3154 = vadd.f32 %v3151, 1.0
  %v3155 = vadd.f32 %v3153, 1.0
  %v3156 = vrcp.pop %v3154
  %v3157 = vmul.f32 1.0, %v3156
  %v3158 = vrcp.pop %v3155
  %v3159 = vmul.f32 1.0, %v3158
  %v3160 = vxor.u32 %v3142, 2147483648
  %v3161 = vxor.u32 %v3143, 2147483648
  %v3162 = vmul.f32 %v3160, 1.442695
  %v3163 = vpow.pop %v3162
  %v3164 = vmul.f32 %v3161, 1.442695
  %v3165 = vpow.pop %v3164
  %v3166 = vadd.f32 %v3163, 1.0
  %v3167 = vadd.f32 %v3165, 1.0
  %v3168 = vrcp.pop %v3166
  %v3169 = vmul.f32 1.0, %v3168
  %v3170 = vrcp.pop %v3167
  %v3171 = vmul.f32 1.0, %v3170
  %v3172 = vtanh.pop %v3144
  %v3173 = vtanh.pop %v3145
  %v3174 = vxor.u32 %v3146, 2147483648
  %v3175 = vxor.u32 %v3147, 2147483648
  %v3176 = vmul.f32 %v3174, 1.442695
  %v3177 = vpow.pop %v3176
  %v3178 = vmul.f32 %v3175, 1.442695
  %v3179 = vpow.pop %v3178
  %v3180 = vadd.f32 %v3177, 1.0
  %v3181 = vadd.f32 %v3179, 1.0
  %v3182 = vrcp.pop %v3180
  %v3183 = vmul.f32 1.0, %v3182
  %v3184 = vrcp.pop %v3181
  %v3185 = vmul.f32 1.0, %v3184
  %v3186 = vmul.f32 %v3169, %v2957
  %v3187 = vmul.f32 %v3171, %v2958
  %v3188 = vmul.f32 %v3157, %v3172
  %v3189 = vmul.f32 %v3159, %v3173
  %v3190 = vadd.f32 %v3186, %v3188
  %v3191 = vadd.f32 %v3187, %v3189
  %v3192 = vtanh.pop %v3190
  %v3193 = vtanh.pop %v3191
  %v3194 = vmul.f32 %v3183, %v3192
  %v3195 = vmul.f32 %v3185, %v3193
  %s3196 = smul.u32 5, 8
  %s3197 = smul.addr %s3196, 8
  %s3198 = scalar_lea.vmem [#allocation2], %s3197
  %v3199 = vld [vmem:[%s3198] sm:$0xff]
  %v3200 = vld [vmem:[%s3198 + $0x8] sm:$0xff]
  %v3201 = vld [vmem:[%s3198 + $0x10] sm:$0xff]
  %v3202 = vld [vmem:[%s3198 + $0x18] sm:$0xff]
  %v3203 = vld [vmem:[%s3198 + $0x20] sm:$0xff]
  %v3204 = vld [vmem:[%s3198 + $0x28] sm:$0xff]
  %v3205 = vld [vmem:[%s3198 + $0x30] sm:$0xff]
  %v3206 = vld [vmem:[%s3198 + $0x38] sm:$0xff]
  %v3207 = vpack.c.bf16 %v3194, %v3194
  %v3208 = vpack.c.bf16 %v3195, %v3195
  %3209 = vmatprep.subr.bf16.mxu0 %v1789
  %3210 = vmatpush1.bf16.msra.mxu0 %v1788
  %3211 = vmatprep.subr.bf16.mxu0 %v1797
  %3212 = vmatpush1.bf16.msra.mxu0 %v1796
  %3213 = vmatprep.subr.bf16.mxu0 %v1805
  %3214 = vmatpush1.bf16.msra.mxu0 %v1804
  %3215 = vmatprep.subr.bf16.mxu0 %v1813
  %3216 = vmatpush1.bf16.msra.mxu0 %v1812
  %3217 = vmatprep.subr.bf16.mxu0 %v1821
  %3218 = vmatpush1.bf16.msra.mxu0 %v1820
  %3219 = vmatprep.subr.bf16.mxu0 %v1829
  %3220 = vmatpush1.bf16.msra.mxu0 %v1828
  %3221 = vmatprep.subr.bf16.mxu0 %v1837
  %3222 = vmatpush1.bf16.msra.mxu0 %v1836
  %3223 = vmatprep.subr.bf16.mxu0 %v1845
  %3224 = vmatpush1.bf16.msra.mxu0 %v1844
  %3225 = vmatprep.subr.bf16.mxu0 %v1853
  %3226 = vmatpush1.bf16.msra.mxu0 %v1852
  %3227 = vmatprep.subr.bf16.mxu0 %v1861
  %3228 = vmatpush1.bf16.msra.mxu0 %v1860
  %3229 = vmatprep.subr.bf16.mxu0 %v1869
  %3230 = vmatpush1.bf16.msra.mxu0 %v1868
  %3231 = vmatprep.subr.bf16.mxu0 %v1877
  %3232 = vmatpush1.bf16.msra.mxu0 %v1876
  %3233 = vmatprep.subr.bf16.mxu0 %v1885
  %3234 = vmatpush1.bf16.msra.mxu0 %v1884
  %3235 = vmatprep.subr.bf16.mxu0 %v1893
  %3236 = vmatpush1.bf16.msra.mxu0 %v1892
  %3237 = vmatprep.subr.bf16.mxu0 %v1901
  %3238 = vmatpush1.bf16.msra.mxu0 %v1900
  %3239 = vmatprep.subr.bf16.mxu0 %v1909
  %3240 = vmatpush1.bf16.msra.mxu0 %v1908
  %3241 = vmatprep.mubr.bf16.mxu0 %v3208
  %3242 = vmatmul.mubr.bf16.gmra.mrb[0].mxu0 %v3207
  %v3243 = vpop.f32.mrb[0].mxu0
  %v3244 = vadd.f32 0.0, %v3243
  %v3245 = vpop.f32.mrb[0].mxu0
  %v3246 = vadd.f32 0.0, %v3245
  %v3247 = vpop.f32.mrb[0].mxu0
  %v3248 = vpop.f32.mrb[0].mxu0
  %3249 = vdwg.mxu0
  %3250 = vmatprep.subr.bf16.mxu0 %v1791
  %3251 = vmatpush1.bf16.msra.mxu0 %v1790
  %3252 = vmatprep.subr.bf16.mxu0 %v1799
  %3253 = vmatpush1.bf16.msra.mxu0 %v1798
  %3254 = vmatprep.subr.bf16.mxu0 %v1807
  %3255 = vmatpush1.bf16.msra.mxu0 %v1806
  %3256 = vmatprep.subr.bf16.mxu0 %v1815
  %3257 = vmatpush1.bf16.msra.mxu0 %v1814
  %3258 = vmatprep.subr.bf16.mxu0 %v1823
  %3259 = vmatpush1.bf16.msra.mxu0 %v1822
  %3260 = vmatprep.subr.bf16.mxu0 %v1831
  %3261 = vmatpush1.bf16.msra.mxu0 %v1830
  %3262 = vmatprep.subr.bf16.mxu0 %v1839
  %3263 = vmatpush1.bf16.msra.mxu0 %v1838
  %3264 = vmatprep.subr.bf16.mxu0 %v1847
  %3265 = vmatpush1.bf16.msra.mxu0 %v1846
  %3266 = vmatprep.subr.bf16.mxu0 %v1855
  %3267 = vmatpush1.bf16.msra.mxu0 %v1854
  %3268 = vmatprep.subr.bf16.mxu0 %v1863
  %3269 = vmatpush1.bf16.msra.mxu0 %v1862
  %3270 = vmatprep.subr.bf16.mxu0 %v1871
  %3271 = vmatpush1.bf16.msra.mxu0 %v1870
  %3272 = vmatprep.subr.bf16.mxu0 %v1879
  %3273 = vmatpush1.bf16.msra.mxu0 %v1878
  %3274 = vmatprep.subr.bf16.mxu0 %v1887
  %3275 = vmatpush1.bf16.msra.mxu0 %v1886
  %3276 = vmatprep.subr.bf16.mxu0 %v1895
  %3277 = vmatpush1.bf16.msra.mxu0 %v1894
  %3278 = vmatprep.subr.bf16.mxu0 %v1903
  %3279 = vmatpush1.bf16.msra.mxu0 %v1902
  %3280 = vmatprep.subr.bf16.mxu0 %v1911
  %3281 = vmatpush1.bf16.msra.mxu0 %v1910
  %3282 = vmatprep.mubr.bf16.mxu0 %v3208
  %3283 = vmatmul.mubr.bf16.gmra.mrb[0].mxu0 %v3207
  %v3284 = vpop.f32.mrb[0].mxu0
  %v3285 = vadd.f32 0.0, %v3284
  %v3286 = vpop.f32.mrb[0].mxu0
  %v3287 = vadd.f32 0.0, %v3286
  %v3288 = vpop.f32.mrb[0].mxu0
  %v3289 = vpop.f32.mrb[0].mxu0
  %3290 = vdwg.mxu0
  %3291 = vmatprep.subr.bf16.mxu0 %v1793
  %3292 = vmatpush1.bf16.msra.mxu0 %v1792
  %3293 = vmatprep.subr.bf16.mxu0 %v1801
  %3294 = vmatpush1.bf16.msra.mxu0 %v1800
  %3295 = vmatprep.subr.bf16.mxu0 %v1809
  %3296 = vmatpush1.bf16.msra.mxu0 %v1808
  %3297 = vmatprep.subr.bf16.mxu0 %v1817
  %3298 = vmatpush1.bf16.msra.mxu0 %v1816
  %3299 = vmatprep.subr.bf16.mxu0 %v1825
  %3300 = vmatpush1.bf16.msra.mxu0 %v1824
  %3301 = vmatprep.subr.bf16.mxu0 %v1833
  %3302 = vmatpush1.bf16.msra.mxu0 %v1832
  %3303 = vmatprep.subr.bf16.mxu0 %v1841
  %3304 = vmatpush1.bf16.msra.mxu0 %v1840
  %3305 = vmatprep.subr.bf16.mxu0 %v1849
  %3306 = vmatpush1.bf16.msra.mxu0 %v1848
  %3307 = vmatprep.subr.bf16.mxu0 %v1857
  %3308 = vmatpush1.bf16.msra.mxu0 %v1856
  %3309 = vmatprep.subr.bf16.mxu0 %v1865
  %3310 = vmatpush1.bf16.msra.mxu0 %v1864
  %3311 = vmatprep.subr.bf16.mxu0 %v1873
  %3312 = vmatpush1.bf16.msra.mxu0 %v1872
  %3313 = vmatprep.subr.bf16.mxu0 %v1881
  %3314 = vmatpush1.bf16.msra.mxu0 %v1880
  %3315 = vmatprep.subr.bf16.mxu0 %v1889
  %3316 = vmatpush1.bf16.msra.mxu0 %v1888
  %3317 = vmatprep.subr.bf16.mxu0 %v1897
  %3318 = vmatpush1.bf16.msra.mxu0 %v1896
  %3319 = vmatprep.subr.bf16.mxu0 %v1905
  %3320 = vmatpush1.bf16.msra.mxu0 %v1904
  %3321 = vmatprep.subr.bf16.mxu0 %v1913
  %3322 = vmatpush1.bf16.msra.mxu0 %v1912
  %3323 = vmatprep.mubr.bf16.mxu0 %v3208
  %3324 = vmatmul.mubr.bf16.gmra.mrb[0].mxu0 %v3207
  %v3325 = vpop.f32.mrb[0].mxu0
  %v3326 = vadd.f32 0.0, %v3325
  %v3327 = vpop.f32.mrb[0].mxu0
  %v3328 = vadd.f32 0.0, %v3327
  %v3329 = vpop.f32.mrb[0].mxu0
  %v3330 = vpop.f32.mrb[0].mxu0
  %3331 = vdwg.mxu0
  %3332 = vmatprep.subr.bf16.mxu0 %v1795
  %3333 = vmatpush1.bf16.msra.mxu0 %v1794
  %3334 = vmatprep.subr.bf16.mxu0 %v1803
  %3335 = vmatpush1.bf16.msra.mxu0 %v1802
  %3336 = vmatprep.subr.bf16.mxu0 %v1811
  %3337 = vmatpush1.bf16.msra.mxu0 %v1810
  %3338 = vmatprep.subr.bf16.mxu0 %v1819
  %3339 = vmatpush1.bf16.msra.mxu0 %v1818
  %3340 = vmatprep.subr.bf16.mxu0 %v1827
  %3341 = vmatpush1.bf16.msra.mxu0 %v1826
  %3342 = vmatprep.subr.bf16.mxu0 %v1835
  %3343 = vmatpush1.bf16.msra.mxu0 %v1834
  %3344 = vmatprep.subr.bf16.mxu0 %v1843
  %3345 = vmatpush1.bf16.msra.mxu0 %v1842
  %3346 = vmatprep.subr.bf16.mxu0 %v1851
  %3347 = vmatpush1.bf16.msra.mxu0 %v1850
  %3348 = vmatprep.subr.bf16.mxu0 %v1859
  %3349 = vmatpush1.bf16.msra.mxu0 %v1858
  %3350 = vmatprep.subr.bf16.mxu0 %v1867
  %3351 = vmatpush1.bf16.msra.mxu0 %v1866
  %3352 = vmatprep.subr.bf16.mxu0 %v1875
  %3353 = vmatpush1.bf16.msra.mxu0 %v1874
  %3354 = vmatprep.subr.bf16.mxu0 %v1883
  %3355 = vmatpush1.bf16.msra.mxu0 %v1882
  %3356 = vmatprep.subr.bf16.mxu0 %v1891
  %3357 = vmatpush1.bf16.msra.mxu0 %v1890
  %3358 = vmatprep.subr.bf16.mxu0 %v1899
  %3359 = vmatpush1.bf16.msra.mxu0 %v1898
  %3360 = vmatprep.subr.bf16.mxu0 %v1907
  %3361 = vmatpush1.bf16.msra.mxu0 %v1906
  %3362 = vmatprep.subr.bf16.mxu0 %v1915
  %3363 = vmatpush1.bf16.msra.mxu0 %v1914
  %3364 = vmatprep.mubr.bf16.mxu0 %v3208
  %3365 = vmatmul.mubr.bf16.gmra.mrb[0].mxu0 %v3207
  %v3366 = vpop.f32.mrb[0].mxu0
  %v3367 = vadd.f32 0.0, %v3366
  %v3368 = vpop.f32.mrb[0].mxu0
  %v3369 = vadd.f32 0.0, %v3368
  %v3370 = vpop.f32.mrb[0].mxu0
  %v3371 = vpop.f32.mrb[0].mxu0
  %3372 = vdwg.mxu0
  %v3373 = vadd.f32 %v3199, %v3244
  %v3374 = vadd.f32 %v3200, %v3246
  %v3375 = vadd.f32 %v3201, %v3285
  %v3376 = vadd.f32 %v3202, %v3287
  %v3377 = vadd.f32 %v3203, %v3326
  %v3378 = vadd.f32 %v3204, %v3328
  %v3379 = vadd.f32 %v3205, %v3367
  %v3380 = vadd.f32 %v3206, %v3369
  %v3381 = vxor.u32 %v3373, 2147483648
  %v3382 = vxor.u32 %v3374, 2147483648
  %v3383 = vmul.f32 %v3381, 1.442695
  %v3384 = vpow.pop %v3383
  %v3385 = vmul.f32 %v3382, 1.442695
  %v3386 = vpow.pop %v3385
  %v3387 = vadd.f32 %v3384, 1.0
  %v3388 = vadd.f32 %v3386, 1.0
  %v3389 = vrcp.pop %v3387
  %v3390 = vmul.f32 1.0, %v3389
  %v3391 = vrcp.pop %v3388
  %v3392 = vmul.f32 1.0, %v3391
  %v3393 = vxor.u32 %v3375, 2147483648
  %v3394 = vxor.u32 %v3376, 2147483648
  %v3395 = vmul.f32 %v3393, 1.442695
  %v3396 = vpow.pop %v3395
  %v3397 = vmul.f32 %v3394, 1.442695
  %v3398 = vpow.pop %v3397
  %v3399 = vadd.f32 %v3396, 1.0
  %v3400 = vadd.f32 %v3398, 1.0
  %v3401 = vrcp.pop %v3399
  %v3402 = vmul.f32 1.0, %v3401
  %v3403 = vrcp.pop %v3400
  %v3404 = vmul.f32 1.0, %v3403
  %v3405 = vtanh.pop %v3377
  %v3406 = vtanh.pop %v3378
  %v3407 = vxor.u32 %v3379, 2147483648
  %v3408 = vxor.u32 %v3380, 2147483648
  %v3409 = vmul.f32 %v3407, 1.442695
  %v3410 = vpow.pop %v3409
  %v3411 = vmul.f32 %v3408, 1.442695
  %v3412 = vpow.pop %v3411
  %v3413 = vadd.f32 %v3410, 1.0
  %v3414 = vadd.f32 %v3412, 1.0
  %v3415 = vrcp.pop %v3413
  %v3416 = vmul.f32 1.0, %v3415
  %v3417 = vrcp.pop %v3414
  %v3418 = vmul.f32 1.0, %v3417
  %v3419 = vmul.f32 %v3402, %v3190
  %v3420 = vmul.f32 %v3404, %v3191
  %v3421 = vmul.f32 %v3390, %v3405
  %v3422 = vmul.f32 %v3392, %v3406
  %v3423 = vadd.f32 %v3419, %v3421
  %v3424 = vadd.f32 %v3420, %v3422
  %v3425 = vtanh.pop %v3423
  %v3426 = vtanh.pop %v3424
  %v3427 = vmul.f32 %v3416, %v3425
  %v3428 = vmul.f32 %v3418, %v3426
  %s3429 = smul.u32 6, 8
  %s3430 = smul.addr %s3429, 8
  %s3431 = scalar_lea.vmem [#allocation2], %s3430
  %v3432 = vld [vmem:[%s3431] sm:$0xff]
  %v3433 = vld [vmem:[%s3431 + $0x8] sm:$0xff]
  %v3434 = vld [vmem:[%s3431 + $0x10] sm:$0xff]
  %v3435 = vld [vmem:[%s3431 + $0x18] sm:$0xff]
  %v3436 = vld [vmem:[%s3431 + $0x20] sm:$0xff]
  %v3437 = vld [vmem:[%s3431 + $0x28] sm:$0xff]
  %v3438 = vld [vmem:[%s3431 + $0x30] sm:$0xff]
  %v3439 = vld [vmem:[%s3431 + $0x38] sm:$0xff]
  %v3440 = vpack.c.bf16 %v3427, %v3427
  %v3441 = vpack.c.bf16 %v3428, %v3428
  %3442 = vmatprep.subr.bf16.mxu0 %v1789
  %3443 = vmatpush1.bf16.msra.mxu0 %v1788
  %3444 = vmatprep.subr.bf16.mxu0 %v1797
  %3445 = vmatpush1.bf16.msra.mxu0 %v1796
  %3446 = vmatprep.subr.bf16.mxu0 %v1805
  %3447 = vmatpush1.bf16.msra.mxu0 %v1804
  %3448 = vmatprep.subr.bf16.mxu0 %v1813
  %3449 = vmatpush1.bf16.msra.mxu0 %v1812
  %3450 = vmatprep.subr.bf16.mxu0 %v1821
  %3451 = vmatpush1.bf16.msra.mxu0 %v1820
  %3452 = vmatprep.subr.bf16.mxu0 %v1829
  %3453 = vmatpush1.bf16.msra.mxu0 %v1828
  %3454 = vmatprep.subr.bf16.mxu0 %v1837
  %3455 = vmatpush1.bf16.msra.mxu0 %v1836
  %3456 = vmatprep.subr.bf16.mxu0 %v1845
  %3457 = vmatpush1.bf16.msra.mxu0 %v1844
  %3458 = vmatprep.subr.bf16.mxu0 %v1853
  %3459 = vmatpush1.bf16.msra.mxu0 %v1852
  %3460 = vmatprep.subr.bf16.mxu0 %v1861
  %3461 = vmatpush1.bf16.msra.mxu0 %v1860
  %3462 = vmatprep.subr.bf16.mxu0 %v1869
  %3463 = vmatpush1.bf16.msra.mxu0 %v1868
  %3464 = vmatprep.subr.bf16.mxu0 %v1877
  %3465 = vmatpush1.bf16.msra.mxu0 %v1876
  %3466 = vmatprep.subr.bf16.mxu0 %v1885
  %3467 = vmatpush1.bf16.msra.mxu0 %v1884
  %3468 = vmatprep.subr.bf16.mxu0 %v1893
  %3469 = vmatpush1.bf16.msra.mxu0 %v1892
  %3470 = vmatprep.subr.bf16.mxu0 %v1901
  %3471 = vmatpush1.bf16.msra.mxu0 %v1900
  %3472 = vmatprep.subr.bf16.mxu0 %v1909
  %3473 = vmatpush1.bf16.msra.mxu0 %v1908
  %3474 = vmatprep.mubr.bf16.mxu0 %v3441
  %3475 = vmatmul.mubr.bf16.gmra.mrb[0].mxu0 %v3440
  %v3476 = vpop.f32.mrb[0].mxu0
  %v3477 = vadd.f32 0.0, %v3476
  %v3478 = vpop.f32.mrb[0].mxu0
  %v3479 = vadd.f32 0.0, %v3478
  %v3480 = vpop.f32.mrb[0].mxu0
  %v3481 = vpop.f32.mrb[0].mxu0
  %3482 = vdwg.mxu0
  %3483 = vmatprep.subr.bf16.mxu0 %v1791
  %3484 = vmatpush1.bf16.msra.mxu0 %v1790
  %3485 = vmatprep.subr.bf16.mxu0 %v1799
  %3486 = vmatpush1.bf16.msra.mxu0 %v1798
  %3487 = vmatprep.subr.bf16.mxu0 %v1807
  %3488 = vmatpush1.bf16.msra.mxu0 %v1806
  %3489 = vmatprep.subr.bf16.mxu0 %v1815
  %3490 = vmatpush1.bf16.msra.mxu0 %v1814
  %3491 = vmatprep.subr.bf16.mxu0 %v1823
  %3492 = vmatpush1.bf16.msra.mxu0 %v1822
  %3493 = vmatprep.subr.bf16.mxu0 %v1831
  %3494 = vmatpush1.bf16.msra.mxu0 %v1830
  %3495 = vmatprep.subr.bf16.mxu0 %v1839
  %3496 = vmatpush1.bf16.msra.mxu0 %v1838
  %3497 = vmatprep.subr.bf16.mxu0 %v1847
  %3498 = vmatpush1.bf16.msra.mxu0 %v1846
  %3499 = vmatprep.subr.bf16.mxu0 %v1855
  %3500 = vmatpush1.bf16.msra.mxu0 %v1854
  %3501 = vmatprep.subr.bf16.mxu0 %v1863
  %3502 = vmatpush1.bf16.msra.mxu0 %v1862
  %3503 = vmatprep.subr.bf16.mxu0 %v1871
  %3504 = vmatpush1.bf16.msra.mxu0 %v1870
  %3505 = vmatprep.subr.bf16.mxu0 %v1879
  %3506 = vmatpush1.bf16.msra.mxu0 %v1878
  %3507 = vmatprep.subr.bf16.mxu0 %v1887
  %3508 = vmatpush1.bf16.msra.mxu0 %v1886
  %3509 = vmatprep.subr.bf16.mxu0 %v1895
  %3510 = vmatpush1.bf16.msra.mxu0 %v1894
  %3511 = vmatprep.subr.bf16.mxu0 %v1903
  %3512 = vmatpush1.bf16.msra.mxu0 %v1902
  %3513 = vmatprep.subr.bf16.mxu0 %v1911
  %3514 = vmatpush1.bf16.msra.mxu0 %v1910
  %3515 = vmatprep.mubr.bf16.mxu0 %v3441
  %3516 = vmatmul.mubr.bf16.gmra.mrb[0].mxu0 %v3440
  %v3517 = vpop.f32.mrb[0].mxu0
  %v3518 = vadd.f32 0.0, %v3517
  %v3519 = vpop.f32.mrb[0].mxu0
  %v3520 = vadd.f32 0.0, %v3519
  %v3521 = vpop.f32.mrb[0].mxu0
  %v3522 = vpop.f32.mrb[0].mxu0
  %3523 = vdwg.mxu0
  %3524 = vmatprep.subr.bf16.mxu0 %v1793
  %3525 = vmatpush1.bf16.msra.mxu0 %v1792
  %3526 = vmatprep.subr.bf16.mxu0 %v1801
  %3527 = vmatpush1.bf16.msra.mxu0 %v1800
  %3528 = vmatprep.subr.bf16.mxu0 %v1809
  %3529 = vmatpush1.bf16.msra.mxu0 %v1808
  %3530 = vmatprep.subr.bf16.mxu0 %v1817
  %3531 = vmatpush1.bf16.msra.mxu0 %v1816
  %3532 = vmatprep.subr.bf16.mxu0 %v1825
  %3533 = vmatpush1.bf16.msra.mxu0 %v1824
  %3534 = vmatprep.subr.bf16.mxu0 %v1833
  %3535 = vmatpush1.bf16.msra.mxu0 %v1832
  %3536 = vmatprep.subr.bf16.mxu0 %v1841
  %3537 = vmatpush1.bf16.msra.mxu0 %v1840
  %3538 = vmatprep.subr.bf16.mxu0 %v1849
  %3539 = vmatpush1.bf16.msra.mxu0 %v1848
  %3540 = vmatprep.subr.bf16.mxu0 %v1857
  %3541 = vmatpush1.bf16.msra.mxu0 %v1856
  %3542 = vmatprep.subr.bf16.mxu0 %v1865
  %3543 = vmatpush1.bf16.msra.mxu0 %v1864
  %3544 = vmatprep.subr.bf16.mxu0 %v1873
  %3545 = vmatpush1.bf16.msra.mxu0 %v1872
  %3546 = vmatprep.subr.bf16.mxu0 %v1881
  %3547 = vmatpush1.bf16.msra.mxu0 %v1880
  %3548 = vmatprep.subr.bf16.mxu0 %v1889
  %3549 = vmatpush1.bf16.msra.mxu0 %v1888
  %3550 = vmatprep.subr.bf16.mxu0 %v1897
  %3551 = vmatpush1.bf16.msra.mxu0 %v1896
  %3552 = vmatprep.subr.bf16.mxu0 %v1905
  %3553 = vmatpush1.bf16.msra.mxu0 %v1904
  %3554 = vmatprep.subr.bf16.mxu0 %v1913
  %3555 = vmatpush1.bf16.msra.mxu0 %v1912
  %3556 = vmatprep.mubr.bf16.mxu0 %v3441
  %3557 = vmatmul.mubr.bf16.gmra.mrb[0].mxu0 %v3440
  %v3558 = vpop.f32.mrb[0].mxu0
  %v3559 = vadd.f32 0.0, %v3558
  %v3560 = vpop.f32.mrb[0].mxu0
  %v3561 = vadd.f32 0.0, %v3560
  %v3562 = vpop.f32.mrb[0].mxu0
  %v3563 = vpop.f32.mrb[0].mxu0
  %3564 = vdwg.mxu0
  %3565 = vmatprep.subr.bf16.mxu0 %v1795
  %3566 = vmatpush1.bf16.msra.mxu0 %v1794
  %3567 = vmatprep.subr.bf16.mxu0 %v1803
  %3568 = vmatpush1.bf16.msra.mxu0 %v1802
  %3569 = vmatprep.subr.bf16.mxu0 %v1811
  %3570 = vmatpush1.bf16.msra.mxu0 %v1810
  %3571 = vmatprep.subr.bf16.mxu0 %v1819
  %3572 = vmatpush1.bf16.msra.mxu0 %v1818
  %3573 = vmatprep.subr.bf16.mxu0 %v1827
  %3574 = vmatpush1.bf16.msra.mxu0 %v1826
  %3575 = vmatprep.subr.bf16.mxu0 %v1835
  %3576 = vmatpush1.bf16.msra.mxu0 %v1834
  %3577 = vmatprep.subr.bf16.mxu0 %v1843
  %3578 = vmatpush1.bf16.msra.mxu0 %v1842
  %3579 = vmatprep.subr.bf16.mxu0 %v1851
  %3580 = vmatpush1.bf16.msra.mxu0 %v1850
  %3581 = vmatprep.subr.bf16.mxu0 %v1859
  %3582 = vmatpush1.bf16.msra.mxu0 %v1858
  %3583 = vmatprep.subr.bf16.mxu0 %v1867
  %3584 = vmatpush1.bf16.msra.mxu0 %v1866
  %3585 = vmatprep.subr.bf16.mxu0 %v1875
  %3586 = vmatpush1.bf16.msra.mxu0 %v1874
  %3587 = vmatprep.subr.bf16.mxu0 %v1883
  %3588 = vmatpush1.bf16.msra.mxu0 %v1882
  %3589 = vmatprep.subr.bf16.mxu0 %v1891
  %3590 = vmatpush1.bf16.msra.mxu0 %v1890
  %3591 = vmatprep.subr.bf16.mxu0 %v1899
  %3592 = vmatpush1.bf16.msra.mxu0 %v1898
  %3593 = vmatprep.subr.bf16.mxu0 %v1907
  %3594 = vmatpush1.bf16.msra.mxu0 %v1906
  %3595 = vmatprep.subr.bf16.mxu0 %v1915
  %3596 = vmatpush1.bf16.msra.mxu0 %v1914
  %3597 = vmatprep.mubr.bf16.mxu0 %v3441
  %3598 = vmatmul.mubr.bf16.gmra.mrb[0].mxu0 %v3440
  %v3599 = vpop.f32.mrb[0].mxu0
  %v3600 = vadd.f32 0.0, %v3599
  %v3601 = vpop.f32.mrb[0].mxu0
  %v3602 = vadd.f32 0.0, %v3601
  %v3603 = vpop.f32.mrb[0].mxu0
  %v3604 = vpop.f32.mrb[0].mxu0
  %3605 = vdwg.mxu0
  %v3606 = vadd.f32 %v3432, %v3477
  %v3607 = vadd.f32 %v3433, %v3479
  %v3608 = vadd.f32 %v3434, %v3518
  %v3609 = vadd.f32 %v3435, %v3520
  %v3610 = vadd.f32 %v3436, %v3559
  %v3611 = vadd.f32 %v3437, %v3561
  %v3612 = vadd.f32 %v3438, %v3600
  %v3613 = vadd.f32 %v3439, %v3602
  %v3614 = vxor.u32 %v3606, 2147483648
  %v3615 = vxor.u32 %v3607, 2147483648
  %v3616 = vmul.f32 %v3614, 1.442695
  %v3617 = vpow.pop %v3616
  %v3618 = vmul.f32 %v3615, 1.442695
  %v3619 = vpow.pop %v3618
  %v3620 = vadd.f32 %v3617, 1.0
  %v3621 = vadd.f32 %v3619, 1.0
  %v3622 = vrcp.pop %v3620
  %v3623 = vmul.f32 1.0, %v3622
  %v3624 = vrcp.pop %v3621
  %v3625 = vmul.f32 1.0, %v3624
  %v3626 = vxor.u32 %v3608, 2147483648
  %v3627 = vxor.u32 %v3609, 2147483648
  %v3628 = vmul.f32 %v3626, 1.442695
  %v3629 = vpow.pop %v3628
  %v3630 = vmul.f32 %v3627, 1.442695
  %v3631 = vpow.pop %v3630
  %v3632 = vadd.f32 %v3629, 1.0
  %v3633 = vadd.f32 %v3631, 1.0
  %v3634 = vrcp.pop %v3632
  %v3635 = vmul.f32 1.0, %v3634
  %v3636 = vrcp.pop %v3633
  %v3637 = vmul.f32 1.0, %v3636
  %v3638 = vtanh.pop %v3610
  %v3639 = vtanh.pop %v3611
  %v3640 = vxor.u32 %v3612, 2147483648
  %v3641 = vxor.u32 %v3613, 2147483648
  %v3642 = vmul.f32 %v3640, 1.442695
  %v3643 = vpow.pop %v3642
  %v3644 = vmul.f32 %v3641, 1.442695
  %v3645 = vpow.pop %v3644
  %v3646 = vadd.f32 %v3643, 1.0
  %v3647 = vadd.f32 %v3645, 1.0
  %v3648 = vrcp.pop %v3646
  %v3649 = vmul.f32 1.0, %v3648
  %v3650 = vrcp.pop %v3647
  %v3651 = vmul.f32 1.0, %v3650
  %v3652 = vmul.f32 %v3635, %v3423
  %v3653 = vmul.f32 %v3637, %v3424
  %v3654 = vmul.f32 %v3623, %v3638
  %v3655 = vmul.f32 %v3625, %v3639
  %v3656 = vadd.f32 %v3652, %v3654
  %v3657 = vadd.f32 %v3653, %v3655
  %v3658 = vtanh.pop %v3656
  %v3659 = vtanh.pop %v3657
  %v3660 = vmul.f32 %v3649, %v3658
  %v3661 = vmul.f32 %v3651, %v3659
  %s3662 = smul.u32 7, 8
  %s3663 = smul.addr %s3662, 8
  %s3664 = scalar_lea.vmem [#allocation2], %s3663
  %v3665 = vld [vmem:[%s3664] sm:$0xff]
  %v3666 = vld [vmem:[%s3664 + $0x8] sm:$0xff]
  %v3667 = vld [vmem:[%s3664 + $0x10] sm:$0xff]
  %v3668 = vld [vmem:[%s3664 + $0x18] sm:$0xff]
  %v3669 = vld [vmem:[%s3664 + $0x20] sm:$0xff]
  %v3670 = vld [vmem:[%s3664 + $0x28] sm:$0xff]
  %v3671 = vld [vmem:[%s3664 + $0x30] sm:$0xff]
  %v3672 = vld [vmem:[%s3664 + $0x38] sm:$0xff]
  %v3673 = vpack.c.bf16 %v3660, %v3660
  %v3674 = vpack.c.bf16 %v3661, %v3661
  %3675 = vmatprep.subr.bf16.mxu0 %v1789
  %3676 = vmatpush1.bf16.msra.mxu0 %v1788
  %3677 = vmatprep.subr.bf16.mxu0 %v1797
  %3678 = vmatpush1.bf16.msra.mxu0 %v1796
  %3679 = vmatprep.subr.bf16.mxu0 %v1805
  %3680 = vmatpush1.bf16.msra.mxu0 %v1804
  %3681 = vmatprep.subr.bf16.mxu0 %v1813
  %3682 = vmatpush1.bf16.msra.mxu0 %v1812
  %3683 = vmatprep.subr.bf16.mxu0 %v1821
  %3684 = vmatpush1.bf16.msra.mxu0 %v1820
  %3685 = vmatprep.subr.bf16.mxu0 %v1829
  %3686 = vmatpush1.bf16.msra.mxu0 %v1828
  %3687 = vmatprep.subr.bf16.mxu0 %v1837
  %3688 = vmatpush1.bf16.msra.mxu0 %v1836
  %3689 = vmatprep.subr.bf16.mxu0 %v1845
  %3690 = vmatpush1.bf16.msra.mxu0 %v1844
  %3691 = vmatprep.subr.bf16.mxu0 %v1853
  %3692 = vmatpush1.bf16.msra.mxu0 %v1852
  %3693 = vmatprep.subr.bf16.mxu0 %v1861
  %3694 = vmatpush1.bf16.msra.mxu0 %v1860
  %3695 = vmatprep.subr.bf16.mxu0 %v1869
  %3696 = vmatpush1.bf16.msra.mxu0 %v1868
  %3697 = vmatprep.subr.bf16.mxu0 %v1877
  %3698 = vmatpush1.bf16.msra.mxu0 %v1876
  %3699 = vmatprep.subr.bf16.mxu0 %v1885
  %3700 = vmatpush1.bf16.msra.mxu0 %v1884
  %3701 = vmatprep.subr.bf16.mxu0 %v1893
  %3702 = vmatpush1.bf16.msra.mxu0 %v1892
  %3703 = vmatprep.subr.bf16.mxu0 %v1901
  %3704 = vmatpush1.bf16.msra.mxu0 %v1900
  %3705 = vmatprep.subr.bf16.mxu0 %v1909
  %3706 = vmatpush1.bf16.msra.mxu0 %v1908
  %3707 = vmatprep.mubr.bf16.mxu0 %v3674
  %3708 = vmatmul.mubr.bf16.gmra.mrb[0].mxu0 %v3673
  %v3709 = vpop.f32.mrb[0].mxu0
  %v3710 = vadd.f32 0.0, %v3709
  %v3711 = vpop.f32.mrb[0].mxu0
  %v3712 = vadd.f32 0.0, %v3711
  %v3713 = vpop.f32.mrb[0].mxu0
  %v3714 = vpop.f32.mrb[0].mxu0
  %3715 = vdwg.mxu0
  %3716 = vmatprep.subr.bf16.mxu0 %v1791
  %3717 = vmatpush1.bf16.msra.mxu0 %v1790
  %3718 = vmatprep.subr.bf16.mxu0 %v1799
  %3719 = vmatpush1.bf16.msra.mxu0 %v1798
  %3720 = vmatprep.subr.bf16.mxu0 %v1807
  %3721 = vmatpush1.bf16.msra.mxu0 %v1806
  %3722 = vmatprep.subr.bf16.mxu0 %v1815
  %3723 = vmatpush1.bf16.msra.mxu0 %v1814
  %3724 = vmatprep.subr.bf16.mxu0 %v1823
  %3725 = vmatpush1.bf16.msra.mxu0 %v1822
  %3726 = vmatprep.subr.bf16.mxu0 %v1831
  %3727 = vmatpush1.bf16.msra.mxu0 %v1830
  %3728 = vmatprep.subr.bf16.mxu0 %v1839
  %3729 = vmatpush1.bf16.msra.mxu0 %v1838
  %3730 = vmatprep.subr.bf16.mxu0 %v1847
  %3731 = vmatpush1.bf16.msra.mxu0 %v1846
  %3732 = vmatprep.subr.bf16.mxu0 %v1855
  %3733 = vmatpush1.bf16.msra.mxu0 %v1854
  %3734 = vmatprep.subr.bf16.mxu0 %v1863
  %3735 = vmatpush1.bf16.msra.mxu0 %v1862
  %3736 = vmatprep.subr.bf16.mxu0 %v1871
  %3737 = vmatpush1.bf16.msra.mxu0 %v1870
  %3738 = vmatprep.subr.bf16.mxu0 %v1879
  %3739 = vmatpush1.bf16.msra.mxu0 %v1878
  %3740 = vmatprep.subr.bf16.mxu0 %v1887
  %3741 = vmatpush1.bf16.msra.mxu0 %v1886
  %3742 = vmatprep.subr.bf16.mxu0 %v1895
  %3743 = vmatpush1.bf16.msra.mxu0 %v1894
  %3744 = vmatprep.subr.bf16.mxu0 %v1903
  %3745 = vmatpush1.bf16.msra.mxu0 %v1902
  %3746 = vmatprep.subr.bf16.mxu0 %v1911
  %3747 = vmatpush1.bf16.msra.mxu0 %v1910
  %3748 = vmatprep.mubr.bf16.mxu0 %v3674
  %3749 = vmatmul.mubr.bf16.gmra.mrb[0].mxu0 %v3673
  %v3750 = vpop.f32.mrb[0].mxu0
  %v3751 = vadd.f32 0.0, %v3750
  %v3752 = vpop.f32.mrb[0].mxu0
  %v3753 = vadd.f32 0.0, %v3752
  %v3754 = vpop.f32.mrb[0].mxu0
  %v3755 = vpop.f32.mrb[0].mxu0
  %3756 = vdwg.mxu0
  %3757 = vmatprep.subr.bf16.mxu0 %v1793
  %3758 = vmatpush1.bf16.msra.mxu0 %v1792
  %3759 = vmatprep.subr.bf16.mxu0 %v1801
  %3760 = vmatpush1.bf16.msra.mxu0 %v1800
  %3761 = vmatprep.subr.bf16.mxu0 %v1809
  %3762 = vmatpush1.bf16.msra.mxu0 %v1808
  %3763 = vmatprep.subr.bf16.mxu0 %v1817
  %3764 = vmatpush1.bf16.msra.mxu0 %v1816
  %3765 = vmatprep.subr.bf16.mxu0 %v1825
  %3766 = vmatpush1.bf16.msra.mxu0 %v1824
  %3767 = vmatprep.subr.bf16.mxu0 %v1833
  %3768 = vmatpush1.bf16.msra.mxu0 %v1832
  %3769 = vmatprep.subr.bf16.mxu0 %v1841
  %3770 = vmatpush1.bf16.msra.mxu0 %v1840
  %3771 = vmatprep.subr.bf16.mxu0 %v1849
  %3772 = vmatpush1.bf16.msra.mxu0 %v1848
  %3773 = vmatprep.subr.bf16.mxu0 %v1857
  %3774 = vmatpush1.bf16.msra.mxu0 %v1856
  %3775 = vmatprep.subr.bf16.mxu0 %v1865
  %3776 = vmatpush1.bf16.msra.mxu0 %v1864
  %3777 = vmatprep.subr.bf16.mxu0 %v1873
  %3778 = vmatpush1.bf16.msra.mxu0 %v1872
  %3779 = vmatprep.subr.bf16.mxu0 %v1881
  %3780 = vmatpush1.bf16.msra.mxu0 %v1880
  %3781 = vmatprep.subr.bf16.mxu0 %v1889
  %3782 = vmatpush1.bf16.msra.mxu0 %v1888
  %3783 = vmatprep.subr.bf16.mxu0 %v1897
  %3784 = vmatpush1.bf16.msra.mxu0 %v1896
  %3785 = vmatprep.subr.bf16.mxu0 %v1905
  %3786 = vmatpush1.bf16.msra.mxu0 %v1904
  %3787 = vmatprep.subr.bf16.mxu0 %v1913
  %3788 = vmatpush1.bf16.msra.mxu0 %v1912
  %3789 = vmatprep.mubr.bf16.mxu0 %v3674
  %3790 = vmatmul.mubr.bf16.gmra.mrb[0].mxu0 %v3673
  %v3791 = vpop.f32.mrb[0].mxu0
  %v3792 = vadd.f32 0.0, %v3791
  %v3793 = vpop.f32.mrb[0].mxu0
  %v3794 = vadd.f32 0.0, %v3793
  %v3795 = vpop.f32.mrb[0].mxu0
  %v3796 = vpop.f32.mrb[0].mxu0
  %3797 = vdwg.mxu0
  %3798 = vmatprep.subr.bf16.mxu0 %v1795
  %3799 = vmatpush1.bf16.msra.mxu0 %v1794
  %3800 = vmatprep.subr.bf16.mxu0 %v1803
  %3801 = vmatpush1.bf16.msra.mxu0 %v1802
  %3802 = vmatprep.subr.bf16.mxu0 %v1811
  %3803 = vmatpush1.bf16.msra.mxu0 %v1810
  %3804 = vmatprep.subr.bf16.mxu0 %v1819
  %3805 = vmatpush1.bf16.msra.mxu0 %v1818
  %3806 = vmatprep.subr.bf16.mxu0 %v1827
  %3807 = vmatpush1.bf16.msra.mxu0 %v1826
  %3808 = vmatprep.subr.bf16.mxu0 %v1835
  %3809 = vmatpush1.bf16.msra.mxu0 %v1834
  %3810 = vmatprep.subr.bf16.mxu0 %v1843
  %3811 = vmatpush1.bf16.msra.mxu0 %v1842
  %3812 = vmatprep.subr.bf16.mxu0 %v1851
  %3813 = vmatpush1.bf16.msra.mxu0 %v1850
  %3814 = vmatprep.subr.bf16.mxu0 %v1859
  %3815 = vmatpush1.bf16.msra.mxu0 %v1858
  %3816 = vmatprep.subr.bf16.mxu0 %v1867
  %3817 = vmatpush1.bf16.msra.mxu0 %v1866
  %3818 = vmatprep.subr.bf16.mxu0 %v1875
  %3819 = vmatpush1.bf16.msra.mxu0 %v1874
  %3820 = vmatprep.subr.bf16.mxu0 %v1883
  %3821 = vmatpush1.bf16.msra.mxu0 %v1882
  %3822 = vmatprep.subr.bf16.mxu0 %v1891
  %3823 = vmatpush1.bf16.msra.mxu0 %v1890
  %3824 = vmatprep.subr.bf16.mxu0 %v1899
  %3825 = vmatpush1.bf16.msra.mxu0 %v1898
  %3826 = vmatprep.subr.bf16.mxu0 %v1907
  %3827 = vmatpush1.bf16.msra.mxu0 %v1906
  %3828 = vmatprep.subr.bf16.mxu0 %v1915
  %3829 = vmatpush1.bf16.msra.mxu0 %v1914
  %3830 = vmatprep.mubr.bf16.mxu0 %v3674
  %3831 = vmatmul.mubr.bf16.gmra.mrb[0].mxu0 %v3673
  %v3832 = vpop.f32.mrb[0].mxu0
  %v3833 = vadd.f32 0.0, %v3832
  %v3834 = vpop.f32.mrb[0].mxu0
  %v3835 = vadd.f32 0.0, %v3834
  %v3836 = vpop.f32.mrb[0].mxu0
  %v3837 = vpop.f32.mrb[0].mxu0
  %3838 = vdwg.mxu0
  %v3839 = vadd.f32 %v3665, %v3710
  %v3840 = vadd.f32 %v3666, %v3712
  %v3841 = vadd.f32 %v3667, %v3751
  %v3842 = vadd.f32 %v3668, %v3753
  %v3843 = vadd.f32 %v3669, %v3792
  %v3844 = vadd.f32 %v3670, %v3794
  %v3845 = vadd.f32 %v3671, %v3833
  %v3846 = vadd.f32 %v3672, %v3835
  %v3847 = vxor.u32 %v3839, 2147483648
  %v3848 = vxor.u32 %v3840, 2147483648
  %v3849 = vmul.f32 %v3847, 1.442695
  %v3850 = vpow.pop %v3849
  %v3851 = vmul.f32 %v3848, 1.442695
  %v3852 = vpow.pop %v3851
  %v3853 = vadd.f32 %v3850, 1.0
  %v3854 = vadd.f32 %v3852, 1.0
  %v3855 = vrcp.pop %v3853
  %v3856 = vmul.f32 1.0, %v3855
  %v3857 = vrcp.pop %v3854
  %v3858 = vmul.f32 1.0, %v3857
  %v3859 = vxor.u32 %v3841, 2147483648
  %v3860 = vxor.u32 %v3842, 2147483648
  %v3861 = vmul.f32 %v3859, 1.442695
  %v3862 = vpow.pop %v3861
  %v3863 = vmul.f32 %v3860, 1.442695
  %v3864 = vpow.pop %v3863
  %v3865 = vadd.f32 %v3862, 1.0
  %v3866 = vadd.f32 %v3864, 1.0
  %v3867 = vrcp.pop %v3865
  %v3868 = vmul.f32 1.0, %v3867
  %v3869 = vrcp.pop %v3866
  %v3870 = vmul.f32 1.0, %v3869
  %v3871 = vtanh.pop %v3843
  %v3872 = vtanh.pop %v3844
  %v3873 = vxor.u32 %v3845, 2147483648
  %v3874 = vxor.u32 %v3846, 2147483648
  %v3875 = vmul.f32 %v3873, 1.442695
  %v3876 = vpow.pop %v3875
  %v3877 = vmul.f32 %v3874, 1.442695
  %v3878 = vpow.pop %v3877
  %v3879 = vadd.f32 %v3876, 1.0
  %v3880 = vadd.f32 %v3878, 1.0
  %v3881 = vrcp.pop %v3879
  %v3882 = vmul.f32 1.0, %v3881
  %v3883 = vrcp.pop %v3880
  %v3884 = vmul.f32 1.0, %v3883
  %v3885 = vmul.f32 %v3868, %v3656
  %v3886 = vmul.f32 %v3870, %v3657
  %v3887 = vmul.f32 %v3856, %v3871
  %v3888 = vmul.f32 %v3858, %v3872
  %v3889 = vadd.f32 %v3885, %v3887
  %v3890 = vadd.f32 %v3886, %v3888
  %v3891 = vtanh.pop %v3889
  %v3892 = vtanh.pop %v3890
  %v3893 = vmul.f32 %v3882, %v3891
  %v3894 = vmul.f32 %v3884, %v3892
  %v3895 = vld [vmem:[%s1] sm:$0xf]
  %v3896 = vld [vmem:[%s5] sm:$0xff]
  %v3897 = vld [vmem:[%s5 + $0x8] sm:$0xff]
  %v3898 = vld [vmem:[%s5 + $0x10] sm:$0xff]
  %v3899 = vld [vmem:[%s5 + $0x18] sm:$0xff]
  %v3900 = vld [vmem:[%s5 + $0x20] sm:$0xff]
  %v3901 = vld [vmem:[%s5 + $0x28] sm:$0xff]
  %v3902 = vld [vmem:[%s5 + $0x30] sm:$0xff]
  %v3903 = vld [vmem:[%s5 + $0x38] sm:$0xff]
  %v3904 = vld [vmem:[%s5 + $0x40] sm:$0xff]
  %v3905 = vld [vmem:[%s5 + $0x48] sm:$0xff]
  %v3906 = vld [vmem:[%s5 + $0x50] sm:$0xff]
  %v3907 = vld [vmem:[%s5 + $0x58] sm:$0xff]
  %v3908 = vld [vmem:[%s5 + $0x60] sm:$0xff]
  %v3909 = vld [vmem:[%s5 + $0x68] sm:$0xff]
  %v3910 = vld [vmem:[%s5 + $0x70] sm:$0xff]
  %v3911 = vld [vmem:[%s5 + $0x78] sm:$0xff]
  %v3912 = vld [vmem:[%s6] sm:$0x3]
  %v3914 = vlaneseq
  %v3915 = vshrl.u32 %v3914, 7
  %v3916 = vsub.s32 0, %v3915
  %v3917 = vrot.slane %v3912, %v3916
  %v3918 = vlaneseq
  %v3919 = vshrl.u32 %v3918, 7
  %v3920 = vsub.s32 1, %v3919
  %v3921 = vrot.slane %v3912, %v3920
  %v3940 = vunpack.c.l.b16 %v3896
  %v3941 = vunpack.c.h.b16 %v3896
  %v3942 = vunpack.c.l.b16 %v3897
  %v3943 = vunpack.c.h.b16 %v3897
  %v3944 = vunpack.c.l.b16 %v3898
  %v3945 = vunpack.c.h.b16 %v3898
  %v3946 = vunpack.c.l.b16 %v3899
  %v3947 = vunpack.c.h.b16 %v3899
  %v3948 = vunpack.c.l.b16 %v3900
  %v3949 = vunpack.c.h.b16 %v3900
  %v3950 = vunpack.c.l.b16 %v3901
  %v3951 = vunpack.c.h.b16 %v3901
  %v3952 = vunpack.c.l.b16 %v3902
  %v3953 = vunpack.c.h.b16 %v3902
  %v3954 = vunpack.c.l.b16 %v3903
  %v3955 = vunpack.c.h.b16 %v3903
  %v3956 = vunpack.c.l.b16 %v3904
  %v3957 = vunpack.c.h.b16 %v3904
  %v3958 = vunpack.c.l.b16 %v3905
  %v3959 = vunpack.c.h.b16 %v3905
  %v3960 = vunpack.c.l.b16 %v3906
  %v3961 = vunpack.c.h.b16 %v3906
  %v3962 = vunpack.c.l.b16 %v3907
  %v3963 = vunpack.c.h.b16 %v3907
  %v3964 = vunpack.c.l.b16 %v3908
  %v3965 = vunpack.c.h.b16 %v3908
  %v3966 = vunpack.c.l.b16 %v3909
  %v3967 = vunpack.c.h.b16 %v3909
  %v3968 = vunpack.c.l.b16 %v3910
  %v3969 = vunpack.c.h.b16 %v3910
  %v3970 = vunpack.c.l.b16 %v3911
  %v3971 = vunpack.c.h.b16 %v3911
  %v3972 = vpack.c.b16 %v3942, %v3940
  %v3973 = vpack.c.b16 %v3943, %v3941
  %v3974 = vpack.c.b16 %v3946, %v3944
  %v3975 = vpack.c.b16 %v3947, %v3945
  %v3976 = vpack.c.b16 %v3950, %v3948
  %v3977 = vpack.c.b16 %v3951, %v3949
  %v3978 = vpack.c.b16 %v3954, %v3952
  %v3979 = vpack.c.b16 %v3955, %v3953
  %v3980 = vpack.c.b16 %v3958, %v3956
  %v3981 = vpack.c.b16 %v3959, %v3957
  %v3982 = vpack.c.b16 %v3962, %v3960
  %v3983 = vpack.c.b16 %v3963, %v3961
  %v3984 = vpack.c.b16 %v3966, %v3964
  %v3985 = vpack.c.b16 %v3967, %v3965
  %v3986 = vpack.c.b16 %v3970, %v3968
  %v3987 = vpack.c.b16 %v3971, %v3969
  %4004 = vmatprep.subr.bf16.mxu0 %v3973
  %4005 = vmatpush1.bf16.msra.mxu0 %v3972
  %4006 = vmatprep.subr.bf16.mxu0 %v3975
  %4007 = vmatpush1.bf16.msra.mxu0 %v3974
  %4008 = vmatprep.subr.bf16.mxu0 %v3977
  %4009 = vmatpush1.bf16.msra.mxu0 %v3976
  %4010 = vmatprep.subr.bf16.mxu0 %v3979
  %4011 = vmatpush1.bf16.msra.mxu0 %v3978
  %4012 = vmatprep.subr.bf16.mxu0 %v3981
  %4013 = vmatpush1.bf16.msra.mxu0 %v3980
  %4014 = vmatprep.subr.bf16.mxu0 %v3983
  %4015 = vmatpush1.bf16.msra.mxu0 %v3982
  %4016 = vmatprep.subr.bf16.mxu0 %v3985
  %4017 = vmatpush1.bf16.msra.mxu0 %v3984
  %4018 = vmatprep.subr.bf16.mxu0 %v3987
  %4019 = vmatpush1.bf16.msra.mxu0 %v3986
  %4020 = vmatprep.subr.bf16.mxu0 0
  %4021 = vmatpush1.bf16.msra.mxu0 0
  %4022 = vmatprep.subr.bf16.mxu0 0
  %4023 = vmatpush1.bf16.msra.mxu0 0
  %4024 = vmatprep.subr.bf16.mxu0 0
  %4025 = vmatpush1.bf16.msra.mxu0 0
  %4026 = vmatprep.subr.bf16.mxu0 0
  %4027 = vmatpush1.bf16.msra.mxu0 0
  %4028 = vmatprep.subr.bf16.mxu0 0
  %4029 = vmatpush1.bf16.msra.mxu0 0
  %4030 = vmatprep.subr.bf16.mxu0 0
  %4031 = vmatpush1.bf16.msra.mxu0 0
  %4032 = vmatprep.subr.bf16.mxu0 0
  %4033 = vmatpush1.bf16.msra.mxu0 0
  %4034 = vmatprep.subr.bf16.mxu0 0
  %4035 = vmatpush1.bf16.msra.mxu0 0
  %4036 = vmatprep.mubr.bf16.mxu0 0
  %4037 = vmatmul.mubr.bf16.gmra.mrb[0].mxu0 %v3895
  %v4038 = vpop.f32.mrb[0].mxu0
  %v4039 = vadd.f32 %v3917, %v4038
  %v4040 = vpop.f32.mrb[0].mxu0
  %v4041 = vadd.f32 %v3921, %v4040
  %v4042 = vpop.f32.mrb[0].mxu0
  %v4043 = vpop.f32.mrb[0].mxu0
  %4044 = vdwg.mxu0
  %v4045 = vxor.u32 %v4039, 2147483648
  %v4046 = vxor.u32 %v4041, 2147483648
  %v4047 = vmul.f32 %v4045, 1.442695
  %v4048 = vpow.pop %v4047
  %v4049 = vmul.f32 %v4046, 1.442695
  %v4050 = vpow.pop %v4049
  %v4051 = vadd.f32 %v4048, 1.0
  %v4052 = vadd.f32 %v4050, 1.0
  %v4053 = vrcp.pop %v4051
  %v4054 = vmul.f32 1.0, %v4053
  %v4055 = vrcp.pop %v4052
  %v4056 = vmul.f32 1.0, %v4055
  %v4057 = vmul.f32 %v3893, %v4054
  %v4058 = vmul.f32 %v3894, %v4056
  %v4059 = vpack.c.bf16 %v4057, %v4057
  %v4060 = vpack.c.bf16 %v4058, %v4058
  %v4061 = vld [vmem:[%s7] sm:$0xf]
  %v4062 = vld [vmem:[%s7 + $0x4] sm:$0xf]
  %v4063 = vld [vmem:[%s7 + $0x8] sm:$0xf]
  %v4064 = vld [vmem:[%s7 + $0xc] sm:$0xf]
  %v4065 = vld [vmem:[%s7 + $0x10] sm:$0xf]
  %v4066 = vld [vmem:[%s7 + $0x14] sm:$0xf]
  %v4067 = vld [vmem:[%s7 + $0x18] sm:$0xf]
  %v4068 = vld [vmem:[%s7 + $0x1c] sm:$0xf]
  %v4069 = vld [vmem:[%s7 + $0x20] sm:$0xf]
  %v4070 = vld [vmem:[%s7 + $0x24] sm:$0xf]
  %v4071 = vld [vmem:[%s7 + $0x28] sm:$0xf]
  %v4072 = vld [vmem:[%s7 + $0x2c] sm:$0xf]
  %v4073 = vld [vmem:[%s7 + $0x30] sm:$0xf]
  %v4074 = vld [vmem:[%s7 + $0x34] sm:$0xf]
  %v4075 = vld [vmem:[%s7 + $0x38] sm:$0xf]
  %v4076 = vld [vmem:[%s7 + $0x3c] sm:$0xf]
  %v4077 = vld [vmem:[%s7 + $0x40] sm:$0xf]
  %v4078 = vld [vmem:[%s7 + $0x44] sm:$0xf]
  %v4079 = vld [vmem:[%s7 + $0x48] sm:$0xf]
  %v4080 = vld [vmem:[%s7 + $0x4c] sm:$0xf]
  %v4081 = vld [vmem:[%s7 + $0x50] sm:$0xf]
  %v4082 = vld [vmem:[%s7 + $0x54] sm:$0xf]
  %v4083 = vld [vmem:[%s7 + $0x58] sm:$0xf]
  %v4084 = vld [vmem:[%s7 + $0x5c] sm:$0xf]
  %v4085 = vld [vmem:[%s7 + $0x60] sm:$0xf]
  %v4086 = vld [vmem:[%s7 + $0x64] sm:$0xf]
  %v4087 = vld [vmem:[%s7 + $0x68] sm:$0xf]
  %v4088 = vld [vmem:[%s7 + $0x6c] sm:$0xf]
  %v4089 = vld [vmem:[%s7 + $0x70] sm:$0xf]
  %v4090 = vld [vmem:[%s7 + $0x74] sm:$0xf]
  %v4091 = vld [vmem:[%s7 + $0x78] sm:$0xf]
  %v4092 = vld [vmem:[%s7 + $0x7c] sm:$0xf]
  %v4093 = vld [vmem:[%s8] sm:$0x1]
  %v4095 = vlaneseq
  %v4096 = vshrl.u32 %v4095, 7
  %v4097 = vsub.s32 0, %v4096
  %v4098 = vrot.slane %v4093, %v4097
  %v4132 = vunpack.c.l.b16 %v4061
  %v4133 = vunpack.c.l.b16 %v4062
  %v4134 = vunpack.c.l.b16 %v4063
  %v4135 = vunpack.c.l.b16 %v4064
  %v4136 = vunpack.c.l.b16 %v4065
  %v4137 = vunpack.c.l.b16 %v4066
  %v4138 = vunpack.c.l.b16 %v4067
  %v4139 = vunpack.c.l.b16 %v4068
  %v4140 = vunpack.c.l.b16 %v4069
  %v4141 = vunpack.c.l.b16 %v4070
  %v4142 = vunpack.c.l.b16 %v4071
  %v4143 = vunpack.c.l.b16 %v4072
  %v4144 = vunpack.c.l.b16 %v4073
  %v4145 = vunpack.c.l.b16 %v4074
  %v4146 = vunpack.c.l.b16 %v4075
  %v4147 = vunpack.c.l.b16 %v4076
  %v4148 = vunpack.c.l.b16 %v4077
  %v4149 = vunpack.c.l.b16 %v4078
  %v4150 = vunpack.c.l.b16 %v4079
  %v4151 = vunpack.c.l.b16 %v4080
  %v4152 = vunpack.c.l.b16 %v4081
  %v4153 = vunpack.c.l.b16 %v4082
  %v4154 = vunpack.c.l.b16 %v4083
  %v4155 = vunpack.c.l.b16 %v4084
  %v4156 = vunpack.c.l.b16 %v4085
  %v4157 = vunpack.c.l.b16 %v4086
  %v4158 = vunpack.c.l.b16 %v4087
  %v4159 = vunpack.c.l.b16 %v4088
  %v4160 = vunpack.c.l.b16 %v4089
  %v4161 = vunpack.c.l.b16 %v4090
  %v4162 = vunpack.c.l.b16 %v4091
  %v4163 = vunpack.c.l.b16 %v4092
  %v4164 = vpack.c.b16 %v4133, %v4132
  %v4165 = vpack.c.b16 %v4135, %v4134
  %v4166 = vpack.c.b16 %v4137, %v4136
  %v4167 = vpack.c.b16 %v4139, %v4138
  %v4168 = vpack.c.b16 %v4141, %v4140
  %v4169 = vpack.c.b16 %v4143, %v4142
  %v4170 = vpack.c.b16 %v4145, %v4144
  %v4171 = vpack.c.b16 %v4147, %v4146
  %v4172 = vpack.c.b16 %v4149, %v4148
  %v4173 = vpack.c.b16 %v4151, %v4150
  %v4174 = vpack.c.b16 %v4153, %v4152
  %v4175 = vpack.c.b16 %v4155, %v4154
  %v4176 = vpack.c.b16 %v4157, %v4156
  %v4177 = vpack.c.b16 %v4159, %v4158
  %v4178 = vpack.c.b16 %v4161, %v4160
  %v4179 = vpack.c.b16 %v4163, %v4162
  %4196 = vmatprep.subr.bf16.mxu0 0
  %4197 = vmatpush1.bf16.msra.mxu0 %v4164
  %4198 = vmatprep.subr.bf16.mxu0 0
  %4199 = vmatpush1.bf16.msra.mxu0 %v4165
  %4200 = vmatprep.subr.bf16.mxu0 0
  %4201 = vmatpush1.bf16.msra.mxu0 %v4166
  %4202 = vmatprep.subr.bf16.mxu0 0
  %4203 = vmatpush1.bf16.msra.mxu0 %v4167
  %4204 = vmatprep.subr.bf16.mxu0 0
  %4205 = vmatpush1.bf16.msra.mxu0 %v4168
  %4206 = vmatprep.subr.bf16.mxu0 0
  %4207 = vmatpush1.bf16.msra.mxu0 %v4169
  %4208 = vmatprep.subr.bf16.mxu0 0
  %4209 = vmatpush1.bf16.msra.mxu0 %v4170
  %4210 = vmatprep.subr.bf16.mxu0 0
  %4211 = vmatpush1.bf16.msra.mxu0 %v4171
  %4212 = vmatprep.subr.bf16.mxu0 0
  %4213 = vmatpush1.bf16.msra.mxu0 %v4172
  %4214 = vmatprep.subr.bf16.mxu0 0
  %4215 = vmatpush1.bf16.msra.mxu0 %v4173
  %4216 = vmatprep.subr.bf16.mxu0 0
  %4217 = vmatpush1.bf16.msra.mxu0 %v4174
  %4218 = vmatprep.subr.bf16.mxu0 0
  %4219 = vmatpush1.bf16.msra.mxu0 %v4175
  %4220 = vmatprep.subr.bf16.mxu0 0
  %4221 = vmatpush1.bf16.msra.mxu0 %v4176
  %4222 = vmatprep.subr.bf16.mxu0 0
  %4223 = vmatpush1.bf16.msra.mxu0 %v4177
  %4224 = vmatprep.subr.bf16.mxu0 0
  %4225 = vmatpush1.bf16.msra.mxu0 %v4178
  %4226 = vmatprep.subr.bf16.mxu0 0
  %4227 = vmatpush1.bf16.msra.mxu0 %v4179
  %4228 = vmatprep.mubr.bf16.mxu0 %v4060
  %4229 = vmatmul.mubr.bf16.gmra.mrb[0].mxu0 %v4059
  %v4230 = vpop.f32.mrb[0].mxu0
  %v4231 = vadd.f32 %v4098, %v4230
  %v4232 = vpop.f32.mrb[0].mxu0
  %v4233 = vpop.f32.mrb[0].mxu0
  %v4234 = vpop.f32.mrb[0].mxu0
  %4235 = vdwg.mxu0
  %v4236 = vmax.f32 %v4231, 0.0
  %v4237 = vpack.c.bf16 %v4236, %v4236
  %v4238 = vld [vmem:[%s9] sm:$0xf]
  %v4239 = vld [vmem:[%s9 + $0x4] sm:$0xf]
  %v4240 = vld [vmem:[%s9 + $0x8] sm:$0xf]
  %v4241 = vld [vmem:[%s9 + $0xc] sm:$0xf]
  %v4242 = vld [vmem:[%s9 + $0x10] sm:$0xf]
  %v4243 = vld [vmem:[%s9 + $0x14] sm:$0xf]
  %v4244 = vld [vmem:[%s9 + $0x18] sm:$0xf]
  %v4245 = vld [vmem:[%s9 + $0x1c] sm:$0xf]
  %v4246 = vld [vmem:[%s9 + $0x20] sm:$0xf]
  %v4247 = vld [vmem:[%s9 + $0x24] sm:$0xf]
  %v4248 = vld [vmem:[%s9 + $0x28] sm:$0xf]
  %v4249 = vld [vmem:[%s9 + $0x2c] sm:$0xf]
  %v4250 = vld [vmem:[%s9 + $0x30] sm:$0xf]
  %v4251 = vld [vmem:[%s9 + $0x34] sm:$0xf]
  %v4252 = vld [vmem:[%s9 + $0x38] sm:$0xf]
  %v4253 = vld [vmem:[%s9 + $0x3c] sm:$0xf]
  %v4254 = vld [vmem:[%s10] sm:$0x1]
  %v4256 = vlaneseq
  %v4257 = vshrl.u32 %v4256, 7
  %v4258 = vsub.s32 0, %v4257
  %v4259 = vrot.slane %v4254, %v4258
  %v4277 = vunpack.c.l.b16 %v4238
  %v4278 = vunpack.c.l.b16 %v4239
  %v4279 = vunpack.c.l.b16 %v4240
  %v4280 = vunpack.c.l.b16 %v4241
  %v4281 = vunpack.c.l.b16 %v4242
  %v4282 = vunpack.c.l.b16 %v4243
  %v4283 = vunpack.c.l.b16 %v4244
  %v4284 = vunpack.c.l.b16 %v4245
  %v4285 = vunpack.c.l.b16 %v4246
  %v4286 = vunpack.c.l.b16 %v4247
  %v4287 = vunpack.c.l.b16 %v4248
  %v4288 = vunpack.c.l.b16 %v4249
  %v4289 = vunpack.c.l.b16 %v4250
  %v4290 = vunpack.c.l.b16 %v4251
  %v4291 = vunpack.c.l.b16 %v4252
  %v4292 = vunpack.c.l.b16 %v4253
  %v4293 = vpack.c.b16 %v4278, %v4277
  %v4294 = vpack.c.b16 %v4280, %v4279
  %v4295 = vpack.c.b16 %v4282, %v4281
  %v4296 = vpack.c.b16 %v4284, %v4283
  %v4297 = vpack.c.b16 %v4286, %v4285
  %v4298 = vpack.c.b16 %v4288, %v4287
  %v4299 = vpack.c.b16 %v4290, %v4289
  %v4300 = vpack.c.b16 %v4292, %v4291
  %4309 = vmatprep.subr.bf16.mxu0 0
  %4310 = vmatpush1.bf16.msra.mxu0 %v4293
  %4311 = vmatprep.subr.bf16.mxu0 0
  %4312 = vmatpush1.bf16.msra.mxu0 %v4294
  %4313 = vmatprep.subr.bf16.mxu0 0
  %4314 = vmatpush1.bf16.msra.mxu0 %v4295
  %4315 = vmatprep.subr.bf16.mxu0 0
  %4316 = vmatpush1.bf16.msra.mxu0 %v4296
  %4317 = vmatprep.subr.bf16.mxu0 0
  %4318 = vmatpush1.bf16.msra.mxu0 %v4297
  %4319 = vmatprep.subr.bf16.mxu0 0
  %4320 = vmatpush1.bf16.msra.mxu0 %v4298
  %4321 = vmatprep.subr.bf16.mxu0 0
  %4322 = vmatpush1.bf16.msra.mxu0 %v4299
  %4323 = vmatprep.subr.bf16.mxu0 0
  %4324 = vmatpush1.bf16.msra.mxu0 %v4300
  %4325 = vmatprep.subr.bf16.mxu0 0
  %4326 = vmatpush1.bf16.msra.mxu0 0
  %4327 = vmatprep.subr.bf16.mxu0 0
  %4328 = vmatpush1.bf16.msra.mxu0 0
  %4329 = vmatprep.subr.bf16.mxu0 0
  %4330 = vmatpush1.bf16.msra.mxu0 0
  %4331 = vmatprep.subr.bf16.mxu0 0
  %4332 = vmatpush1.bf16.msra.mxu0 0
  %4333 = vmatprep.subr.bf16.mxu0 0
  %4334 = vmatpush1.bf16.msra.mxu0 0
  %4335 = vmatprep.subr.bf16.mxu0 0
  %4336 = vmatpush1.bf16.msra.mxu0 0
  %4337 = vmatprep.subr.bf16.mxu0 0
  %4338 = vmatpush1.bf16.msra.mxu0 0
  %4339 = vmatprep.subr.bf16.mxu0 0
  %4340 = vmatpush1.bf16.msra.mxu0 0
  %4341 = vmatprep.mubr.bf16.mxu0 0
  %4342 = vmatmul.mubr.bf16.gmra.mrb[0].mxu0 %v4237
  %v4343 = vpop.f32.mrb[0].mxu0
  %v4344 = vadd.f32 %v4259, %v4343
  %v4345 = vpop.f32.mrb[0].mxu0
  %v4346 = vpop.f32.mrb[0].mxu0
  %v4347 = vpop.f32.mrb[0].mxu0
  %4348 = vdwg.mxu0
  %v4349 = vmax.f32 %v4344, 0.0
  %v4350 = vpack.c.bf16 %v4349, %v4349
  %v4351 = vld [vmem:[%s11] sm:$0xf]
  %v4352 = vld [vmem:[%s11 + $0x4] sm:$0xf]
  %v4353 = vld [vmem:[%s11 + $0x8] sm:$0xf]
  %v4354 = vld [vmem:[%s11 + $0xc] sm:$0xf]
  %v4355 = vld [vmem:[%s11 + $0x10] sm:$0xf]
  %v4356 = vld [vmem:[%s11 + $0x14] sm:$0xf]
  %v4357 = vld [vmem:[%s11 + $0x18] sm:$0xf]
  %v4358 = vld [vmem:[%s11 + $0x1c] sm:$0xf]
  %v4359 = vld [vmem:[%s11 + $0x20] sm:$0xf]
  %v4360 = vld [vmem:[%s11 + $0x24] sm:$0xf]
  %v4361 = vld [vmem:[%s11 + $0x28] sm:$0xf]
  %v4362 = vld [vmem:[%s11 + $0x2c] sm:$0xf]
  %v4363 = vld [vmem:[%s11 + $0x30] sm:$0xf]
  %v4364 = vld [vmem:[%s11 + $0x34] sm:$0xf]
  %v4365 = vld [vmem:[%s11 + $0x38] sm:$0xf]
  %v4366 = vld [vmem:[%s11 + $0x3c] sm:$0xf]
  %v4367 = vld [vmem:[%s12] sm:$0x1]
  %v4369 = vlaneseq
  %v4370 = vshrl.u32 %v4369, 7
  %v4371 = vsub.s32 0, %v4370
  %v4372 = vrot.slane %v4367, %v4371
  %v4390 = vunpack.c.l.b16 %v4351
  %v4391 = vunpack.c.l.b16 %v4352
  %v4392 = vunpack.c.l.b16 %v4353
  %v4393 = vunpack.c.l.b16 %v4354
  %v4394 = vunpack.c.l.b16 %v4355
  %v4395 = vunpack.c.l.b16 %v4356
  %v4396 = vunpack.c.l.b16 %v4357
  %v4397 = vunpack.c.l.b16 %v4358
  %v4398 = vunpack.c.l.b16 %v4359
  %v4399 = vunpack.c.l.b16 %v4360
  %v4400 = vunpack.c.l.b16 %v4361
  %v4401 = vunpack.c.l.b16 %v4362
  %v4402 = vunpack.c.l.b16 %v4363
  %v4403 = vunpack.c.l.b16 %v4364
  %v4404 = vunpack.c.l.b16 %v4365
  %v4405 = vunpack.c.l.b16 %v4366
  %v4406 = vpack.c.b16 %v4391, %v4390
  %v4407 = vpack.c.b16 %v4393, %v4392
  %v4408 = vpack.c.b16 %v4395, %v4394
  %v4409 = vpack.c.b16 %v4397, %v4396
  %v4410 = vpack.c.b16 %v4399, %v4398
  %v4411 = vpack.c.b16 %v4401, %v4400
  %v4412 = vpack.c.b16 %v4403, %v4402
  %v4413 = vpack.c.b16 %v4405, %v4404
  %4422 = vmatprep.subr.bf16.mxu0 0
  %4423 = vmatpush1.bf16.msra.mxu0 %v4406
  %4424 = vmatprep.subr.bf16.mxu0 0
  %4425 = vmatpush1.bf16.msra.mxu0 %v4407
  %4426 = vmatprep.subr.bf16.mxu0 0
  %4427 = vmatpush1.bf16.msra.mxu0 %v4408
  %4428 = vmatprep.subr.bf16.mxu0 0
  %4429 = vmatpush1.bf16.msra.mxu0 %v4409
  %4430 = vmatprep.subr.bf16.mxu0 0
  %4431 = vmatpush1.bf16.msra.mxu0 %v4410
  %4432 = vmatprep.subr.bf16.mxu0 0
  %4433 = vmatpush1.bf16.msra.mxu0 %v4411
  %4434 = vmatprep.subr.bf16.mxu0 0
  %4435 = vmatpush1.bf16.msra.mxu0 %v4412
  %4436 = vmatprep.subr.bf16.mxu0 0
  %4437 = vmatpush1.bf16.msra.mxu0 %v4413
  %4438 = vmatprep.subr.bf16.mxu0 0
  %4439 = vmatpush1.bf16.msra.mxu0 0
  %4440 = vmatprep.subr.bf16.mxu0 0
  %4441 = vmatpush1.bf16.msra.mxu0 0
  %4442 = vmatprep.subr.bf16.mxu0 0
  %4443 = vmatpush1.bf16.msra.mxu0 0
  %4444 = vmatprep.subr.bf16.mxu0 0
  %4445 = vmatpush1.bf16.msra.mxu0 0
  %4446 = vmatprep.subr.bf16.mxu0 0
  %4447 = vmatpush1.bf16.msra.mxu0 0
  %4448 = vmatprep.subr.bf16.mxu0 0
  %4449 = vmatpush1.bf16.msra.mxu0 0
  %4450 = vmatprep.subr.bf16.mxu0 0
  %4451 = vmatpush1.bf16.msra.mxu0 0
  %4452 = vmatprep.subr.bf16.mxu0 0
  %4453 = vmatpush1.bf16.msra.mxu0 0
  %4454 = vmatprep.mubr.bf16.mxu0 0
  %4455 = vmatmul.mubr.bf16.gmra.mrb[0].mxu0 %v4350
  %v4456 = vpop.f32.mrb[0].mxu0
  %v4457 = vadd.f32 %v4372, %v4456
  %v4458 = vpop.f32.mrb[0].mxu0
  %v4459 = vpop.f32.mrb[0].mxu0
  %v4460 = vpop.f32.mrb[0].mxu0
  %4461 = vdwg.mxu0
  %v4462 = vmax.f32 %v4457, 0.0
  %v4463 = vpack.c.bf16 %v4462, %v4462
  %v4464 = vld [vmem:[%s13] sm:$0xf]
  %v4465 = vld [vmem:[%s13 + $0x4] sm:$0xf]
  %v4466 = vld [vmem:[%s13 + $0x8] sm:$0xf]
  %v4467 = vld [vmem:[%s13 + $0xc] sm:$0xf]
  %v4468 = vld [vmem:[%s13 + $0x10] sm:$0xf]
  %v4469 = vld [vmem:[%s13 + $0x14] sm:$0xf]
  %v4470 = vld [vmem:[%s13 + $0x18] sm:$0xf]
  %v4471 = vld [vmem:[%s13 + $0x1c] sm:$0xf]
  %v4472 = vld [vmem:[%s13 + $0x20] sm:$0xf]
  %v4473 = vld [vmem:[%s13 + $0x24] sm:$0xf]
  %v4474 = vld [vmem:[%s13 + $0x28] sm:$0xf]
  %v4475 = vld [vmem:[%s13 + $0x2c] sm:$0xf]
  %v4476 = vld [vmem:[%s13 + $0x30] sm:$0xf]
  %v4477 = vld [vmem:[%s13 + $0x34] sm:$0xf]
  %v4478 = vld [vmem:[%s13 + $0x38] sm:$0xf]
  %v4479 = vld [vmem:[%s13 + $0x3c] sm:$0xf]
  %v4480 = vld [vmem:[%s14] sm:$0x1]
  %v4482 = vlaneseq
  %v4483 = vshrl.u32 %v4482, 7
  %v4484 = vsub.s32 0, %v4483
  %v4485 = vrot.slane %v4480, %v4484
  %v4503 = vunpack.c.l.b16 %v4464
  %v4504 = vunpack.c.l.b16 %v4465
  %v4505 = vunpack.c.l.b16 %v4466
  %v4506 = vunpack.c.l.b16 %v4467
  %v4507 = vunpack.c.l.b16 %v4468
  %v4508 = vunpack.c.l.b16 %v4469
  %v4509 = vunpack.c.l.b16 %v4470
  %v4510 = vunpack.c.l.b16 %v4471
  %v4511 = vunpack.c.l.b16 %v4472
  %v4512 = vunpack.c.l.b16 %v4473
  %v4513 = vunpack.c.l.b16 %v4474
  %v4514 = vunpack.c.l.b16 %v4475
  %v4515 = vunpack.c.l.b16 %v4476
  %v4516 = vunpack.c.l.b16 %v4477
  %v4517 = vunpack.c.l.b16 %v4478
  %v4518 = vunpack.c.l.b16 %v4479
  %v4519 = vpack.c.b16 %v4504, %v4503
  %v4520 = vpack.c.b16 %v4506, %v4505
  %v4521 = vpack.c.b16 %v4508, %v4507
  %v4522 = vpack.c.b16 %v4510, %v4509
  %v4523 = vpack.c.b16 %v4512, %v4511
  %v4524 = vpack.c.b16 %v4514, %v4513
  %v4525 = vpack.c.b16 %v4516, %v4515
  %v4526 = vpack.c.b16 %v4518, %v4517
  %4535 = vmatprep.subr.bf16.mxu0 0
  %4536 = vmatpush1.bf16.msra.mxu0 %v4519
  %4537 = vmatprep.subr.bf16.mxu0 0
  %4538 = vmatpush1.bf16.msra.mxu0 %v4520
  %4539 = vmatprep.subr.bf16.mxu0 0
  %4540 = vmatpush1.bf16.msra.mxu0 %v4521
  %4541 = vmatprep.subr.bf16.mxu0 0
  %4542 = vmatpush1.bf16.msra.mxu0 %v4522
  %4543 = vmatprep.subr.bf16.mxu0 0
  %4544 = vmatpush1.bf16.msra.mxu0 %v4523
  %4545 = vmatprep.subr.bf16.mxu0 0
  %4546 = vmatpush1.bf16.msra.mxu0 %v4524
  %4547 = vmatprep.subr.bf16.mxu0 0
  %4548 = vmatpush1.bf16.msra.mxu0 %v4525
  %4549 = vmatprep.subr.bf16.mxu0 0
  %4550 = vmatpush1.bf16.msra.mxu0 %v4526
  %4551 = vmatprep.subr.bf16.mxu0 0
  %4552 = vmatpush1.bf16.msra.mxu0 0
  %4553 = vmatprep.subr.bf16.mxu0 0
  %4554 = vmatpush1.bf16.msra.mxu0 0
  %4555 = vmatprep.subr.bf16.mxu0 0
  %4556 = vmatpush1.bf16.msra.mxu0 0
  %4557 = vmatprep.subr.bf16.mxu0 0
  %4558 = vmatpush1.bf16.msra.mxu0 0
  %4559 = vmatprep.subr.bf16.mxu0 0
  %4560 = vmatpush1.bf16.msra.mxu0 0
  %4561 = vmatprep.subr.bf16.mxu0 0
  %4562 = vmatpush1.bf16.msra.mxu0 0
  %4563 = vmatprep.subr.bf16.mxu0 0
  %4564 = vmatpush1.bf16.msra.mxu0 0
  %4565 = vmatprep.subr.bf16.mxu0 0
  %4566 = vmatpush1.bf16.msra.mxu0 0
  %4567 = vmatprep.mubr.bf16.mxu0 0
  %4568 = vmatmul.mubr.bf16.gmra.mrb[0].mxu0 %v4463
  %v4569 = vpop.f32.mrb[0].mxu0
  %v4570 = vadd.f32 %v4485, %v4569
  %v4571 = vpop.f32.mrb[0].mxu0
  %v4572 = vpop.f32.mrb[0].mxu0
  %v4573 = vpop.f32.mrb[0].mxu0
  %4574 = vdwg.mxu0
  %v4575 = vtanh.pop %v4570
  %4576 = vst [vmem:[%s15] sm:$0xff] %v4575
  // Predicated region
  $region62: #{tinycar_actor_lstm.1} parent=0 // pred_check
    _
  $region63: #{tinycar_actor_lstm.1} parent=0 // pred_check_branch
    %4578 = sbr.rel (0) target = $region65
  $region64: #{tinycar_actor_lstm.1} parent=0 // pred_region
    _
  $region65: #{tinycar_actor_lstm.1} parent=0 // pred_fallthru
    _
  // Predicated region
  $region66: #{tinycar_actor_lstm.1} parent=0 // pred_check
    _
  $region67: #{tinycar_actor_lstm.1} parent=0 // pred_check_branch
    %4580 = sbr.rel (0) target = $region69
  $region68: #{tinycar_actor_lstm.1} parent=0 // pred_region
    _
  $region69: #{tinycar_actor_lstm.1} parent=0 // pred_fallthru
    _

</llo_original>
